<compile_context>
chip_gen: v7x
topology: tpu7x:2x2x1
jax: 0.10.0
libtpu: 0.0.40
codegen_flags: <defaults>
</compile_context>

<pallas_src>
import functools

import jax
import jax.numpy as jnp
from jax.experimental import pallas as pl
from jax.experimental.pallas import tpu as pltpu

N_FEATS = 3
DIMS_UP = [64, 128]
DIMS_MS = [256, 512]
ALL_DIMS = [N_FEATS] + DIMS_UP + DIMS_MS   # [3, 64, 128, 256, 512]
OUT_DIM = ALL_DIMS[-1]
MAX_TILE_L = 1024                          # safe on v7x (64 MiB VMEM) and v5e
BN_EPS = 1e-5

# 2 * sum_i C_in_i * C_out_i  MACs -> flops per point
FLOPS_PER_POINT = 2 * sum(ALL_DIMS[i - 1] * ALL_DIMS[i] for i in range(1, len(ALL_DIMS)))


def _round_up(x, m):
    return ((x + m - 1) // m) * m


def _mspointnet_kernel(x_ref, w1, b1, w2, b2, w3, b3, w4, b4, o_ref):
    """Fused 4-layer MLP over one (3, TILE_L) column block -> (512, TILE_L)."""
    x = x_ref[...]                                        # (3, TILE_L) f32
    wf = w1[...]                                          # (64, 3) f32
    # Layer 1: K=3 contraction on the VPU (an MXU pass would waste ~a full
    # 256-wide contraction for <0.2% of the useful MACs).
    h = (wf[:, 0:1] * x[0:1, :]
         + wf[:, 1:2] * x[1:2, :]
         + wf[:, 2:3] * x[2:3, :])                        # (64, TILE_L) f32
    h = jnp.maximum(h + b1[...], 0.0)
    # Layers 2-4: bf16 MXU matmuls with f32 accumulation; bias + ReLU on the VPU.
    for w_ref, b_ref in ((w2, b2), (w3, b3), (w4, b4)):
        acc = jnp.dot(w_ref[...], h.astype(jnp.bfloat16),
                      preferred_element_type=jnp.float32)  # (C_out, TILE_L) f32
        h = jnp.maximum(acc + b_ref[...], 0.0)
    o_ref[...] = h.astype(o_ref.dtype)                     # (512, TILE_L)


def mspointnet_feat(x, params, out_dtype=jnp.float32):
    """x: (B, n_feats, L) float32 (PyTorch NCL).  Returns (B, 512*L)."""
    B, c_in, L = x.shape
    assert c_in == N_FEATS

    # Lane-aligned tile over the point axis; ragged tail handled by edge masking.
    tile_l = min(MAX_TILE_L, _round_up(L, 128))
    # Megacore guard (v7x has 2 TensorCores): keep >= 2 grid steps when possible.
    if B * pl.cdiv(L, tile_l) < 2 and tile_l > 128:
        tile_l = max(128, _round_up(tile_l // 2, 128))
    grid = (B, pl.cdiv(L, tile_l))

    w1 = params["w1"].astype(jnp.float32)                             # (64, 3) f32 (VPU layer)
    ws = [params[f"w{i}"].astype(jnp.bfloat16) for i in range(2, 5)]  # bf16 MXU weights
    bs = [params[f"b{i}"].astype(jnp.float32) for i in range(1, 5)]   # (C_out, 1) f32

    wb_args = [w1, bs[0], ws[0], bs[1], ws[1], bs[2], ws[2], bs[3]]
    # Constant index maps -> block copied once and revisited across grid steps.
    wb_specs = [pl.BlockSpec(a.shape, lambda b, l: (0, 0)) for a in wb_args]

    weight_bytes = sum(int(a.size) * a.dtype.itemsize for a in wb_args)
    out_itemsize = jnp.dtype(out_dtype).itemsize
    cost = pl.CostEstimate(
        flops=B * L * FLOPS_PER_POINT,
        transcendentals=0,
        bytes_accessed=B * L * (N_FEATS * 4 + OUT_DIM * out_itemsize) + weight_bytes,
    )

    out = pl.pallas_call(
        _mspointnet_kernel,
        out_shape=jax.ShapeDtypeStruct((B, OUT_DIM, L), out_dtype),
        grid_spec=pltpu.PrefetchScalarGridSpec(
            num_scalar_prefetch=0,
            grid=grid,
            in_specs=[pl.BlockSpec((None, N_FEATS, tile_l), lambda b, l: (b, 0, l))]
                     + wb_specs,
            out_specs=pl.BlockSpec((None, OUT_DIM, tile_l), lambda b, l: (b, 0, l)),
        ),
        compiler_params=pltpu.CompilerParams(
            dimension_semantics=("parallel", "parallel"),
            vmem_limit_bytes=32 * 1024 * 1024,
        ),
        cost_estimate=cost,
    )(x, *wb_args)

    # (B, 512, L) is torch's pre-reshape NCL layout -> flatten matches
    # x.reshape(B, -1) and is a free bitcast (no slice, no copy).
    return out.reshape(B, -1)


def init_params(key):
    """Deterministic synthetic params; Conv1d(k=1) weights with folded BatchNorm1d."""
    params = {}
    for li in range(1, len(ALL_DIMS)):
        c_in, c_out = ALL_DIMS[li - 1], ALL_DIMS[li]
        key, kw, kb, kg, kbe, km, kv = jax.random.split(key, 7)
        # Conv1d weight (c_out, c_in, 1) -> stored as (c_out, c_in) for W @ x matmul.
        w = jax.random.normal(kw, (c_out, c_in), jnp.float32) * (1.0 / jnp.sqrt(c_in))
        b = jax.random.normal(kb, (c_out,), jnp.float32) * 0.1
        # BatchNorm1d inference params (gamma, beta, running_mean, running_var).
        gamma = 1.0 + 0.1 * jax.random.normal(kg, (c_out,), jnp.float32)
        beta = 0.1 * jax.random.normal(kbe, (c_out,), jnp.float32)
        rmean = 0.1 * jax.random.normal(km, (c_out,), jnp.float32)
        rvar = jnp.abs(1.0 + 0.1 * jax.random.normal(kv, (c_out,), jnp.float32))
        # Fold BN into conv:  y = (Wx + b - mean) * gamma/sqrt(var+eps) + beta
        scale = gamma / jnp.sqrt(rvar + BN_EPS)
        params[f"w{li}"] = w * scale[:, None]
        params[f"b{li}"] = ((b - rmean) * scale + beta)[:, None]
    return params
    # TODO(synk): BatchNorm1d training-mode (batch-statistics) behavior is not
    # reproduced; inference (running-stats) semantics are folded into the matmul.


def ref_forward(x, params):
    """Pure-JAX f32 reference of the folded forward pass (for a sanity check)."""
    B = x.shape[0]
    h = x
    for li in range(1, len(ALL_DIMS)):
        w = params[f"w{li}"]            # (C_out, C_in)
        b = params[f"b{li}"]            # (C_out, 1)
        h = jnp.einsum("oc,bcl->bol", w, h) + b[None]
        h = jnp.maximum(h, 0.0)
    return h.reshape(B, -1)


if __name__ == "__main__":
    key = jax.random.PRNGKey(0)
    key, kx = jax.random.split(key)

    B, L = 2, 400                     # L=400 is the module default (not 128-aligned)
    x = jax.random.normal(kx, (B, N_FEATS, L), jnp.float32)   # NCL like PyTorch

    params = init_params(key)
    run = jax.jit(functools.partial(mspointnet_feat, params=params))
    out = run(x)
    jax.block_until_ready(out)

    assert out.shape == (B, OUT_DIM * L), out.shape
    assert bool(jnp.all(jnp.isfinite(out)))

    # Check vs a pure-JAX f32 reference (layer 1 is f32; layers 2-4 are bf16
    # weights/activations with f32 accumulation).
    ref = ref_forward(x, params)
    rel_err = float(jnp.max(jnp.abs(out - ref)) / (jnp.max(jnp.abs(ref)) + 1e-6))
    assert rel_err < 5e-2, rel_err

    print("KERNEL_OK")
</pallas_src>

<mosaic_0001>
module attributes {stable_mosaic.version = 11 : i64} {
  func.func @_mspointnet_kernel(%arg0: i32, %arg1: i32, %arg2: memref<1x3x512xf32, #tpu.memory_space<vmem>>, %arg3: memref<64x3xf32, #tpu.memory_space<vmem>>, %arg4: memref<64x1xf32, #tpu.memory_space<vmem>>, %arg5: memref<128x64xbf16, #tpu.memory_space<vmem>>, %arg6: memref<128x1xf32, #tpu.memory_space<vmem>>, %arg7: memref<256x128xbf16, #tpu.memory_space<vmem>>, %arg8: memref<256x1xf32, #tpu.memory_space<vmem>>, %arg9: memref<512x256xbf16, #tpu.memory_space<vmem>>, %arg10: memref<512x1xf32, #tpu.memory_space<vmem>>, %arg11: memref<1x512x512xf32, #tpu.memory_space<vmem>>) attributes {dimension_semantics = [#tpu.dimension_semantics<parallel>, #tpu.dimension_semantics<parallel>], iteration_bounds = array<i64: 2, 1>, scalar_prefetch = 0 : i64, scratch_operands = 0 : i64, tpu.core_type = #tpu.core_type<tc>, window_params = [{transform_indices = @transform_0, window_bounds = array<i64: 1, 3, 512>}, {pipeline_mode = #tpu.pipeline_mode<synchronous>, transform_indices = @transform_1, window_bounds = array<i64: 64, 3>}, {pipeline_mode = #tpu.pipeline_mode<synchronous>, transform_indices = @transform_2, window_bounds = array<i64: 64, 1>}, {pipeline_mode = #tpu.pipeline_mode<synchronous>, transform_indices = @transform_3, window_bounds = array<i64: 128, 64>}, {pipeline_mode = #tpu.pipeline_mode<synchronous>, transform_indices = @transform_4, window_bounds = array<i64: 128, 1>}, {pipeline_mode = #tpu.pipeline_mode<synchronous>, transform_indices = @transform_5, window_bounds = array<i64: 256, 128>}, {pipeline_mode = #tpu.pipeline_mode<synchronous>, transform_indices = @transform_6, window_bounds = array<i64: 256, 1>}, {pipeline_mode = #tpu.pipeline_mode<synchronous>, transform_indices = @transform_7, window_bounds = array<i64: 512, 256>}, {pipeline_mode = #tpu.pipeline_mode<synchronous>, transform_indices = @transform_8, window_bounds = array<i64: 512, 1>}, {transform_indices = @transform_9, window_bounds = array<i64: 1, 512, 512>}]} {
    %c0 = arith.constant 0 : index
    %c0_0 = arith.constant 0 : index
    %c0_1 = arith.constant 0 : index
    %0 = vector.load %arg2[%c0, %c0_0, %c0_1] : memref<1x3x512xf32, #tpu.memory_space<vmem>>, vector<1x3x512xf32>
    %1 = vector.shape_cast %0 : vector<1x3x512xf32> to vector<3x512xf32>
    %c0_2 = arith.constant 0 : index
    %c0_3 = arith.constant 0 : index
    %2 = vector.load %arg3[%c0_2, %c0_3] : memref<64x3xf32, #tpu.memory_space<vmem>>, vector<64x3xf32>
    %3 = vector.extract_strided_slice %2 {offsets = [0, 0], sizes = [64, 1], strides = [1, 1]} : vector<64x3xf32> to vector<64x1xf32>
    %4 = vector.extract_strided_slice %1 {offsets = [0, 0], sizes = [1, 512], strides = [1, 1]} : vector<3x512xf32> to vector<1x512xf32>
    %5 = vector.broadcast %3 : vector<64x1xf32> to vector<64x512xf32>
    %6 = vector.broadcast %4 : vector<1x512xf32> to vector<64x512xf32>
    %7 = arith.mulf %5, %6 : vector<64x512xf32>
    %8 = vector.extract_strided_slice %2 {offsets = [0, 1], sizes = [64, 1], strides = [1, 1]} : vector<64x3xf32> to vector<64x1xf32>
    %9 = vector.extract_strided_slice %1 {offsets = [1, 0], sizes = [1, 512], strides = [1, 1]} : vector<3x512xf32> to vector<1x512xf32>
    %10 = vector.broadcast %8 : vector<64x1xf32> to vector<64x512xf32>
    %11 = vector.broadcast %9 : vector<1x512xf32> to vector<64x512xf32>
    %12 = arith.mulf %10, %11 : vector<64x512xf32>
    %13 = arith.addf %7, %12 : vector<64x512xf32>
    %14 = vector.extract_strided_slice %2 {offsets = [0, 2], sizes = [64, 1], strides = [1, 1]} : vector<64x3xf32> to vector<64x1xf32>
    %15 = vector.extract_strided_slice %1 {offsets = [2, 0], sizes = [1, 512], strides = [1, 1]} : vector<3x512xf32> to vector<1x512xf32>
    %16 = vector.broadcast %14 : vector<64x1xf32> to vector<64x512xf32>
    %17 = vector.broadcast %15 : vector<1x512xf32> to vector<64x512xf32>
    %18 = arith.mulf %16, %17 : vector<64x512xf32>
    %19 = arith.addf %13, %18 : vector<64x512xf32>
    %c0_4 = arith.constant 0 : index
    %c0_5 = arith.constant 0 : index
    %20 = vector.load %arg4[%c0_4, %c0_5] : memref<64x1xf32, #tpu.memory_space<vmem>>, vector<64x1xf32>
    %21 = vector.broadcast %20 : vector<64x1xf32> to vector<64x512xf32>
    %22 = arith.addf %19, %21 : vector<64x512xf32>
    %cst = arith.constant 0.000000e+00 : f32
    %23 = vector.broadcast %cst : f32 to vector<64x512xf32>
    %24 = arith.maximumf %22, %23 : vector<64x512xf32>
    %c0_6 = arith.constant 0 : index
    %c0_7 = arith.constant 0 : index
    %25 = vector.load %arg5[%c0_6, %c0_7] : memref<128x64xbf16, #tpu.memory_space<vmem>>, vector<128x64xbf16>
    %26 = arith.truncf %24 : vector<64x512xf32> to vector<64x512xbf16>
    %cst_8 = arith.constant dense<0.000000e+00> : vector<128x512xf32>
    %27 = tpu.matmul %25, %26, %cst_8 {dimension_numbers = #tpu.dot_dimension_numbers<[1], [0], [0], [1], [0, 0, 1, 1], [], []>} : vector<128x64xbf16>, vector<64x512xbf16>, vector<128x512xf32> -> vector<128x512xf32>
    %c0_9 = arith.constant 0 : index
    %c0_10 = arith.constant 0 : index
    %28 = vector.load %arg6[%c0_9, %c0_10] : memref<128x1xf32, #tpu.memory_space<vmem>>, vector<128x1xf32>
    %29 = vector.broadcast %28 : vector<128x1xf32> to vector<128x512xf32>
    %30 = arith.addf %27, %29 : vector<128x512xf32>
    %cst_11 = arith.constant 0.000000e+00 : f32
    %31 = vector.broadcast %cst_11 : f32 to vector<128x512xf32>
    %32 = arith.maximumf %30, %31 : vector<128x512xf32>
    %c0_12 = arith.constant 0 : index
    %c0_13 = arith.constant 0 : index
    %33 = vector.load %arg7[%c0_12, %c0_13] : memref<256x128xbf16, #tpu.memory_space<vmem>>, vector<256x128xbf16>
    %34 = arith.truncf %32 : vector<128x512xf32> to vector<128x512xbf16>
    %cst_14 = arith.constant dense<0.000000e+00> : vector<256x512xf32>
    %35 = tpu.matmul %33, %34, %cst_14 {dimension_numbers = #tpu.dot_dimension_numbers<[1], [0], [0], [1], [0, 0, 1, 1], [], []>} : vector<256x128xbf16>, vector<128x512xbf16>, vector<256x512xf32> -> vector<256x512xf32>
    %c0_15 = arith.constant 0 : index
    %c0_16 = arith.constant 0 : index
    %36 = vector.load %arg8[%c0_15, %c0_16] : memref<256x1xf32, #tpu.memory_space<vmem>>, vector<256x1xf32>
    %37 = vector.broadcast %36 : vector<256x1xf32> to vector<256x512xf32>
    %38 = arith.addf %35, %37 : vector<256x512xf32>
    %cst_17 = arith.constant 0.000000e+00 : f32
    %39 = vector.broadcast %cst_17 : f32 to vector<256x512xf32>
    %40 = arith.maximumf %38, %39 : vector<256x512xf32>
    %c0_18 = arith.constant 0 : index
    %c0_19 = arith.constant 0 : index
    %41 = vector.load %arg9[%c0_18, %c0_19] : memref<512x256xbf16, #tpu.memory_space<vmem>>, vector<512x256xbf16>
    %42 = arith.truncf %40 : vector<256x512xf32> to vector<256x512xbf16>
    %cst_20 = arith.constant dense<0.000000e+00> : vector<512x512xf32>
    %43 = tpu.matmul %41, %42, %cst_20 {dimension_numbers = #tpu.dot_dimension_numbers<[1], [0], [0], [1], [0, 0, 1, 1], [], []>} : vector<512x256xbf16>, vector<256x512xbf16>, vector<512x512xf32> -> vector<512x512xf32>
    %c0_21 = arith.constant 0 : index
    %c0_22 = arith.constant 0 : index
    %44 = vector.load %arg10[%c0_21, %c0_22] : memref<512x1xf32, #tpu.memory_space<vmem>>, vector<512x1xf32>
    %45 = vector.broadcast %44 : vector<512x1xf32> to vector<512x512xf32>
    %46 = arith.addf %43, %45 : vector<512x512xf32>
    %cst_23 = arith.constant 0.000000e+00 : f32
    %47 = vector.broadcast %cst_23 : f32 to vector<512x512xf32>
    %48 = arith.maximumf %46, %47 : vector<512x512xf32>
    %c0_24 = arith.constant 0 : index
    %c0_25 = arith.constant 0 : index
    %c0_26 = arith.constant 0 : index
    %49 = vector.load %arg11[%c0_24, %c0_25, %c0_26] : memref<1x512x512xf32, #tpu.memory_space<vmem>>, vector<1x512x512xf32>
    %50 = vector.shape_cast %49 : vector<1x512x512xf32> to vector<512x512xf32>
    %51 = vector.shape_cast %48 : vector<512x512xf32> to vector<1x512x512xf32>
    tpu.vector_store %arg11[%c0_24, %c0_25, %c0_26], %51 {strides = array<i32>} : memref<1x512x512xf32, #tpu.memory_space<vmem>>, vector<1x512x512xf32>,
    return
  }
  func.func @transform_0(%arg0: i32, %arg1: i32) -> (i32, i32, i32) {
    %c0_i32 = arith.constant 0 : i32
    %c0_i32_0 = arith.constant 0 : i32
    return %arg0, %c0_i32, %arg1 : i32, i32, i32
  }
  func.func @transform_1(%arg0: i32, %arg1: i32) -> (i32, i32) {
    %c0_i32 = arith.constant 0 : i32
    %c0_i32_0 = arith.constant 0 : i32
    %c0_i32_1 = arith.constant 0 : i32
    return %c0_i32, %c0_i32_0 : i32, i32
  }
  func.func @transform_2(%arg0: i32, %arg1: i32) -> (i32, i32) {
    %c0_i32 = arith.constant 0 : i32
    %c0_i32_0 = arith.constant 0 : i32
    %c0_i32_1 = arith.constant 0 : i32
    return %c0_i32, %c0_i32_0 : i32, i32
  }
  func.func @transform_3(%arg0: i32, %arg1: i32) -> (i32, i32) {
    %c0_i32 = arith.constant 0 : i32
    %c0_i32_0 = arith.constant 0 : i32
    %c0_i32_1 = arith.constant 0 : i32
    return %c0_i32, %c0_i32_0 : i32, i32
  }
  func.func @transform_4(%arg0: i32, %arg1: i32) -> (i32, i32) {
    %c0_i32 = arith.constant 0 : i32
    %c0_i32_0 = arith.constant 0 : i32
    %c0_i32_1 = arith.constant 0 : i32
    return %c0_i32, %c0_i32_0 : i32, i32
  }
  func.func @transform_5(%arg0: i32, %arg1: i32) -> (i32, i32) {
    %c0_i32 = arith.constant 0 : i32
    %c0_i32_0 = arith.constant 0 : i32
    %c0_i32_1 = arith.constant 0 : i32
    return %c0_i32, %c0_i32_0 : i32, i32
  }
  func.func @transform_6(%arg0: i32, %arg1: i32) -> (i32, i32) {
    %c0_i32 = arith.constant 0 : i32
    %c0_i32_0 = arith.constant 0 : i32
    %c0_i32_1 = arith.constant 0 : i32
    return %c0_i32, %c0_i32_0 : i32, i32
  }
  func.func @transform_7(%arg0: i32, %arg1: i32) -> (i32, i32) {
    %c0_i32 = arith.constant 0 : i32
    %c0_i32_0 = arith.constant 0 : i32
    %c0_i32_1 = arith.constant 0 : i32
    return %c0_i32, %c0_i32_0 : i32, i32
  }
  func.func @transform_8(%arg0: i32, %arg1: i32) -> (i32, i32) {
    %c0_i32 = arith.constant 0 : i32
    %c0_i32_0 = arith.constant 0 : i32
    %c0_i32_1 = arith.constant 0 : i32
    return %c0_i32, %c0_i32_0 : i32, i32
  }
  func.func @transform_9(%arg0: i32, %arg1: i32) -> (i32, i32, i32) {
    %c0_i32 = arith.constant 0 : i32
    %c0_i32_0 = arith.constant 0 : i32
    return %arg0, %c0_i32, %arg1 : i32, i32, i32
  }
}

</mosaic_0001>

<llo_original>
// kernel: mspointnet_feat.1
$region0: #{mspointnet_feat.1}
  #allocation0 [shape = 'u32[]', space=smem, size = 0x4, offset = 0x4, fixed_abs, tag = 'smem constant byte address 0x4 - core index']
  #allocation1 [shape = 'u32[144,128]{1,0:T(1,128)}', space=vmem, size = 0x12000, scoped, tag = 'internal scratch']
  %s0 = inlined_call_operand.vmem [shape: f32[2,3,400], index: 0, kind: input, shape index: {}]
  %s1 = inlined_call_operand.hbm [shape: f32[64,3], index: 1, kind: input, shape index: {}]
  %s2 = inlined_call_operand.hbm [shape: f32[64,1], index: 2, kind: input, shape index: {}]
  %s3 = inlined_call_operand.hbm [shape: bf16[128,64], index: 3, kind: input, shape index: {}]
  %s4 = inlined_call_operand.hbm [shape: f32[128,1], index: 4, kind: input, shape index: {}]
  %s5 = inlined_call_operand.hbm [shape: bf16[256,128], index: 5, kind: input, shape index: {}]
  %s6 = inlined_call_operand.hbm [shape: f32[256,1], index: 6, kind: input, shape index: {}]
  %s7 = inlined_call_operand.vmem [shape: bf16[512,256], index: 7, kind: input, shape index: {}]
  %s8 = inlined_call_operand.hbm [shape: f32[512,1], index: 8, kind: input, shape index: {}]
  %s9 = inlined_call_operand.vmem [shape: f32[2,512,400], index: 9, kind: output, shape index: {}]
  %s10 = sld [smem:[#allocation0]]
  $region97: #{mspointnet_feat.1} parent=0
    _
  %s12 = ssub.s32 1, %s10
  %s13 = scalar_select 0, %s12, %s10
  $region1: #{mspointnet_feat.1} parent=0
    #allocation2 [shape = 'u8[32768]{0}', space=vmem, size = 0x8000, scoped, tag = 'input window, operand 1, single buffered']
    #allocation3 [shape = 's32[2]{0}', space=sflag, size = 0x8, scoped, tag = 'scoped memory for mspointnet_feat.1']
    #allocation4 [shape = 'u8[32768]{0}', space=vmem, size = 0x8000, scoped, tag = 'input window, operand 2, single buffered']
    #allocation5 [shape = 's32[1]{0}', space=sflag, size = 0x4, scoped, tag = 'scoped memory for mspointnet_feat.1']
    #allocation6 [shape = 'u8[32768]{0}', space=vmem, size = 0x8000, scoped, tag = 'input window, operand 3, single buffered']
    #allocation7 [shape = 'u8[65536]{0}', space=vmem, size = 0x10000, scoped, tag = 'input window, operand 4, single buffered']
    #allocation8 [shape = 's32[1]{0}', space=sflag, size = 0x4, scoped, tag = 'scoped memory for mspointnet_feat.1']
    #allocation9 [shape = 'u8[65536]{0}', space=vmem, size = 0x10000, scoped, tag = 'input window, operand 5, single buffered']
    #allocation10 [shape = 'u8[131072]{0}', space=vmem, size = 0x20000, scoped, tag = 'input window, operand 6, single buffered']
    #allocation11 [shape = 's32[1]{0}', space=sflag, size = 0x4, scoped, tag = 'scoped memory for mspointnet_feat.1']
    #allocation12 [shape = 'u8[262144]{0}', space=vmem, size = 0x40000, scoped, tag = 'input window, operand 8, single buffered']
    %14 = vsyncpa [#allocation3], 0
    %15 = vsyncpa [#allocation5], 0
    %16 = vsyncpa [#allocation8], 0
    %17 = vsyncpa [#allocation11], 0
    loop: start=0, step=1, limit=4
    $region2: #{mspointnet_feat.1} parent=1 // loop_pre_header
      _
    $region3: #{mspointnet_feat.1} parent=1 // loop_header
      %s19 = sphi 0, %s23
      %p20 = scmp.ge.s32.totalorder %s19, 4
      %s26 = sphi 0, %s38
      %s27 = sphi 0, %s34
      %s28 = sphi 0, %s26
      %s29 = sphi 0, %s27
      %s30 = sphi 0, %s28
      %s31 = sphi 0, %s29
      %s43 = sphi 0, %s45
      %s46 = sphi 0, %s43
      %s47 = sphi 0, %s46
      %s63 = sphi 0, %s47
      %s67 = sphi 0, %s67
      %s69 = sphi 0, %s67
      %s70 = sphi 0, %s69
      %s84 = sphi 0, %s70
      %s88 = sphi 0, %s88
      %s90 = sphi 0, %s88
      %s91 = sphi 0, %s90
      %s105 = sphi 0, %s91
      %s109 = sphi 0, %s109
      %s111 = sphi 0, %s109
      %s112 = sphi 0, %s111
      %s126 = sphi 0, %s112
      %s130 = sphi 0, %s130
      %s132 = sphi 0, %s130
      %s133 = sphi 0, %s132
      %s147 = sphi 0, %s133
      %s151 = sphi 0, %s151
      %s153 = sphi 0, %s151
      %s154 = sphi 0, %s153
      %s168 = sphi 0, %s154
      %s172 = sphi 0, %s172
      %s174 = sphi 0, %s172
      %s175 = sphi 0, %s174
      %s189 = sphi 0, %s175
      %s193 = sphi 0, %s193
      %s195 = sphi 0, %s193
      %s196 = sphi 0, %s195
      %s210 = sphi 0, %s196
      %s214 = sphi 0, %s214
      %s216 = sphi 0, %s214
      %s217 = sphi 0, %s216
      %s231 = sphi 0, %s217
      %s239 = sphi 0, %s241
      %s242 = sphi 0, %s239
      %s243 = sphi 0, %s242
      %s259 = sphi 0, %s243
    $region4: #{mspointnet_feat.1} parent=1 // loop_header_branch
      %22 = sbr.rel (%p20) target = $region8
    $region5: #{mspointnet_feat.1} parent=1 // loop_body
      %s24 = ssub.s32 %s19, 1
      %s25 = ssub.s32 %s19, 2
      %s32 = sadd.s32 1, %s27
      %p33 = scmp.ge.s32.totalorder %s32, 1
      %s34 = scalar_select %p33, 0, %s32
      %s35 = sadd.s32 1, %s26
      %s36 = scalar_select %p33, %s35, %s26
      %p37 = scmp.ge.s32.totalorder %s36, 2
      %s38 = scalar_select %p37, 0, %s36
      %s39 = ssub.s32 %s26, %s38
      %s40 = ssub.s32 %s27, %s34
      %s41 = sor.u32 %s39, %s40
      %p42 = scmp.eq.s32.totalorder %s41, 0
      %s44 = sadd.s32 %s43, 1
      %s45 = scalar_select %p42, %s43, %s44
      %p48 = pneg %p42
      %p49 = scmp.eq.s32.totalorder %s19, 1
      %p50 = por %p48, %p49
      %p51 = scmp.ne.s32.totalorder %s43, %s46
      %p52 = scmp.eq.s32.totalorder %s19, 0
      %p53 = por %p51, %p52
      %p54 = scmp.ne.s32.totalorder %s43, %s46
      %p55 = scmp.eq.s32.totalorder %s24, 1
      %p56 = por %p54, %p55
      %p57 = scmp.ne.s32.totalorder %s46, %s47
      %p58 = scmp.eq.s32.totalorder %s24, 0
      %p59 = por %p57, %p58
      %p60 = scmp.ne.s32.totalorder %s46, %s47
      %p61 = scmp.eq.s32.totalorder %s25, 1
      %p62 = por %p60, %p61
      %p64 = scmp.ne.s32.totalorder %s47, %s63
      %p65 = scmp.eq.s32.totalorder %s25, 0
      %p66 = por %p64, %p65
      %s68 = sadd.s32 %s67, 1
      %p71 = scmp.eq.s32.totalorder %s19, 1
      %p72 = scmp.ne.s32.totalorder %s67, %s69
      %p73 = scmp.eq.s32.totalorder %s19, 0
      %p74 = por %p72, %p73
      %p75 = scmp.ne.s32.totalorder %s67, %s69
      %p76 = scmp.eq.s32.totalorder %s24, 1
      %p77 = por %p75, %p76
      %p78 = scmp.ne.s32.totalorder %s69, %s70
      %p79 = scmp.eq.s32.totalorder %s24, 0
      %p80 = por %p78, %p79
      %p81 = scmp.ne.s32.totalorder %s69, %s70
      %p82 = scmp.eq.s32.totalorder %s25, 1
      %p83 = por %p81, %p82
      %p85 = scmp.ne.s32.totalorder %s70, %s84
      %p86 = scmp.eq.s32.totalorder %s25, 0
      %p87 = por %p85, %p86
      %s89 = sadd.s32 %s88, 1
      %p92 = scmp.eq.s32.totalorder %s19, 1
      %p93 = scmp.ne.s32.totalorder %s88, %s90
      %p94 = scmp.eq.s32.totalorder %s19, 0
      %p95 = por %p93, %p94
      %p96 = scmp.ne.s32.totalorder %s88, %s90
      %p97 = scmp.eq.s32.totalorder %s24, 1
      %p98 = por %p96, %p97
      %p99 = scmp.ne.s32.totalorder %s90, %s91
      %p100 = scmp.eq.s32.totalorder %s24, 0
      %p101 = por %p99, %p100
      %p102 = scmp.ne.s32.totalorder %s90, %s91
      %p103 = scmp.eq.s32.totalorder %s25, 1
      %p104 = por %p102, %p103
      %p106 = scmp.ne.s32.totalorder %s91, %s105
      %p107 = scmp.eq.s32.totalorder %s25, 0
      %p108 = por %p106, %p107
      %s110 = sadd.s32 %s109, 1
      %p113 = scmp.eq.s32.totalorder %s19, 1
      %p114 = scmp.ne.s32.totalorder %s109, %s111
      %p115 = scmp.eq.s32.totalorder %s19, 0
      %p116 = por %p114, %p115
      %p117 = scmp.ne.s32.totalorder %s109, %s111
      %p118 = scmp.eq.s32.totalorder %s24, 1
      %p119 = por %p117, %p118
      %p120 = scmp.ne.s32.totalorder %s111, %s112
      %p121 = scmp.eq.s32.totalorder %s24, 0
      %p122 = por %p120, %p121
      %p123 = scmp.ne.s32.totalorder %s111, %s112
      %p124 = scmp.eq.s32.totalorder %s25, 1
      %p125 = por %p123, %p124
      %p127 = scmp.ne.s32.totalorder %s112, %s126
      %p128 = scmp.eq.s32.totalorder %s25, 0
      %p129 = por %p127, %p128
      %s131 = sadd.s32 %s130, 1
      %p134 = scmp.eq.s32.totalorder %s19, 1
      %p135 = scmp.ne.s32.totalorder %s130, %s132
      %p136 = scmp.eq.s32.totalorder %s19, 0
      %p137 = por %p135, %p136
      %p138 = scmp.ne.s32.totalorder %s130, %s132
      %p139 = scmp.eq.s32.totalorder %s24, 1
      %p140 = por %p138, %p139
      %p141 = scmp.ne.s32.totalorder %s132, %s133
      %p142 = scmp.eq.s32.totalorder %s24, 0
      %p143 = por %p141, %p142
      %p144 = scmp.ne.s32.totalorder %s132, %s133
      %p145 = scmp.eq.s32.totalorder %s25, 1
      %p146 = por %p144, %p145
      %p148 = scmp.ne.s32.totalorder %s133, %s147
      %p149 = scmp.eq.s32.totalorder %s25, 0
      %p150 = por %p148, %p149
      %s152 = sadd.s32 %s151, 1
      %p155 = scmp.eq.s32.totalorder %s19, 1
      %p156 = scmp.ne.s32.totalorder %s151, %s153
      %p157 = scmp.eq.s32.totalorder %s19, 0
      %p158 = por %p156, %p157
      %p159 = scmp.ne.s32.totalorder %s151, %s153
      %p160 = scmp.eq.s32.totalorder %s24, 1
      %p161 = por %p159, %p160
      %p162 = scmp.ne.s32.totalorder %s153, %s154
      %p163 = scmp.eq.s32.totalorder %s24, 0
      %p164 = por %p162, %p163
      %p165 = scmp.ne.s32.totalorder %s153, %s154
      %p166 = scmp.eq.s32.totalorder %s25, 1
      %p167 = por %p165, %p166
      %p169 = scmp.ne.s32.totalorder %s154, %s168
      %p170 = scmp.eq.s32.totalorder %s25, 0
      %p171 = por %p169, %p170
      %s173 = sadd.s32 %s172, 1
      %p176 = scmp.eq.s32.totalorder %s19, 1
      %p177 = scmp.ne.s32.totalorder %s172, %s174
      %p178 = scmp.eq.s32.totalorder %s19, 0
      %p179 = por %p177, %p178
      %p180 = scmp.ne.s32.totalorder %s172, %s174
      %p181 = scmp.eq.s32.totalorder %s24, 1
      %p182 = por %p180, %p181
      %p183 = scmp.ne.s32.totalorder %s174, %s175
      %p184 = scmp.eq.s32.totalorder %s24, 0
      %p185 = por %p183, %p184
      %p186 = scmp.ne.s32.totalorder %s174, %s175
      %p187 = scmp.eq.s32.totalorder %s25, 1
      %p188 = por %p186, %p187
      %p190 = scmp.ne.s32.totalorder %s175, %s189
      %p191 = scmp.eq.s32.totalorder %s25, 0
      %p192 = por %p190, %p191
      %s194 = sadd.s32 %s193, 1
      %p197 = scmp.eq.s32.totalorder %s19, 1
      %p198 = scmp.ne.s32.totalorder %s193, %s195
      %p199 = scmp.eq.s32.totalorder %s19, 0
      %p200 = por %p198, %p199
      %p201 = scmp.ne.s32.totalorder %s193, %s195
      %p202 = scmp.eq.s32.totalorder %s24, 1
      %p203 = por %p201, %p202
      %p204 = scmp.ne.s32.totalorder %s195, %s196
      %p205 = scmp.eq.s32.totalorder %s24, 0
      %p206 = por %p204, %p205
      %p207 = scmp.ne.s32.totalorder %s195, %s196
      %p208 = scmp.eq.s32.totalorder %s25, 1
      %p209 = por %p207, %p208
      %p211 = scmp.ne.s32.totalorder %s196, %s210
      %p212 = scmp.eq.s32.totalorder %s25, 0
      %p213 = por %p211, %p212
      %s215 = sadd.s32 %s214, 1
      %p218 = scmp.eq.s32.totalorder %s19, 1
      %p219 = scmp.ne.s32.totalorder %s214, %s216
      %p220 = scmp.eq.s32.totalorder %s19, 0
      %p221 = por %p219, %p220
      %p222 = scmp.ne.s32.totalorder %s214, %s216
      %p223 = scmp.eq.s32.totalorder %s24, 1
      %p224 = por %p222, %p223
      %p225 = scmp.ne.s32.totalorder %s216, %s217
      %p226 = scmp.eq.s32.totalorder %s24, 0
      %p227 = por %p225, %p226
      %p228 = scmp.ne.s32.totalorder %s216, %s217
      %p229 = scmp.eq.s32.totalorder %s25, 1
      %p230 = por %p228, %p229
      %p232 = scmp.ne.s32.totalorder %s217, %s231
      %p233 = scmp.eq.s32.totalorder %s25, 0
      %p234 = por %p232, %p233
      %s235 = ssub.s32 %s26, %s38
      %s236 = ssub.s32 %s27, %s34
      %s237 = sor.u32 %s235, %s236
      %p238 = scmp.eq.s32.totalorder %s237, 0
      %s240 = sadd.s32 %s239, 1
      %s241 = scalar_select %p238, %s239, %s240
      %p244 = pneg %p238
      %p245 = scmp.eq.s32.totalorder %s19, 1
      %p246 = por %p244, %p245
      %p247 = scmp.ne.s32.totalorder %s239, %s242
      %p248 = scmp.eq.s32.totalorder %s19, 0
      %p249 = por %p247, %p248
      %p250 = scmp.ne.s32.totalorder %s239, %s242
      %p251 = scmp.eq.s32.totalorder %s24, 1
      %p252 = por %p250, %p251
      %p253 = scmp.ne.s32.totalorder %s242, %s243
      %p254 = scmp.eq.s32.totalorder %s24, 0
      %p255 = por %p253, %p254
      %p256 = scmp.ne.s32.totalorder %s242, %s243
      %p257 = scmp.eq.s32.totalorder %s25, 1
      %p258 = por %p256, %p257
      %p260 = scmp.ne.s32.totalorder %s243, %s259
      %p261 = scmp.eq.s32.totalorder %s25, 0
      %p262 = por %p260, %p261
      %p263 = scmp.le.s32.totalorder 1, %s19
      %p264 = scmp.lt.s32.totalorder %s19, 3
      %p265 = pnand %p263, %p264
      %p266 = pneg %p265
      // Predicated region
      $region9: #{mspointnet_feat.1} parent=5 // pred_check
        _
      $region10: #{mspointnet_feat.1} parent=5 // pred_check_branch
        %268 = sbr.rel (%p265) target = $region12
      $region11: #{mspointnet_feat.1} parent=5 // pred_region
        %s269 = ssub.s32 %s19, 1
        // Predicated region
        $region13: #{mspointnet_feat.1} parent=11 // pred_check
          %p270 = pneg %p80
        $region14: #{mspointnet_feat.1} parent=11 // pred_check_branch
          %272 = sbr.rel (%p270) target = $region16
        $region15: #{mspointnet_feat.1} parent=11 // pred_region
          %s274 = ssub.s32 1024, 1024
          %275 = vsyncadd [#allocation3], %s274
          %s276 = sshll.u32 [#allocation2], 4
          %s277 = int_to_ptr.vmem [resolvable:$true] %s276
          %282 = dma.hbm_to_vmem [thread:$0]  %s1, 1024, %s277, [#allocation3], 128, 128, 8
        $region16: #{mspointnet_feat.1} parent=11 // pred_fallthru
          _
        // Predicated region
        $region17: #{mspointnet_feat.1} parent=11 // pred_check
          %p283 = pneg %p101
        $region18: #{mspointnet_feat.1} parent=11 // pred_check_branch
          %285 = sbr.rel (%p283) target = $region20
        $region19: #{mspointnet_feat.1} parent=11 // pred_region
          %s287 = ssub.s32 1024, 1024
          %288 = vsyncadd [#allocation5], %s287
          %s289 = sshll.u32 [#allocation4], 4
          %s290 = int_to_ptr.vmem [resolvable:$true] %s289
          %295 = dma.hbm_to_vmem [thread:$0]  %s2, 1024, %s290, [#allocation5], 128, 128, 8
        $region20: #{mspointnet_feat.1} parent=11 // pred_fallthru
          _
        // Predicated region
        $region21: #{mspointnet_feat.1} parent=11 // pred_check
          %p296 = pneg %p122
        $region22: #{mspointnet_feat.1} parent=11 // pred_check_branch
          %298 = sbr.rel (%p296) target = $region24
        $region23: #{mspointnet_feat.1} parent=11 // pred_region
          %s300 = ssub.s32 1024, 1024
          %301 = vsyncadd [#allocation5], %s300
          %s302 = sshll.u32 [#allocation6], 4
          %s303 = int_to_ptr.vmem [resolvable:$true] %s302
          %308 = dma.hbm_to_vmem [thread:$0]  %s3, 1024, %s303, [#allocation5], 64, 64, 4
        $region24: #{mspointnet_feat.1} parent=11 // pred_fallthru
          _
        // Predicated region
        $region25: #{mspointnet_feat.1} parent=11 // pred_check
          %p309 = pneg %p143
        $region26: #{mspointnet_feat.1} parent=11 // pred_check_branch
          %311 = sbr.rel (%p309) target = $region28
        $region27: #{mspointnet_feat.1} parent=11 // pred_region
          %s313 = ssub.s32 2048, 2048
          %314 = vsyncadd [#allocation8], %s313
          %s315 = sshll.u32 [#allocation7], 4
          %s316 = int_to_ptr.vmem [resolvable:$true] %s315
          %321 = dma.hbm_to_vmem [thread:$0]  %s4, 2048, %s316, [#allocation8], 128, 128, 8
        $region28: #{mspointnet_feat.1} parent=11 // pred_fallthru
          _
        // Predicated region
        $region29: #{mspointnet_feat.1} parent=11 // pred_check
          %p322 = pneg %p164
        $region30: #{mspointnet_feat.1} parent=11 // pred_check_branch
          %324 = sbr.rel (%p322) target = $region32
        $region31: #{mspointnet_feat.1} parent=11 // pred_region
          %s326 = ssub.s32 2048, 2048
          %327 = vsyncadd [#allocation8], %s326
          %s328 = sshll.u32 [#allocation9], 4
          %s329 = int_to_ptr.vmem [resolvable:$true] %s328
          %334 = dma.hbm_to_vmem [thread:$0]  %s5, 2048, %s329, [#allocation8], 64, 64, 4
        $region32: #{mspointnet_feat.1} parent=11 // pred_fallthru
          _
        // Predicated region
        $region33: #{mspointnet_feat.1} parent=11 // pred_check
          %p335 = pneg %p185
        $region34: #{mspointnet_feat.1} parent=11 // pred_check_branch
          %337 = sbr.rel (%p335) target = $region36
        $region35: #{mspointnet_feat.1} parent=11 // pred_region
          %s339 = ssub.s32 4096, 4096
          %340 = vsyncadd [#allocation11], %s339
          %s341 = sshll.u32 [#allocation10], 4
          %s342 = int_to_ptr.vmem [resolvable:$true] %s341
          %347 = dma.hbm_to_vmem [thread:$0]  %s6, 4096, %s342, [#allocation11], 128, 128, 8
        $region36: #{mspointnet_feat.1} parent=11 // pred_fallthru
          _
        // Predicated region
        $region37: #{mspointnet_feat.1} parent=11 // pred_check
          %p348 = pneg %p206
        $region38: #{mspointnet_feat.1} parent=11 // pred_check_branch
          %350 = sbr.rel (%p348) target = $region40
        $region39: #{mspointnet_feat.1} parent=11 // pred_region
          _
        $region40: #{mspointnet_feat.1} parent=11 // pred_fallthru
          _
        // Predicated region
        $region41: #{mspointnet_feat.1} parent=11 // pred_check
          %p351 = pneg %p227
        $region42: #{mspointnet_feat.1} parent=11 // pred_check_branch
          %353 = sbr.rel (%p351) target = $region44
        $region43: #{mspointnet_feat.1} parent=11 // pred_region
          %s355 = ssub.s32 8192, 8192
          %356 = vsyncadd [#allocation11], %s355
          %s357 = sshll.u32 [#allocation12], 4
          %s358 = int_to_ptr.vmem [resolvable:$true] %s357
          %363 = dma.hbm_to_vmem [thread:$0]  %s8, 8192, %s358, [#allocation11], 128, 128, 8
        $region44: #{mspointnet_feat.1} parent=11 // pred_fallthru
          _
      $region12: #{mspointnet_feat.1} parent=5 // pred_fallthru
        _
      %p364 = scmp.lt.s32.totalorder %s19, 2
      // Predicated region
      $region45: #{mspointnet_feat.1} parent=5 // pred_check
        %p365 = pneg %p364
      $region46: #{mspointnet_feat.1} parent=5 // pred_check_branch
        %367 = sbr.rel (%p365) target = $region48
      $region47: #{mspointnet_feat.1} parent=5 // pred_region
        // Predicated region
        $region49: #{mspointnet_feat.1} parent=47 // pred_check
          %p368 = pneg %p53
        $region50: #{mspointnet_feat.1} parent=47 // pred_check_branch
          %370 = sbr.rel (%p368) target = $region52
        $region51: #{mspointnet_feat.1} parent=47 // pred_region
          %s371 = smul.u32 4, %s27
          %p372 = scmp.lt.s32.totalorder %s26, 1
          %s373 = scalar_select %p372, %s26, 1
          %p374 = scmp.lt.s32.totalorder %s371, 3
          %s375 = scalar_select %p374, %s371, 3
          %s376 = smul.addr %s373, 4
          %s377 = sadd.s32 %s375, %s376
          %s378 = smul.addr %s377, 4
          %s379 = scalar_lea.vmem %s0, %s378
          %s380 = smul.u32 4, %s27
        $region52: #{mspointnet_feat.1} parent=47 // pred_fallthru
          _
      $region48: #{mspointnet_feat.1} parent=5 // pred_fallthru
        _
      %p381 = scmp.le.s32.totalorder 1, %s19
      %p382 = scmp.lt.s32.totalorder %s19, 3
      %p383 = pnand %p381, %p382
      %p384 = pneg %p383
      // Predicated region
      $region53: #{mspointnet_feat.1} parent=5 // pred_check
        _
      $region54: #{mspointnet_feat.1} parent=5 // pred_check_branch
        %386 = sbr.rel (%p383) target = $region56
      $region55: #{mspointnet_feat.1} parent=5 // pred_region
        %s387 = ssub.s32 %s19, 1
        // Predicated region
        $region57: #{mspointnet_feat.1} parent=55 // pred_check
          %p388 = pneg %p80
        $region58: #{mspointnet_feat.1} parent=55 // pred_check_branch
          %390 = sbr.rel (%p388) target = $region60
        $region59: #{mspointnet_feat.1} parent=55 // pred_region
          %391 = dma.done [#allocation3], 1024
        $region60: #{mspointnet_feat.1} parent=55 // pred_fallthru
          _
        // Predicated region
        $region61: #{mspointnet_feat.1} parent=55 // pred_check
          %p392 = pneg %p101
        $region62: #{mspointnet_feat.1} parent=55 // pred_check_branch
          %394 = sbr.rel (%p392) target = $region64
        $region63: #{mspointnet_feat.1} parent=55 // pred_region
          %395 = dma.done [#allocation5], 1024
        $region64: #{mspointnet_feat.1} parent=55 // pred_fallthru
          _
        // Predicated region
        $region65: #{mspointnet_feat.1} parent=55 // pred_check
          %p396 = pneg %p122
        $region66: #{mspointnet_feat.1} parent=55 // pred_check_branch
          %398 = sbr.rel (%p396) target = $region68
        $region67: #{mspointnet_feat.1} parent=55 // pred_region
          %399 = dma.done [#allocation5], 1024
        $region68: #{mspointnet_feat.1} parent=55 // pred_fallthru
          _
        // Predicated region
        $region69: #{mspointnet_feat.1} parent=55 // pred_check
          %p400 = pneg %p143
        $region70: #{mspointnet_feat.1} parent=55 // pred_check_branch
          %402 = sbr.rel (%p400) target = $region72
        $region71: #{mspointnet_feat.1} parent=55 // pred_region
          %403 = dma.done [#allocation8], 2048
        $region72: #{mspointnet_feat.1} parent=55 // pred_fallthru
          _
        // Predicated region
        $region73: #{mspointnet_feat.1} parent=55 // pred_check
          %p404 = pneg %p164
        $region74: #{mspointnet_feat.1} parent=55 // pred_check_branch
          %406 = sbr.rel (%p404) target = $region76
        $region75: #{mspointnet_feat.1} parent=55 // pred_region
          %407 = dma.done [#allocation8], 2048
        $region76: #{mspointnet_feat.1} parent=55 // pred_fallthru
          _
        // Predicated region
        $region77: #{mspointnet_feat.1} parent=55 // pred_check
          %p408 = pneg %p185
        $region78: #{mspointnet_feat.1} parent=55 // pred_check_branch
          %410 = sbr.rel (%p408) target = $region80
        $region79: #{mspointnet_feat.1} parent=55 // pred_region
          %411 = dma.done [#allocation11], 4096
        $region80: #{mspointnet_feat.1} parent=55 // pred_fallthru
          _
        // Predicated region
        $region81: #{mspointnet_feat.1} parent=55 // pred_check
          %p412 = pneg %p227
        $region82: #{mspointnet_feat.1} parent=55 // pred_check_branch
          %414 = sbr.rel (%p412) target = $region84
        $region83: #{mspointnet_feat.1} parent=55 // pred_region
          %415 = dma.done [#allocation11], 8192
        $region84: #{mspointnet_feat.1} parent=55 // pred_fallthru
          _
        %s416 = smul.u32 4, %s29
        %p417 = scmp.lt.s32.totalorder %s28, 1
        %s418 = scalar_select %p417, %s28, 1
        %p419 = scmp.lt.s32.totalorder %s416, 3
        %s420 = scalar_select %p419, %s416, 3
        %s421 = smul.addr %s418, 4
        %s422 = sadd.s32 %s420, %s421
        %s423 = smul.addr %s422, 4
        %s424 = scalar_lea.vmem %s0, %s423
        %p425 = pneg %p59
        %p426 = pneg %p56
        %p427 = pneg %p80
        %p428 = pneg %p77
        %p429 = pneg %p101
        %p430 = pneg %p98
        %p431 = pneg %p122
        %p432 = pneg %p119
        %p433 = pneg %p143
        %p434 = pneg %p140
        %p435 = pneg %p164
        %p436 = pneg %p161
        %p437 = pneg %p185
        %p438 = pneg %p182
        %p439 = pneg %p206
        %p440 = pneg %p203
        %p441 = pneg %p227
        %p442 = pneg %p224
        %p443 = pneg %p255
        %p444 = pneg %p252
        %s445 = smul.u32 4, %s29
        %p446 = scmp.lt.s32.totalorder %s28, 1
        %s447 = scalar_select %p446, %s28, 1
        %p448 = scmp.lt.s32.totalorder %s445, 3
        %s449 = scalar_select %p448, %s445, 3
        %s450 = smul.addr %s447, 256
        %s451 = sadd.s32 %s449, %s450
        %s452 = smul.addr %s451, 8
        %s453 = scalar_lea.vmem %s9, %s452
        %s454 = smul.u32 4, %s29
        %p455 = scmp.lt.s32.totalorder %s28, 1
        %s456 = scalar_select %p455, %s28, 1
        %p457 = scmp.lt.s32.totalorder %s454, 3
        %s458 = scalar_select %p457, %s454, 3
        %s459 = smul.addr %s456, 4
        %s460 = sadd.s32 %s458, %s459
        %s461 = smul.addr %s460, 4
        %s462 = scalar_lea.vmem %s0, %s461
        %s463 = smul.u32 4, %s29
        %s464 = smul.u32 4, %s29
        %p465 = scmp.lt.s32.totalorder %s28, 1
        %s466 = scalar_select %p465, %s28, 1
        %p467 = scmp.lt.s32.totalorder %s464, 3
        %s468 = scalar_select %p467, %s464, 3
        %s469 = smul.addr %s466, 256
        %s470 = sadd.s32 %s468, %s469
        %s471 = smul.addr %s470, 8
        %s472 = scalar_lea.vmem %s9, %s471
        %s473 = smul.u32 4, %s29
        %v475 = vld [vmem:[%s462] sm:$0x77]
        %v476 = vld [vmem:[%s462 + $0x8] sm:$0x77]
        %v477 = vld [vmem:[#allocation2] sm:$0xff]
        %v478 = vld [vmem:[#allocation2 + $0x8] sm:$0xff]
        %v479 = vld [vmem:[#allocation2 + $0x10] sm:$0xff]
        %v480 = vld [vmem:[#allocation2 + $0x18] sm:$0xff]
        %v481 = vld [vmem:[#allocation2 + $0x20] sm:$0xff]
        %v482 = vld [vmem:[#allocation2 + $0x28] sm:$0xff]
        %v483 = vld [vmem:[#allocation2 + $0x30] sm:$0xff]
        %v484 = vld [vmem:[#allocation2 + $0x38] sm:$0xff]
        %486 = vset.pattern.permute.xlu0 0
        %487 = vperm.xlu0 %486, %v477
        %v488 = vpop.permute.xlu0 %487
        %491 = vset.pattern.permute.xlu0 0
        %492 = vperm.xlu0 %491, %v478
        %v493 = vpop.permute.xlu0 %492
        %496 = vset.pattern.permute.xlu0 0
        %497 = vperm.xlu0 %496, %v479
        %v498 = vpop.permute.xlu0 %497
        %501 = vset.pattern.permute.xlu0 0
        %502 = vperm.xlu0 %501, %v480
        %v503 = vpop.permute.xlu0 %502
        %506 = vset.pattern.permute.xlu0 0
        %507 = vperm.xlu0 %506, %v481
        %v508 = vpop.permute.xlu0 %507
        %511 = vset.pattern.permute.xlu0 0
        %512 = vperm.xlu0 %511, %v482
        %v513 = vpop.permute.xlu0 %512
        %516 = vset.pattern.permute.xlu0 0
        %517 = vperm.xlu0 %516, %v483
        %v518 = vpop.permute.xlu0 %517
        %521 = vset.pattern.permute.xlu0 0
        %522 = vperm.xlu0 %521, %v484
        %v523 = vpop.permute.xlu0 %522
        %v527 = vlaneseq
        %v528 = vshrl.u32 %v527, 7
        %v529 = vsub.s32 0, %v528
        %v530 = vrot.slane %v475, %v529
        %v531 = vlaneseq
        %v532 = vshrl.u32 %v531, 7
        %v533 = vsub.s32 4, %v532
        %v534 = vrot.slane %v475, %v533
        %v535 = vlaneseq
        %v536 = vshrl.u32 %v535, 7
        %v537 = vsub.s32 0, %v536
        %v538 = vrot.slane %v476, %v537
        %v539 = vlaneseq
        %v540 = vshrl.u32 %v539, 7
        %v541 = vsub.s32 4, %v540
        %v542 = vrot.slane %v476, %v541
        %v547 = vlaneseq
        %v548 = vshrl.u32 %v547, 7
        %v549 = vsub.s32 0, %v548
        %v550 = vrot.slane %v530, %v549
        %v551 = vlaneseq
        %v552 = vshrl.u32 %v551, 7
        %v553 = vsub.s32 0, %v552
        %v554 = vrot.slane %v534, %v553
        %v555 = vlaneseq
        %v556 = vshrl.u32 %v555, 7
        %v557 = vsub.s32 0, %v556
        %v558 = vrot.slane %v538, %v557
        %v559 = vlaneseq
        %v560 = vshrl.u32 %v559, 7
        %v561 = vsub.s32 0, %v560
        %v562 = vrot.slane %v542, %v561
        %v563 = vmul.f32 %v488, %v550
        %v564 = vmul.f32 %v488, %v554
        %v565 = vmul.f32 %v488, %v558
        %v566 = vmul.f32 %v488, %v562
        %v567 = vmul.f32 %v493, %v550
        %v568 = vmul.f32 %v493, %v554
        %v569 = vmul.f32 %v493, %v558
        %v570 = vmul.f32 %v493, %v562
        %v571 = vmul.f32 %v498, %v550
        %v572 = vmul.f32 %v498, %v554
        %v573 = vmul.f32 %v498, %v558
        %v574 = vmul.f32 %v498, %v562
        %v575 = vmul.f32 %v503, %v550
        %v576 = vmul.f32 %v503, %v554
        %v577 = vmul.f32 %v503, %v558
        %v578 = vmul.f32 %v503, %v562
        %v579 = vmul.f32 %v508, %v550
        %v580 = vmul.f32 %v508, %v554
        %v581 = vmul.f32 %v508, %v558
        %v582 = vmul.f32 %v508, %v562
        %v583 = vmul.f32 %v513, %v550
        %v584 = vmul.f32 %v513, %v554
        %v585 = vmul.f32 %v513, %v558
        %v586 = vmul.f32 %v513, %v562
        %v587 = vmul.f32 %v518, %v550
        %v588 = vmul.f32 %v518, %v554
        %v589 = vmul.f32 %v518, %v558
        %v590 = vmul.f32 %v518, %v562
        %v591 = vmul.f32 %v523, %v550
        %v592 = vmul.f32 %v523, %v554
        %v593 = vmul.f32 %v523, %v558
        %v594 = vmul.f32 %v523, %v562
        %595 = vset.pattern.permute.xlu0 1
        %596 = vperm.xlu0 %595, %v477
        %v597 = vpop.permute.xlu0 %596
        %599 = vset.pattern.permute.xlu0 1
        %600 = vperm.xlu0 %599, %v478
        %v601 = vpop.permute.xlu0 %600
        %603 = vset.pattern.permute.xlu0 1
        %604 = vperm.xlu0 %603, %v479
        %v605 = vpop.permute.xlu0 %604
        %607 = vset.pattern.permute.xlu0 1
        %608 = vperm.xlu0 %607, %v480
        %v609 = vpop.permute.xlu0 %608
        %611 = vset.pattern.permute.xlu0 1
        %612 = vperm.xlu0 %611, %v481
        %v613 = vpop.permute.xlu0 %612
        %615 = vset.pattern.permute.xlu0 1
        %616 = vperm.xlu0 %615, %v482
        %v617 = vpop.permute.xlu0 %616
        %619 = vset.pattern.permute.xlu0 1
        %620 = vperm.xlu0 %619, %v483
        %v621 = vpop.permute.xlu0 %620
        %623 = vset.pattern.permute.xlu0 1
        %624 = vperm.xlu0 %623, %v484
        %v625 = vpop.permute.xlu0 %624
        %v627 = vlaneseq
        %v628 = vshrl.u32 %v627, 7
        %v629 = vsub.s32 1, %v628
        %v630 = vrot.slane %v475, %v629
        %v631 = vlaneseq
        %v632 = vshrl.u32 %v631, 7
        %v633 = vsub.s32 5, %v632
        %v634 = vrot.slane %v475, %v633
        %v635 = vlaneseq
        %v636 = vshrl.u32 %v635, 7
        %v637 = vsub.s32 1, %v636
        %v638 = vrot.slane %v476, %v637
        %v639 = vlaneseq
        %v640 = vshrl.u32 %v639, 7
        %v641 = vsub.s32 5, %v640
        %v642 = vrot.slane %v476, %v641
        %v647 = vlaneseq
        %v648 = vshrl.u32 %v647, 7
        %v649 = vsub.s32 1, %v648
        %v650 = vrot.slane %v630, %v649
        %v651 = vlaneseq
        %v652 = vshrl.u32 %v651, 7
        %v653 = vsub.s32 1, %v652
        %v654 = vrot.slane %v634, %v653
        %v655 = vlaneseq
        %v656 = vshrl.u32 %v655, 7
        %v657 = vsub.s32 1, %v656
        %v658 = vrot.slane %v638, %v657
        %v659 = vlaneseq
        %v660 = vshrl.u32 %v659, 7
        %v661 = vsub.s32 1, %v660
        %v662 = vrot.slane %v642, %v661
        %v663 = vmul.f32 %v597, %v650
        %v664 = vmul.f32 %v597, %v654
        %v665 = vmul.f32 %v597, %v658
        %v666 = vmul.f32 %v597, %v662
        %v667 = vmul.f32 %v601, %v650
        %v668 = vmul.f32 %v601, %v654
        %v669 = vmul.f32 %v601, %v658
        %v670 = vmul.f32 %v601, %v662
        %v671 = vmul.f32 %v605, %v650
        %v672 = vmul.f32 %v605, %v654
        %v673 = vmul.f32 %v605, %v658
        %v674 = vmul.f32 %v605, %v662
        %v675 = vmul.f32 %v609, %v650
        %v676 = vmul.f32 %v609, %v654
        %v677 = vmul.f32 %v609, %v658
        %v678 = vmul.f32 %v609, %v662
        %v679 = vmul.f32 %v613, %v650
        %v680 = vmul.f32 %v613, %v654
        %v681 = vmul.f32 %v613, %v658
        %v682 = vmul.f32 %v613, %v662
        %v683 = vmul.f32 %v617, %v650
        %v684 = vmul.f32 %v617, %v654
        %v685 = vmul.f32 %v617, %v658
        %v686 = vmul.f32 %v617, %v662
        %v687 = vmul.f32 %v621, %v650
        %v688 = vmul.f32 %v621, %v654
        %v689 = vmul.f32 %v621, %v658
        %v690 = vmul.f32 %v621, %v662
        %v691 = vmul.f32 %v625, %v650
        %v692 = vmul.f32 %v625, %v654
        %v693 = vmul.f32 %v625, %v658
        %v694 = vmul.f32 %v625, %v662
        %v695 = vadd.f32 %v563, %v663
        %v696 = vadd.f32 %v564, %v664
        %v697 = vadd.f32 %v565, %v665
        %v698 = vadd.f32 %v566, %v666
        %v699 = vadd.f32 %v567, %v667
        %v700 = vadd.f32 %v568, %v668
        %v701 = vadd.f32 %v569, %v669
        %v702 = vadd.f32 %v570, %v670
        %v703 = vadd.f32 %v571, %v671
        %v704 = vadd.f32 %v572, %v672
        %v705 = vadd.f32 %v573, %v673
        %v706 = vadd.f32 %v574, %v674
        %v707 = vadd.f32 %v575, %v675
        %v708 = vadd.f32 %v576, %v676
        %v709 = vadd.f32 %v577, %v677
        %v710 = vadd.f32 %v578, %v678
        %v711 = vadd.f32 %v579, %v679
        %v712 = vadd.f32 %v580, %v680
        %v713 = vadd.f32 %v581, %v681
        %v714 = vadd.f32 %v582, %v682
        %v715 = vadd.f32 %v583, %v683
        %v716 = vadd.f32 %v584, %v684
        %v717 = vadd.f32 %v585, %v685
        %v718 = vadd.f32 %v586, %v686
        %v719 = vadd.f32 %v587, %v687
        %v720 = vadd.f32 %v588, %v688
        %v721 = vadd.f32 %v589, %v689
        %v722 = vadd.f32 %v590, %v690
        %v723 = vadd.f32 %v591, %v691
        %v724 = vadd.f32 %v592, %v692
        %v725 = vadd.f32 %v593, %v693
        %v726 = vadd.f32 %v594, %v694
        %727 = vset.pattern.permute.xlu0 2
        %728 = vperm.xlu0 %727, %v477
        %v729 = vpop.permute.xlu0 %728
        %731 = vset.pattern.permute.xlu0 2
        %732 = vperm.xlu0 %731, %v478
        %v733 = vpop.permute.xlu0 %732
        %735 = vset.pattern.permute.xlu0 2
        %736 = vperm.xlu0 %735, %v479
        %v737 = vpop.permute.xlu0 %736
        %739 = vset.pattern.permute.xlu0 2
        %740 = vperm.xlu0 %739, %v480
        %v741 = vpop.permute.xlu0 %740
        %743 = vset.pattern.permute.xlu0 2
        %744 = vperm.xlu0 %743, %v481
        %v745 = vpop.permute.xlu0 %744
        %747 = vset.pattern.permute.xlu0 2
        %748 = vperm.xlu0 %747, %v482
        %v749 = vpop.permute.xlu0 %748
        %751 = vset.pattern.permute.xlu0 2
        %752 = vperm.xlu0 %751, %v483
        %v753 = vpop.permute.xlu0 %752
        %755 = vset.pattern.permute.xlu0 2
        %756 = vperm.xlu0 %755, %v484
        %v757 = vpop.permute.xlu0 %756
        %v759 = vlaneseq
        %v760 = vshrl.u32 %v759, 7
        %v761 = vsub.s32 2, %v760
        %v762 = vrot.slane %v475, %v761
        %v763 = vlaneseq
        %v764 = vshrl.u32 %v763, 7
        %v765 = vsub.s32 6, %v764
        %v766 = vrot.slane %v475, %v765
        %v767 = vlaneseq
        %v768 = vshrl.u32 %v767, 7
        %v769 = vsub.s32 2, %v768
        %v770 = vrot.slane %v476, %v769
        %v771 = vlaneseq
        %v772 = vshrl.u32 %v771, 7
        %v773 = vsub.s32 6, %v772
        %v774 = vrot.slane %v476, %v773
        %v779 = vlaneseq
        %v780 = vshrl.u32 %v779, 7
        %v781 = vsub.s32 2, %v780
        %v782 = vrot.slane %v762, %v781
        %v783 = vlaneseq
        %v784 = vshrl.u32 %v783, 7
        %v785 = vsub.s32 2, %v784
        %v786 = vrot.slane %v766, %v785
        %v787 = vlaneseq
        %v788 = vshrl.u32 %v787, 7
        %v789 = vsub.s32 2, %v788
        %v790 = vrot.slane %v770, %v789
        %v791 = vlaneseq
        %v792 = vshrl.u32 %v791, 7
        %v793 = vsub.s32 2, %v792
        %v794 = vrot.slane %v774, %v793
        %v795 = vmul.f32 %v729, %v782
        %v796 = vmul.f32 %v729, %v786
        %v797 = vmul.f32 %v729, %v790
        %v798 = vmul.f32 %v729, %v794
        %v799 = vmul.f32 %v733, %v782
        %v800 = vmul.f32 %v733, %v786
        %v801 = vmul.f32 %v733, %v790
        %v802 = vmul.f32 %v733, %v794
        %v803 = vmul.f32 %v737, %v782
        %v804 = vmul.f32 %v737, %v786
        %v805 = vmul.f32 %v737, %v790
        %v806 = vmul.f32 %v737, %v794
        %v807 = vmul.f32 %v741, %v782
        %v808 = vmul.f32 %v741, %v786
        %v809 = vmul.f32 %v741, %v790
        %v810 = vmul.f32 %v741, %v794
        %v811 = vmul.f32 %v745, %v782
        %v812 = vmul.f32 %v745, %v786
        %v813 = vmul.f32 %v745, %v790
        %v814 = vmul.f32 %v745, %v794
        %v815 = vmul.f32 %v749, %v782
        %v816 = vmul.f32 %v749, %v786
        %v817 = vmul.f32 %v749, %v790
        %v818 = vmul.f32 %v749, %v794
        %v819 = vmul.f32 %v753, %v782
        %v820 = vmul.f32 %v753, %v786
        %v821 = vmul.f32 %v753, %v790
        %v822 = vmul.f32 %v753, %v794
        %v823 = vmul.f32 %v757, %v782
        %v824 = vmul.f32 %v757, %v786
        %v825 = vmul.f32 %v757, %v790
        %v826 = vmul.f32 %v757, %v794
        %v827 = vadd.f32 %v695, %v795
        %v828 = vadd.f32 %v696, %v796
        %v829 = vadd.f32 %v697, %v797
        %v830 = vadd.f32 %v698, %v798
        %v831 = vadd.f32 %v699, %v799
        %v832 = vadd.f32 %v700, %v800
        %v833 = vadd.f32 %v701, %v801
        %v834 = vadd.f32 %v702, %v802
        %v835 = vadd.f32 %v703, %v803
        %v836 = vadd.f32 %v704, %v804
        %v837 = vadd.f32 %v705, %v805
        %v838 = vadd.f32 %v706, %v806
        %v839 = vadd.f32 %v707, %v807
        %v840 = vadd.f32 %v708, %v808
        %v841 = vadd.f32 %v709, %v809
        %v842 = vadd.f32 %v710, %v810
        %v843 = vadd.f32 %v711, %v811
        %v844 = vadd.f32 %v712, %v812
        %v845 = vadd.f32 %v713, %v813
        %v846 = vadd.f32 %v714, %v814
        %v847 = vadd.f32 %v715, %v815
        %v848 = vadd.f32 %v716, %v816
        %v849 = vadd.f32 %v717, %v817
        %v850 = vadd.f32 %v718, %v818
        %v851 = vadd.f32 %v719, %v819
        %v852 = vadd.f32 %v720, %v820
        %v853 = vadd.f32 %v721, %v821
        %v854 = vadd.f32 %v722, %v822
        %v855 = vadd.f32 %v723, %v823
        %v856 = vadd.f32 %v724, %v824
        %v857 = vadd.f32 %v725, %v825
        %v858 = vadd.f32 %v726, %v826
        %v859 = vld [vmem:[#allocation4] sm:$0xff]
        %v860 = vld [vmem:[#allocation4 + $0x8] sm:$0xff]
        %v861 = vld [vmem:[#allocation4 + $0x10] sm:$0xff]
        %v862 = vld [vmem:[#allocation4 + $0x18] sm:$0xff]
        %v863 = vld [vmem:[#allocation4 + $0x20] sm:$0xff]
        %v864 = vld [vmem:[#allocation4 + $0x28] sm:$0xff]
        %v865 = vld [vmem:[#allocation4 + $0x30] sm:$0xff]
        %v866 = vld [vmem:[#allocation4 + $0x38] sm:$0xff]
        %868 = vset.pattern.permute.xlu0 0
        %869 = vperm.xlu0 %868, %v859
        %v870 = vpop.permute.xlu0 %869
        %873 = vset.pattern.permute.xlu0 0
        %874 = vperm.xlu0 %873, %v860
        %v875 = vpop.permute.xlu0 %874
        %878 = vset.pattern.permute.xlu0 0
        %879 = vperm.xlu0 %878, %v861
        %v880 = vpop.permute.xlu0 %879
        %883 = vset.pattern.permute.xlu0 0
        %884 = vperm.xlu0 %883, %v862
        %v885 = vpop.permute.xlu0 %884
        %888 = vset.pattern.permute.xlu0 0
        %889 = vperm.xlu0 %888, %v863
        %v890 = vpop.permute.xlu0 %889
        %893 = vset.pattern.permute.xlu0 0
        %894 = vperm.xlu0 %893, %v864
        %v895 = vpop.permute.xlu0 %894
        %898 = vset.pattern.permute.xlu0 0
        %899 = vperm.xlu0 %898, %v865
        %v900 = vpop.permute.xlu0 %899
        %903 = vset.pattern.permute.xlu0 0
        %904 = vperm.xlu0 %903, %v866
        %v905 = vpop.permute.xlu0 %904
        %v907 = vadd.f32 %v827, %v870
        %v908 = vadd.f32 %v828, %v870
        %v909 = vadd.f32 %v829, %v870
        %v910 = vadd.f32 %v830, %v870
        %v911 = vadd.f32 %v831, %v875
        %v912 = vadd.f32 %v832, %v875
        %v913 = vadd.f32 %v833, %v875
        %v914 = vadd.f32 %v834, %v875
        %v915 = vadd.f32 %v835, %v880
        %v916 = vadd.f32 %v836, %v880
        %v917 = vadd.f32 %v837, %v880
        %v918 = vadd.f32 %v838, %v880
        %v919 = vadd.f32 %v839, %v885
        %v920 = vadd.f32 %v840, %v885
        %v921 = vadd.f32 %v841, %v885
        %v922 = vadd.f32 %v842, %v885
        %v923 = vadd.f32 %v843, %v890
        %v924 = vadd.f32 %v844, %v890
        %v925 = vadd.f32 %v845, %v890
        %v926 = vadd.f32 %v846, %v890
        %v927 = vadd.f32 %v847, %v895
        %v928 = vadd.f32 %v848, %v895
        %v929 = vadd.f32 %v849, %v895
        %v930 = vadd.f32 %v850, %v895
        %v931 = vadd.f32 %v851, %v900
        %v932 = vadd.f32 %v852, %v900
        %v933 = vadd.f32 %v853, %v900
        %v934 = vadd.f32 %v854, %v900
        %v935 = vadd.f32 %v855, %v905
        %v936 = vadd.f32 %v856, %v905
        %v937 = vadd.f32 %v857, %v905
        %v938 = vadd.f32 %v858, %v905
        %v939 = vmax.f32 %v907, 0.0
        %v940 = vmax.f32 %v908, 0.0
        %v941 = vmax.f32 %v909, 0.0
        %v942 = vmax.f32 %v910, 0.0
        %v943 = vmax.f32 %v911, 0.0
        %v944 = vmax.f32 %v912, 0.0
        %v945 = vmax.f32 %v913, 0.0
        %v946 = vmax.f32 %v914, 0.0
        %v947 = vmax.f32 %v915, 0.0
        %v948 = vmax.f32 %v916, 0.0
        %v949 = vmax.f32 %v917, 0.0
        %v950 = vmax.f32 %v918, 0.0
        %v951 = vmax.f32 %v919, 0.0
        %v952 = vmax.f32 %v920, 0.0
        %v953 = vmax.f32 %v921, 0.0
        %v954 = vmax.f32 %v922, 0.0
        %v955 = vmax.f32 %v923, 0.0
        %v956 = vmax.f32 %v924, 0.0
        %v957 = vmax.f32 %v925, 0.0
        %v958 = vmax.f32 %v926, 0.0
        %v959 = vmax.f32 %v927, 0.0
        %v960 = vmax.f32 %v928, 0.0
        %v961 = vmax.f32 %v929, 0.0
        %v962 = vmax.f32 %v930, 0.0
        %v963 = vmax.f32 %v931, 0.0
        %v964 = vmax.f32 %v932, 0.0
        %v965 = vmax.f32 %v933, 0.0
        %v966 = vmax.f32 %v934, 0.0
        %v967 = vmax.f32 %v935, 0.0
        %v968 = vmax.f32 %v936, 0.0
        %v969 = vmax.f32 %v937, 0.0
        %v970 = vmax.f32 %v938, 0.0
        %v971 = vld [vmem:[#allocation6] sm:$0xf]
        %v972 = vld [vmem:[#allocation6 + $0x4] sm:$0xf]
        %v973 = vld [vmem:[#allocation6 + $0x8] sm:$0xf]
        %v974 = vld [vmem:[#allocation6 + $0xc] sm:$0xf]
        %v975 = vld [vmem:[#allocation6 + $0x10] sm:$0xf]
        %v976 = vld [vmem:[#allocation6 + $0x14] sm:$0xf]
        %v977 = vld [vmem:[#allocation6 + $0x18] sm:$0xf]
        %v978 = vld [vmem:[#allocation6 + $0x1c] sm:$0xf]
        %v979 = vld [vmem:[#allocation6 + $0x20] sm:$0xf]
        %v980 = vld [vmem:[#allocation6 + $0x24] sm:$0xf]
        %v981 = vld [vmem:[#allocation6 + $0x28] sm:$0xf]
        %v982 = vld [vmem:[#allocation6 + $0x2c] sm:$0xf]
        %v983 = vld [vmem:[#allocation6 + $0x30] sm:$0xf]
        %v984 = vld [vmem:[#allocation6 + $0x34] sm:$0xf]
        %v985 = vld [vmem:[#allocation6 + $0x38] sm:$0xf]
        %v986 = vld [vmem:[#allocation6 + $0x3c] sm:$0xf]
        %v987 = vpack.c.bf16 %v943, %v939
        %v988 = vpack.c.bf16 %v944, %v940
        %v989 = vpack.c.bf16 %v945, %v941
        %v990 = vpack.c.bf16 %v946, %v942
        %v991 = vpack.c.bf16 %v951, %v947
        %v992 = vpack.c.bf16 %v952, %v948
        %v993 = vpack.c.bf16 %v953, %v949
        %v994 = vpack.c.bf16 %v954, %v950
        %v995 = vpack.c.bf16 %v959, %v955
        %v996 = vpack.c.bf16 %v960, %v956
        %v997 = vpack.c.bf16 %v961, %v957
        %v998 = vpack.c.bf16 %v962, %v958
        %v999 = vpack.c.bf16 %v967, %v963
        %v1000 = vpack.c.bf16 %v968, %v964
        %v1001 = vpack.c.bf16 %v969, %v965
        %v1002 = vpack.c.bf16 %v970, %v966
        %v1003 = vld [vmem:[#allocation7] sm:$0xff]
        %v1004 = vld [vmem:[#allocation7 + $0x8] sm:$0xff]
        %v1005 = vld [vmem:[#allocation7 + $0x10] sm:$0xff]
        %v1006 = vld [vmem:[#allocation7 + $0x18] sm:$0xff]
        %v1007 = vld [vmem:[#allocation7 + $0x20] sm:$0xff]
        %v1008 = vld [vmem:[#allocation7 + $0x28] sm:$0xff]
        %v1009 = vld [vmem:[#allocation7 + $0x30] sm:$0xff]
        %v1010 = vld [vmem:[#allocation7 + $0x38] sm:$0xff]
        %v1011 = vld [vmem:[#allocation7 + $0x40] sm:$0xff]
        %v1012 = vld [vmem:[#allocation7 + $0x48] sm:$0xff]
        %v1013 = vld [vmem:[#allocation7 + $0x50] sm:$0xff]
        %v1014 = vld [vmem:[#allocation7 + $0x58] sm:$0xff]
        %v1015 = vld [vmem:[#allocation7 + $0x60] sm:$0xff]
        %v1016 = vld [vmem:[#allocation7 + $0x68] sm:$0xff]
        %v1017 = vld [vmem:[#allocation7 + $0x70] sm:$0xff]
        %v1018 = vld [vmem:[#allocation7 + $0x78] sm:$0xff]
        %1020 = vset.pattern.permute.xlu0 0
        %1021 = vperm.xlu0 %1020, %v1003
        %v1022 = vpop.permute.xlu0 %1021
        %1025 = vset.pattern.permute.xlu0 0
        %1026 = vperm.xlu0 %1025, %v1004
        %v1027 = vpop.permute.xlu0 %1026
        %1030 = vset.pattern.permute.xlu0 0
        %1031 = vperm.xlu0 %1030, %v1005
        %v1032 = vpop.permute.xlu0 %1031
        %1035 = vset.pattern.permute.xlu0 0
        %1036 = vperm.xlu0 %1035, %v1006
        %v1037 = vpop.permute.xlu0 %1036
        %1040 = vset.pattern.permute.xlu0 0
        %1041 = vperm.xlu0 %1040, %v1007
        %v1042 = vpop.permute.xlu0 %1041
        %1045 = vset.pattern.permute.xlu0 0
        %1046 = vperm.xlu0 %1045, %v1008
        %v1047 = vpop.permute.xlu0 %1046
        %1050 = vset.pattern.permute.xlu0 0
        %1051 = vperm.xlu0 %1050, %v1009
        %v1052 = vpop.permute.xlu0 %1051
        %1055 = vset.pattern.permute.xlu0 0
        %1056 = vperm.xlu0 %1055, %v1010
        %v1057 = vpop.permute.xlu0 %1056
        %1060 = vset.pattern.permute.xlu0 0
        %1061 = vperm.xlu0 %1060, %v1011
        %v1062 = vpop.permute.xlu0 %1061
        %1065 = vset.pattern.permute.xlu0 0
        %1066 = vperm.xlu0 %1065, %v1012
        %v1067 = vpop.permute.xlu0 %1066
        %1070 = vset.pattern.permute.xlu0 0
        %1071 = vperm.xlu0 %1070, %v1013
        %v1072 = vpop.permute.xlu0 %1071
        %1075 = vset.pattern.permute.xlu0 0
        %1076 = vperm.xlu0 %1075, %v1014
        %v1077 = vpop.permute.xlu0 %1076
        %1080 = vset.pattern.permute.xlu0 0
        %1081 = vperm.xlu0 %1080, %v1015
        %v1082 = vpop.permute.xlu0 %1081
        %1085 = vset.pattern.permute.xlu0 0
        %1086 = vperm.xlu0 %1085, %v1016
        %v1087 = vpop.permute.xlu0 %1086
        %1090 = vset.pattern.permute.xlu0 0
        %1091 = vperm.xlu0 %1090, %v1017
        %v1092 = vpop.permute.xlu0 %1091
        %1095 = vset.pattern.permute.xlu0 0
        %1096 = vperm.xlu0 %1095, %v1018
        %v1097 = vpop.permute.xlu0 %1096
        %v1115 = vunpack.c.l.b16 %v971
        %v1116 = vunpack.c.l.b16 %v972
        %v1117 = vunpack.c.l.b16 %v973
        %v1118 = vunpack.c.l.b16 %v974
        %v1119 = vunpack.c.l.b16 %v975
        %v1120 = vunpack.c.l.b16 %v976
        %v1121 = vunpack.c.l.b16 %v977
        %v1122 = vunpack.c.l.b16 %v978
        %v1123 = vunpack.c.l.b16 %v979
        %v1124 = vunpack.c.l.b16 %v980
        %v1125 = vunpack.c.l.b16 %v981
        %v1126 = vunpack.c.l.b16 %v982
        %v1127 = vunpack.c.l.b16 %v983
        %v1128 = vunpack.c.l.b16 %v984
        %v1129 = vunpack.c.l.b16 %v985
        %v1130 = vunpack.c.l.b16 %v986
        %v1131 = vpack.c.b16 %v1116, %v1115
        %v1132 = vpack.c.b16 %v1118, %v1117
        %v1133 = vpack.c.b16 %v1120, %v1119
        %v1134 = vpack.c.b16 %v1122, %v1121
        %v1135 = vpack.c.b16 %v1124, %v1123
        %v1136 = vpack.c.b16 %v1126, %v1125
        %v1137 = vpack.c.b16 %v1128, %v1127
        %v1138 = vpack.c.b16 %v1130, %v1129
        %vm1139 = vcmask 523264
        %v1141 = vsel %vm1139, %v1131, 0
        %v1144 = vsel %vm1139, %v1132, 0
        %v1147 = vsel %vm1139, %v1133, 0
        %v1150 = vsel %vm1139, %v1134, 0
        %v1153 = vsel %vm1139, %v1135, 0
        %v1156 = vsel %vm1139, %v1136, 0
        %v1159 = vsel %vm1139, %v1137, 0
        %v1162 = vsel %vm1139, %v1138, 0
        %1164 = vmatprep.subr.bf16.mxu0 %v988
        %1165 = vmatpush1.bf16.msra.mxu0 %v987
        %1166 = vmatprep.subr.bf16.mxu0 %v992
        %1167 = vmatpush1.bf16.msra.mxu0 %v991
        %1168 = vmatprep.subr.bf16.mxu0 %v996
        %1169 = vmatpush1.bf16.msra.mxu0 %v995
        %1170 = vmatprep.subr.bf16.mxu0 %v1000
        %1171 = vmatpush1.bf16.msra.mxu0 %v999
        %1172 = vmatprep.subr.bf16.mxu0 0
        %1173 = vmatpush1.bf16.msra.mxu0 0
        %1174 = vmatprep.subr.bf16.mxu0 0
        %1175 = vmatpush1.bf16.msra.mxu0 0
        %1176 = vmatprep.subr.bf16.mxu0 0
        %1177 = vmatpush1.bf16.msra.mxu0 0
        %1178 = vmatprep.subr.bf16.mxu0 0
        %1179 = vmatpush1.bf16.msra.mxu0 0
        %1180 = vmatprep.subr.bf16.mxu0 0
        %1181 = vmatpush1.bf16.msra.mxu0 0
        %1182 = vmatprep.subr.bf16.mxu0 0
        %1183 = vmatpush1.bf16.msra.mxu0 0
        %1184 = vmatprep.subr.bf16.mxu0 0
        %1185 = vmatpush1.bf16.msra.mxu0 0
        %1186 = vmatprep.subr.bf16.mxu0 0
        %1187 = vmatpush1.bf16.msra.mxu0 0
        %1188 = vmatprep.subr.bf16.mxu0 0
        %1189 = vmatpush1.bf16.msra.mxu0 0
        %1190 = vmatprep.subr.bf16.mxu0 0
        %1191 = vmatpush1.bf16.msra.mxu0 0
        %1192 = vmatprep.subr.bf16.mxu0 0
        %1193 = vmatpush1.bf16.msra.mxu0 0
        %1194 = vmatprep.subr.bf16.mxu0 0
        %1195 = vmatpush1.bf16.msra.mxu0 0
        %1196 = vmatprep.mubr.bf16.mxu0 0
        %1197 = vmatmul.mubr.bf16.gmra.mrb[0].mxu0 %v1141
        %v1198 = vpop.f32.mrb[0].mxu0
        %v1199 = vadd.f32 %v1022, %v1198
        %v1200 = vpop.f32.mrb[0].mxu0
        %v1201 = vadd.f32 %v1022, %v1200
        %v1202 = vpop.f32.mrb[0].mxu0
        %v1203 = vadd.f32 %v1027, %v1202
        %v1204 = vpop.f32.mrb[0].mxu0
        %v1205 = vadd.f32 %v1027, %v1204
        %1206 = vmatprep.mubr.bf16.mxu0 0
        %1207 = vmatmul.mubr.bf16.gmra.mrb[0].mxu0 %v1144
        %v1208 = vpop.f32.mrb[0].mxu0
        %v1209 = vadd.f32 %v1032, %v1208
        %v1210 = vpop.f32.mrb[0].mxu0
        %v1211 = vadd.f32 %v1032, %v1210
        %v1212 = vpop.f32.mrb[0].mxu0
        %v1213 = vadd.f32 %v1037, %v1212
        %v1214 = vpop.f32.mrb[0].mxu0
        %v1215 = vadd.f32 %v1037, %v1214
        %1216 = vmatprep.mubr.bf16.mxu0 0
        %1217 = vmatmul.mubr.bf16.gmra.mrb[0].mxu0 %v1147
        %v1218 = vpop.f32.mrb[0].mxu0
        %v1219 = vadd.f32 %v1042, %v1218
        %v1220 = vpop.f32.mrb[0].mxu0
        %v1221 = vadd.f32 %v1042, %v1220
        %v1222 = vpop.f32.mrb[0].mxu0
        %v1223 = vadd.f32 %v1047, %v1222
        %v1224 = vpop.f32.mrb[0].mxu0
        %v1225 = vadd.f32 %v1047, %v1224
        %1226 = vmatprep.mubr.bf16.mxu0 0
        %1227 = vmatmul.mubr.bf16.gmra.mrb[0].mxu0 %v1150
        %v1228 = vpop.f32.mrb[0].mxu0
        %v1229 = vadd.f32 %v1052, %v1228
        %v1230 = vpop.f32.mrb[0].mxu0
        %v1231 = vadd.f32 %v1052, %v1230
        %v1232 = vpop.f32.mrb[0].mxu0
        %v1233 = vadd.f32 %v1057, %v1232
        %v1234 = vpop.f32.mrb[0].mxu0
        %v1235 = vadd.f32 %v1057, %v1234
        %1236 = vmatprep.mubr.bf16.mxu0 0
        %1237 = vmatmul.mubr.bf16.gmra.mrb[0].mxu0 %v1153
        %v1238 = vpop.f32.mrb[0].mxu0
        %v1239 = vadd.f32 %v1062, %v1238
        %v1240 = vpop.f32.mrb[0].mxu0
        %v1241 = vadd.f32 %v1062, %v1240
        %v1242 = vpop.f32.mrb[0].mxu0
        %v1243 = vadd.f32 %v1067, %v1242
        %v1244 = vpop.f32.mrb[0].mxu0
        %v1245 = vadd.f32 %v1067, %v1244
        %1246 = vmatprep.mubr.bf16.mxu0 0
        %1247 = vmatmul.mubr.bf16.gmra.mrb[0].mxu0 %v1156
        %v1248 = vpop.f32.mrb[0].mxu0
        %v1249 = vadd.f32 %v1072, %v1248
        %v1250 = vpop.f32.mrb[0].mxu0
        %v1251 = vadd.f32 %v1072, %v1250
        %v1252 = vpop.f32.mrb[0].mxu0
        %v1253 = vadd.f32 %v1077, %v1252
        %v1254 = vpop.f32.mrb[0].mxu0
        %v1255 = vadd.f32 %v1077, %v1254
        %1256 = vmatprep.mubr.bf16.mxu0 0
        %1257 = vmatmul.mubr.bf16.gmra.mrb[0].mxu0 %v1159
        %v1258 = vpop.f32.mrb[0].mxu0
        %v1259 = vadd.f32 %v1082, %v1258
        %v1260 = vpop.f32.mrb[0].mxu0
        %v1261 = vadd.f32 %v1082, %v1260
        %v1262 = vpop.f32.mrb[0].mxu0
        %v1263 = vadd.f32 %v1087, %v1262
        %v1264 = vpop.f32.mrb[0].mxu0
        %v1265 = vadd.f32 %v1087, %v1264
        %1266 = vmatprep.mubr.bf16.mxu0 0
        %1267 = vmatmul.mubr.bf16.gmra.mrb[0].mxu0 %v1162
        %v1268 = vpop.f32.mrb[0].mxu0
        %v1269 = vadd.f32 %v1092, %v1268
        %v1270 = vpop.f32.mrb[0].mxu0
        %v1271 = vadd.f32 %v1092, %v1270
        %v1272 = vpop.f32.mrb[0].mxu0
        %v1273 = vadd.f32 %v1097, %v1272
        %v1274 = vpop.f32.mrb[0].mxu0
        %v1275 = vadd.f32 %v1097, %v1274
        %1276 = vdwg.mxu0
        %1277 = vmatprep.subr.bf16.mxu0 %v990
        %1278 = vmatpush1.bf16.msra.mxu0 %v989
        %1279 = vmatprep.subr.bf16.mxu0 %v994
        %1280 = vmatpush1.bf16.msra.mxu0 %v993
        %1281 = vmatprep.subr.bf16.mxu0 %v998
        %1282 = vmatpush1.bf16.msra.mxu0 %v997
        %1283 = vmatprep.subr.bf16.mxu0 %v1002
        %1284 = vmatpush1.bf16.msra.mxu0 %v1001
        %1285 = vmatprep.subr.bf16.mxu0 0
        %1286 = vmatpush1.bf16.msra.mxu0 0
        %1287 = vmatprep.subr.bf16.mxu0 0
        %1288 = vmatpush1.bf16.msra.mxu0 0
        %1289 = vmatprep.subr.bf16.mxu0 0
        %1290 = vmatpush1.bf16.msra.mxu0 0
        %1291 = vmatprep.subr.bf16.mxu0 0
        %1292 = vmatpush1.bf16.msra.mxu0 0
        %1293 = vmatprep.subr.bf16.mxu0 0
        %1294 = vmatpush1.bf16.msra.mxu0 0
        %1295 = vmatprep.subr.bf16.mxu0 0
        %1296 = vmatpush1.bf16.msra.mxu0 0
        %1297 = vmatprep.subr.bf16.mxu0 0
        %1298 = vmatpush1.bf16.msra.mxu0 0
        %1299 = vmatprep.subr.bf16.mxu0 0
        %1300 = vmatpush1.bf16.msra.mxu0 0
        %1301 = vmatprep.subr.bf16.mxu0 0
        %1302 = vmatpush1.bf16.msra.mxu0 0
        %1303 = vmatprep.subr.bf16.mxu0 0
        %1304 = vmatpush1.bf16.msra.mxu0 0
        %1305 = vmatprep.subr.bf16.mxu0 0
        %1306 = vmatpush1.bf16.msra.mxu0 0
        %1307 = vmatprep.subr.bf16.mxu0 0
        %1308 = vmatpush1.bf16.msra.mxu0 0
        %1309 = vmatprep.mubr.bf16.mxu0 0
        %1310 = vmatmul.mubr.bf16.gmra.mrb[0].mxu0 %v1141
        %v1311 = vpop.f32.mrb[0].mxu0
        %v1312 = vadd.f32 %v1022, %v1311
        %v1313 = vpop.f32.mrb[0].mxu0
        %v1314 = vadd.f32 %v1022, %v1313
        %v1315 = vpop.f32.mrb[0].mxu0
        %v1316 = vadd.f32 %v1027, %v1315
        %v1317 = vpop.f32.mrb[0].mxu0
        %v1318 = vadd.f32 %v1027, %v1317
        %1319 = vmatprep.mubr.bf16.mxu0 0
        %1320 = vmatmul.mubr.bf16.gmra.mrb[0].mxu0 %v1144
        %v1321 = vpop.f32.mrb[0].mxu0
        %v1322 = vadd.f32 %v1032, %v1321
        %v1323 = vpop.f32.mrb[0].mxu0
        %v1324 = vadd.f32 %v1032, %v1323
        %v1325 = vpop.f32.mrb[0].mxu0
        %v1326 = vadd.f32 %v1037, %v1325
        %v1327 = vpop.f32.mrb[0].mxu0
        %v1328 = vadd.f32 %v1037, %v1327
        %1329 = vmatprep.mubr.bf16.mxu0 0
        %1330 = vmatmul.mubr.bf16.gmra.mrb[0].mxu0 %v1147
        %v1331 = vpop.f32.mrb[0].mxu0
        %v1332 = vadd.f32 %v1042, %v1331
        %v1333 = vpop.f32.mrb[0].mxu0
        %v1334 = vadd.f32 %v1042, %v1333
        %v1335 = vpop.f32.mrb[0].mxu0
        %v1336 = vadd.f32 %v1047, %v1335
        %v1337 = vpop.f32.mrb[0].mxu0
        %v1338 = vadd.f32 %v1047, %v1337
        %1339 = vmatprep.mubr.bf16.mxu0 0
        %1340 = vmatmul.mubr.bf16.gmra.mrb[0].mxu0 %v1150
        %v1341 = vpop.f32.mrb[0].mxu0
        %v1342 = vadd.f32 %v1052, %v1341
        %v1343 = vpop.f32.mrb[0].mxu0
        %v1344 = vadd.f32 %v1052, %v1343
        %v1345 = vpop.f32.mrb[0].mxu0
        %v1346 = vadd.f32 %v1057, %v1345
        %v1347 = vpop.f32.mrb[0].mxu0
        %v1348 = vadd.f32 %v1057, %v1347
        %1349 = vmatprep.mubr.bf16.mxu0 0
        %1350 = vmatmul.mubr.bf16.gmra.mrb[0].mxu0 %v1153
        %v1351 = vpop.f32.mrb[0].mxu0
        %v1352 = vadd.f32 %v1062, %v1351
        %v1353 = vpop.f32.mrb[0].mxu0
        %v1354 = vadd.f32 %v1062, %v1353
        %v1355 = vpop.f32.mrb[0].mxu0
        %v1356 = vadd.f32 %v1067, %v1355
        %v1357 = vpop.f32.mrb[0].mxu0
        %v1358 = vadd.f32 %v1067, %v1357
        %1359 = vmatprep.mubr.bf16.mxu0 0
        %1360 = vmatmul.mubr.bf16.gmra.mrb[0].mxu0 %v1156
        %v1361 = vpop.f32.mrb[0].mxu0
        %v1362 = vadd.f32 %v1072, %v1361
        %v1363 = vpop.f32.mrb[0].mxu0
        %v1364 = vadd.f32 %v1072, %v1363
        %v1365 = vpop.f32.mrb[0].mxu0
        %v1366 = vadd.f32 %v1077, %v1365
        %v1367 = vpop.f32.mrb[0].mxu0
        %v1368 = vadd.f32 %v1077, %v1367
        %1369 = vmatprep.mubr.bf16.mxu0 0
        %1370 = vmatmul.mubr.bf16.gmra.mrb[0].mxu0 %v1159
        %v1371 = vpop.f32.mrb[0].mxu0
        %v1372 = vadd.f32 %v1082, %v1371
        %v1373 = vpop.f32.mrb[0].mxu0
        %v1374 = vadd.f32 %v1082, %v1373
        %v1375 = vpop.f32.mrb[0].mxu0
        %v1376 = vadd.f32 %v1087, %v1375
        %v1377 = vpop.f32.mrb[0].mxu0
        %v1378 = vadd.f32 %v1087, %v1377
        %1379 = vmatprep.mubr.bf16.mxu0 0
        %1380 = vmatmul.mubr.bf16.gmra.mrb[0].mxu0 %v1162
        %v1381 = vpop.f32.mrb[0].mxu0
        %v1382 = vadd.f32 %v1092, %v1381
        %v1383 = vpop.f32.mrb[0].mxu0
        %v1384 = vadd.f32 %v1092, %v1383
        %v1385 = vpop.f32.mrb[0].mxu0
        %v1386 = vadd.f32 %v1097, %v1385
        %v1387 = vpop.f32.mrb[0].mxu0
        %v1388 = vadd.f32 %v1097, %v1387
        %1389 = vdwg.mxu0
        %v1390 = vmax.f32 %v1199, 0.0
        %v1391 = vmax.f32 %v1201, 0.0
        %v1392 = vmax.f32 %v1312, 0.0
        %v1393 = vmax.f32 %v1314, 0.0
        %v1394 = vmax.f32 %v1203, 0.0
        %v1395 = vmax.f32 %v1205, 0.0
        %v1396 = vmax.f32 %v1316, 0.0
        %v1397 = vmax.f32 %v1318, 0.0
        %v1398 = vmax.f32 %v1209, 0.0
        %v1399 = vmax.f32 %v1211, 0.0
        %v1400 = vmax.f32 %v1322, 0.0
        %v1401 = vmax.f32 %v1324, 0.0
        %v1402 = vmax.f32 %v1213, 0.0
        %v1403 = vmax.f32 %v1215, 0.0
        %v1404 = vmax.f32 %v1326, 0.0
        %v1405 = vmax.f32 %v1328, 0.0
        %v1406 = vmax.f32 %v1219, 0.0
        %v1407 = vmax.f32 %v1221, 0.0
        %v1408 = vmax.f32 %v1332, 0.0
        %v1409 = vmax.f32 %v1334, 0.0
        %v1410 = vmax.f32 %v1223, 0.0
        %v1411 = vmax.f32 %v1225, 0.0
        %v1412 = vmax.f32 %v1336, 0.0
        %v1413 = vmax.f32 %v1338, 0.0
        %v1414 = vmax.f32 %v1229, 0.0
        %v1415 = vmax.f32 %v1231, 0.0
        %v1416 = vmax.f32 %v1342, 0.0
        %v1417 = vmax.f32 %v1344, 0.0
        %v1418 = vmax.f32 %v1233, 0.0
        %v1419 = vmax.f32 %v1235, 0.0
        %v1420 = vmax.f32 %v1346, 0.0
        %v1421 = vmax.f32 %v1348, 0.0
        %v1422 = vmax.f32 %v1239, 0.0
        %v1423 = vmax.f32 %v1241, 0.0
        %v1424 = vmax.f32 %v1352, 0.0
        %v1425 = vmax.f32 %v1354, 0.0
        %v1426 = vmax.f32 %v1243, 0.0
        %v1427 = vmax.f32 %v1245, 0.0
        %v1428 = vmax.f32 %v1356, 0.0
        %v1429 = vmax.f32 %v1358, 0.0
        %v1430 = vmax.f32 %v1249, 0.0
        %v1431 = vmax.f32 %v1251, 0.0
        %v1432 = vmax.f32 %v1362, 0.0
        %v1433 = vmax.f32 %v1364, 0.0
        %v1434 = vmax.f32 %v1253, 0.0
        %v1435 = vmax.f32 %v1255, 0.0
        %v1436 = vmax.f32 %v1366, 0.0
        %v1437 = vmax.f32 %v1368, 0.0
        %v1438 = vmax.f32 %v1259, 0.0
        %v1439 = vmax.f32 %v1261, 0.0
        %v1440 = vmax.f32 %v1372, 0.0
        %v1441 = vmax.f32 %v1374, 0.0
        %v1442 = vmax.f32 %v1263, 0.0
        %v1443 = vmax.f32 %v1265, 0.0
        %v1444 = vmax.f32 %v1376, 0.0
        %v1445 = vmax.f32 %v1378, 0.0
        %v1446 = vmax.f32 %v1269, 0.0
        %v1447 = vmax.f32 %v1271, 0.0
        %v1448 = vmax.f32 %v1382, 0.0
        %v1449 = vmax.f32 %v1384, 0.0
        %v1450 = vmax.f32 %v1273, 0.0
        %v1451 = vmax.f32 %v1275, 0.0
        %v1452 = vmax.f32 %v1386, 0.0
        %v1453 = vmax.f32 %v1388, 0.0
        %v1454 = vld [vmem:[#allocation9] sm:$0xf]
        %v1455 = vld [vmem:[#allocation9 + $0x4] sm:$0xf]
        %v1456 = vld [vmem:[#allocation9 + $0x8] sm:$0xf]
        %v1457 = vld [vmem:[#allocation9 + $0xc] sm:$0xf]
        %v1458 = vld [vmem:[#allocation9 + $0x10] sm:$0xf]
        %v1459 = vld [vmem:[#allocation9 + $0x14] sm:$0xf]
        %v1460 = vld [vmem:[#allocation9 + $0x18] sm:$0xf]
        %v1461 = vld [vmem:[#allocation9 + $0x1c] sm:$0xf]
        %v1462 = vld [vmem:[#allocation9 + $0x20] sm:$0xf]
        %v1463 = vld [vmem:[#allocation9 + $0x24] sm:$0xf]
        %v1464 = vld [vmem:[#allocation9 + $0x28] sm:$0xf]
        %v1465 = vld [vmem:[#allocation9 + $0x2c] sm:$0xf]
        %v1466 = vld [vmem:[#allocation9 + $0x30] sm:$0xf]
        %v1467 = vld [vmem:[#allocation9 + $0x34] sm:$0xf]
        %v1468 = vld [vmem:[#allocation9 + $0x38] sm:$0xf]
        %v1469 = vld [vmem:[#allocation9 + $0x3c] sm:$0xf]
        %v1470 = vld [vmem:[#allocation9 + $0x40] sm:$0xf]
        %v1471 = vld [vmem:[#allocation9 + $0x44] sm:$0xf]
        %v1472 = vld [vmem:[#allocation9 + $0x48] sm:$0xf]
        %v1473 = vld [vmem:[#allocation9 + $0x4c] sm:$0xf]
        %v1474 = vld [vmem:[#allocation9 + $0x50] sm:$0xf]
        %v1475 = vld [vmem:[#allocation9 + $0x54] sm:$0xf]
        %v1476 = vld [vmem:[#allocation9 + $0x58] sm:$0xf]
        %v1477 = vld [vmem:[#allocation9 + $0x5c] sm:$0xf]
        %v1478 = vld [vmem:[#allocation9 + $0x60] sm:$0xf]
        %v1479 = vld [vmem:[#allocation9 + $0x64] sm:$0xf]
        %v1480 = vld [vmem:[#allocation9 + $0x68] sm:$0xf]
        %v1481 = vld [vmem:[#allocation9 + $0x6c] sm:$0xf]
        %v1482 = vld [vmem:[#allocation9 + $0x70] sm:$0xf]
        %v1483 = vld [vmem:[#allocation9 + $0x74] sm:$0xf]
        %v1484 = vld [vmem:[#allocation9 + $0x78] sm:$0xf]
        %v1485 = vld [vmem:[#allocation9 + $0x7c] sm:$0xf]
        %v1486 = vpack.c.bf16 %v1394, %v1390
        %v1487 = vpack.c.bf16 %v1395, %v1391
        %v1488 = vpack.c.bf16 %v1396, %v1392
        %v1489 = vpack.c.bf16 %v1397, %v1393
        %v1490 = vpack.c.bf16 %v1402, %v1398
        %v1491 = vpack.c.bf16 %v1403, %v1399
        %v1492 = vpack.c.bf16 %v1404, %v1400
        %v1493 = vpack.c.bf16 %v1405, %v1401
        %v1494 = vpack.c.bf16 %v1410, %v1406
        %v1495 = vpack.c.bf16 %v1411, %v1407
        %v1496 = vpack.c.bf16 %v1412, %v1408
        %v1497 = vpack.c.bf16 %v1413, %v1409
        %v1498 = vpack.c.bf16 %v1418, %v1414
        %v1499 = vpack.c.bf16 %v1419, %v1415
        %v1500 = vpack.c.bf16 %v1420, %v1416
        %v1501 = vpack.c.bf16 %v1421, %v1417
        %v1502 = vpack.c.bf16 %v1426, %v1422
        %v1503 = vpack.c.bf16 %v1427, %v1423
        %v1504 = vpack.c.bf16 %v1428, %v1424
        %v1505 = vpack.c.bf16 %v1429, %v1425
        %v1506 = vpack.c.bf16 %v1434, %v1430
        %v1507 = vpack.c.bf16 %v1435, %v1431
        %v1508 = vpack.c.bf16 %v1436, %v1432
        %v1509 = vpack.c.bf16 %v1437, %v1433
        %v1510 = vpack.c.bf16 %v1442, %v1438
        %v1511 = vpack.c.bf16 %v1443, %v1439
        %v1512 = vpack.c.bf16 %v1444, %v1440
        %v1513 = vpack.c.bf16 %v1445, %v1441
        %v1514 = vpack.c.bf16 %v1450, %v1446
        %v1515 = vpack.c.bf16 %v1451, %v1447
        %v1516 = vpack.c.bf16 %v1452, %v1448
        %v1517 = vpack.c.bf16 %v1453, %v1449
        %v1518 = vld [vmem:[#allocation10] sm:$0xff]
        %v1519 = vld [vmem:[#allocation10 + $0x8] sm:$0xff]
        %v1520 = vld [vmem:[#allocation10 + $0x10] sm:$0xff]
        %v1521 = vld [vmem:[#allocation10 + $0x18] sm:$0xff]
        %v1522 = vld [vmem:[#allocation10 + $0x20] sm:$0xff]
        %v1523 = vld [vmem:[#allocation10 + $0x28] sm:$0xff]
        %v1524 = vld [vmem:[#allocation10 + $0x30] sm:$0xff]
        %v1525 = vld [vmem:[#allocation10 + $0x38] sm:$0xff]
        %v1526 = vld [vmem:[#allocation10 + $0x40] sm:$0xff]
        %v1527 = vld [vmem:[#allocation10 + $0x48] sm:$0xff]
        %v1528 = vld [vmem:[#allocation10 + $0x50] sm:$0xff]
        %v1529 = vld [vmem:[#allocation10 + $0x58] sm:$0xff]
        %v1530 = vld [vmem:[#allocation10 + $0x60] sm:$0xff]
        %v1531 = vld [vmem:[#allocation10 + $0x68] sm:$0xff]
        %v1532 = vld [vmem:[#allocation10 + $0x70] sm:$0xff]
        %v1533 = vld [vmem:[#allocation10 + $0x78] sm:$0xff]
        %v1534 = vld [vmem:[#allocation10 + $0x80] sm:$0xff]
        %v1535 = vld [vmem:[#allocation10 + $0x88] sm:$0xff]
        %v1536 = vld [vmem:[#allocation10 + $0x90] sm:$0xff]
        %v1537 = vld [vmem:[#allocation10 + $0x98] sm:$0xff]
        %v1538 = vld [vmem:[#allocation10 + $0xa0] sm:$0xff]
        %v1539 = vld [vmem:[#allocation10 + $0xa8] sm:$0xff]
        %v1540 = vld [vmem:[#allocation10 + $0xb0] sm:$0xff]
        %v1541 = vld [vmem:[#allocation10 + $0xb8] sm:$0xff]
        %v1542 = vld [vmem:[#allocation10 + $0xc0] sm:$0xff]
        %v1543 = vld [vmem:[#allocation10 + $0xc8] sm:$0xff]
        %v1544 = vld [vmem:[#allocation10 + $0xd0] sm:$0xff]
        %v1545 = vld [vmem:[#allocation10 + $0xd8] sm:$0xff]
        %v1546 = vld [vmem:[#allocation10 + $0xe0] sm:$0xff]
        %v1547 = vld [vmem:[#allocation10 + $0xe8] sm:$0xff]
        %v1548 = vld [vmem:[#allocation10 + $0xf0] sm:$0xff]
        %v1549 = vld [vmem:[#allocation10 + $0xf8] sm:$0xff]
        %1551 = vset.pattern.permute.xlu0 0
        %1552 = vperm.xlu0 %1551, %v1518
        %v1553 = vpop.permute.xlu0 %1552
        %1556 = vset.pattern.permute.xlu0 0
        %1557 = vperm.xlu0 %1556, %v1519
        %v1558 = vpop.permute.xlu0 %1557
        %1561 = vset.pattern.permute.xlu0 0
        %1562 = vperm.xlu0 %1561, %v1520
        %v1563 = vpop.permute.xlu0 %1562
        %1566 = vset.pattern.permute.xlu0 0
        %1567 = vperm.xlu0 %1566, %v1521
        %v1568 = vpop.permute.xlu0 %1567
        %1571 = vset.pattern.permute.xlu0 0
        %1572 = vperm.xlu0 %1571, %v1522
        %v1573 = vpop.permute.xlu0 %1572
        %1576 = vset.pattern.permute.xlu0 0
        %1577 = vperm.xlu0 %1576, %v1523
        %v1578 = vpop.permute.xlu0 %1577
        %1581 = vset.pattern.permute.xlu0 0
        %1582 = vperm.xlu0 %1581, %v1524
        %v1583 = vpop.permute.xlu0 %1582
        %1586 = vset.pattern.permute.xlu0 0
        %1587 = vperm.xlu0 %1586, %v1525
        %v1588 = vpop.permute.xlu0 %1587
        %1591 = vset.pattern.permute.xlu0 0
        %1592 = vperm.xlu0 %1591, %v1526
        %v1593 = vpop.permute.xlu0 %1592
        %1596 = vset.pattern.permute.xlu0 0
        %1597 = vperm.xlu0 %1596, %v1527
        %v1598 = vpop.permute.xlu0 %1597
        %1601 = vset.pattern.permute.xlu0 0
        %1602 = vperm.xlu0 %1601, %v1528
        %v1603 = vpop.permute.xlu0 %1602
        %1606 = vset.pattern.permute.xlu0 0
        %1607 = vperm.xlu0 %1606, %v1529
        %v1608 = vpop.permute.xlu0 %1607
        %1611 = vset.pattern.permute.xlu0 0
        %1612 = vperm.xlu0 %1611, %v1530
        %v1613 = vpop.permute.xlu0 %1612
        %1616 = vset.pattern.permute.xlu0 0
        %1617 = vperm.xlu0 %1616, %v1531
        %v1618 = vpop.permute.xlu0 %1617
        %1621 = vset.pattern.permute.xlu0 0
        %1622 = vperm.xlu0 %1621, %v1532
        %v1623 = vpop.permute.xlu0 %1622
        %1626 = vset.pattern.permute.xlu0 0
        %1627 = vperm.xlu0 %1626, %v1533
        %v1628 = vpop.permute.xlu0 %1627
        %1631 = vset.pattern.permute.xlu0 0
        %1632 = vperm.xlu0 %1631, %v1534
        %v1633 = vpop.permute.xlu0 %1632
        %1636 = vset.pattern.permute.xlu0 0
        %1637 = vperm.xlu0 %1636, %v1535
        %v1638 = vpop.permute.xlu0 %1637
        %1641 = vset.pattern.permute.xlu0 0
        %1642 = vperm.xlu0 %1641, %v1536
        %v1643 = vpop.permute.xlu0 %1642
        %1646 = vset.pattern.permute.xlu0 0
        %1647 = vperm.xlu0 %1646, %v1537
        %v1648 = vpop.permute.xlu0 %1647
        %1651 = vset.pattern.permute.xlu0 0
        %1652 = vperm.xlu0 %1651, %v1538
        %v1653 = vpop.permute.xlu0 %1652
        %1656 = vset.pattern.permute.xlu0 0
        %1657 = vperm.xlu0 %1656, %v1539
        %v1658 = vpop.permute.xlu0 %1657
        %1661 = vset.pattern.permute.xlu0 0
        %1662 = vperm.xlu0 %1661, %v1540
        %v1663 = vpop.permute.xlu0 %1662
        %1666 = vset.pattern.permute.xlu0 0
        %1667 = vperm.xlu0 %1666, %v1541
        %v1668 = vpop.permute.xlu0 %1667
        %1671 = vset.pattern.permute.xlu0 0
        %1672 = vperm.xlu0 %1671, %v1542
        %v1673 = vpop.permute.xlu0 %1672
        %1676 = vset.pattern.permute.xlu0 0
        %1677 = vperm.xlu0 %1676, %v1543
        %v1678 = vpop.permute.xlu0 %1677
        %1681 = vset.pattern.permute.xlu0 0
        %1682 = vperm.xlu0 %1681, %v1544
        %v1683 = vpop.permute.xlu0 %1682
        %1686 = vset.pattern.permute.xlu0 0
        %1687 = vperm.xlu0 %1686, %v1545
        %v1688 = vpop.permute.xlu0 %1687
        %1691 = vset.pattern.permute.xlu0 0
        %1692 = vperm.xlu0 %1691, %v1546
        %v1693 = vpop.permute.xlu0 %1692
        %1696 = vset.pattern.permute.xlu0 0
        %1697 = vperm.xlu0 %1696, %v1547
        %v1698 = vpop.permute.xlu0 %1697
        %1701 = vset.pattern.permute.xlu0 0
        %1702 = vperm.xlu0 %1701, %v1548
        %v1703 = vpop.permute.xlu0 %1702
        %1706 = vset.pattern.permute.xlu0 0
        %1707 = vperm.xlu0 %1706, %v1549
        %v1708 = vpop.permute.xlu0 %1707
        %v1742 = vunpack.c.l.b16 %v1454
        %v1743 = vunpack.c.l.b16 %v1455
        %v1744 = vunpack.c.l.b16 %v1456
        %v1745 = vunpack.c.l.b16 %v1457
        %v1746 = vunpack.c.l.b16 %v1458
        %v1747 = vunpack.c.l.b16 %v1459
        %v1748 = vunpack.c.l.b16 %v1460
        %v1749 = vunpack.c.l.b16 %v1461
        %v1750 = vunpack.c.l.b16 %v1462
        %v1751 = vunpack.c.l.b16 %v1463
        %v1752 = vunpack.c.l.b16 %v1464
        %v1753 = vunpack.c.l.b16 %v1465
        %v1754 = vunpack.c.l.b16 %v1466
        %v1755 = vunpack.c.l.b16 %v1467
        %v1756 = vunpack.c.l.b16 %v1468
        %v1757 = vunpack.c.l.b16 %v1469
        %v1758 = vunpack.c.l.b16 %v1470
        %v1759 = vunpack.c.l.b16 %v1471
        %v1760 = vunpack.c.l.b16 %v1472
        %v1761 = vunpack.c.l.b16 %v1473
        %v1762 = vunpack.c.l.b16 %v1474
        %v1763 = vunpack.c.l.b16 %v1475
        %v1764 = vunpack.c.l.b16 %v1476
        %v1765 = vunpack.c.l.b16 %v1477
        %v1766 = vunpack.c.l.b16 %v1478
        %v1767 = vunpack.c.l.b16 %v1479
        %v1768 = vunpack.c.l.b16 %v1480
        %v1769 = vunpack.c.l.b16 %v1481
        %v1770 = vunpack.c.l.b16 %v1482
        %v1771 = vunpack.c.l.b16 %v1483
        %v1772 = vunpack.c.l.b16 %v1484
        %v1773 = vunpack.c.l.b16 %v1485
        %v1774 = vpack.c.b16 %v1743, %v1742
        %v1775 = vpack.c.b16 %v1745, %v1744
        %v1776 = vpack.c.b16 %v1747, %v1746
        %v1777 = vpack.c.b16 %v1749, %v1748
        %v1778 = vpack.c.b16 %v1751, %v1750
        %v1779 = vpack.c.b16 %v1753, %v1752
        %v1780 = vpack.c.b16 %v1755, %v1754
        %v1781 = vpack.c.b16 %v1757, %v1756
        %v1782 = vpack.c.b16 %v1759, %v1758
        %v1783 = vpack.c.b16 %v1761, %v1760
        %v1784 = vpack.c.b16 %v1763, %v1762
        %v1785 = vpack.c.b16 %v1765, %v1764
        %v1786 = vpack.c.b16 %v1767, %v1766
        %v1787 = vpack.c.b16 %v1769, %v1768
        %v1788 = vpack.c.b16 %v1771, %v1770
        %v1789 = vpack.c.b16 %v1773, %v1772
        %1806 = vmatprep.subr.bf16.mxu0 %v1487
        %1807 = vmatpush1.bf16.msra.mxu0 %v1486
        %1808 = vmatprep.subr.bf16.mxu0 %v1491
        %1809 = vmatpush1.bf16.msra.mxu0 %v1490
        %1810 = vmatprep.subr.bf16.mxu0 %v1495
        %1811 = vmatpush1.bf16.msra.mxu0 %v1494
        %1812 = vmatprep.subr.bf16.mxu0 %v1499
        %1813 = vmatpush1.bf16.msra.mxu0 %v1498
        %1814 = vmatprep.subr.bf16.mxu0 %v1503
        %1815 = vmatpush1.bf16.msra.mxu0 %v1502
        %1816 = vmatprep.subr.bf16.mxu0 %v1507
        %1817 = vmatpush1.bf16.msra.mxu0 %v1506
        %1818 = vmatprep.subr.bf16.mxu0 %v1511
        %1819 = vmatpush1.bf16.msra.mxu0 %v1510
        %1820 = vmatprep.subr.bf16.mxu0 %v1515
        %1821 = vmatpush1.bf16.msra.mxu0 %v1514
        %1822 = vmatprep.subr.bf16.mxu0 0
        %1823 = vmatpush1.bf16.msra.mxu0 0
        %1824 = vmatprep.subr.bf16.mxu0 0
        %1825 = vmatpush1.bf16.msra.mxu0 0
        %1826 = vmatprep.subr.bf16.mxu0 0
        %1827 = vmatpush1.bf16.msra.mxu0 0
        %1828 = vmatprep.subr.bf16.mxu0 0
        %1829 = vmatpush1.bf16.msra.mxu0 0
        %1830 = vmatprep.subr.bf16.mxu0 0
        %1831 = vmatpush1.bf16.msra.mxu0 0
        %1832 = vmatprep.subr.bf16.mxu0 0
        %1833 = vmatpush1.bf16.msra.mxu0 0
        %1834 = vmatprep.subr.bf16.mxu0 0
        %1835 = vmatpush1.bf16.msra.mxu0 0
        %1836 = vmatprep.subr.bf16.mxu0 0
        %1837 = vmatpush1.bf16.msra.mxu0 0
        %1838 = vmatprep.mubr.bf16.mxu0 0
        %1839 = vmatmul.mubr.bf16.gmra.mrb[0].mxu0 %v1774
        %v1840 = vpop.f32.mrb[0].mxu0
        %v1841 = vadd.f32 %v1553, %v1840
        %v1842 = vpop.f32.mrb[0].mxu0
        %v1843 = vadd.f32 %v1553, %v1842
        %v1844 = vpop.f32.mrb[0].mxu0
        %v1845 = vadd.f32 %v1558, %v1844
        %v1846 = vpop.f32.mrb[0].mxu0
        %v1847 = vadd.f32 %v1558, %v1846
        %1848 = vmatprep.mubr.bf16.mxu0 0
        %1849 = vmatmul.mubr.bf16.gmra.mrb[0].mxu0 %v1775
        %v1850 = vpop.f32.mrb[0].mxu0
        %v1851 = vadd.f32 %v1563, %v1850
        %v1852 = vpop.f32.mrb[0].mxu0
        %v1853 = vadd.f32 %v1563, %v1852
        %v1854 = vpop.f32.mrb[0].mxu0
        %v1855 = vadd.f32 %v1568, %v1854
        %v1856 = vpop.f32.mrb[0].mxu0
        %v1857 = vadd.f32 %v1568, %v1856
        %1858 = vmatprep.mubr.bf16.mxu0 0
        %1859 = vmatmul.mubr.bf16.gmra.mrb[0].mxu0 %v1776
        %v1860 = vpop.f32.mrb[0].mxu0
        %v1861 = vadd.f32 %v1573, %v1860
        %v1862 = vpop.f32.mrb[0].mxu0
        %v1863 = vadd.f32 %v1573, %v1862
        %v1864 = vpop.f32.mrb[0].mxu0
        %v1865 = vadd.f32 %v1578, %v1864
        %v1866 = vpop.f32.mrb[0].mxu0
        %v1867 = vadd.f32 %v1578, %v1866
        %1868 = vmatprep.mubr.bf16.mxu0 0
        %1869 = vmatmul.mubr.bf16.gmra.mrb[0].mxu0 %v1777
        %v1870 = vpop.f32.mrb[0].mxu0
        %v1871 = vadd.f32 %v1583, %v1870
        %v1872 = vpop.f32.mrb[0].mxu0
        %v1873 = vadd.f32 %v1583, %v1872
        %v1874 = vpop.f32.mrb[0].mxu0
        %v1875 = vadd.f32 %v1588, %v1874
        %v1876 = vpop.f32.mrb[0].mxu0
        %v1877 = vadd.f32 %v1588, %v1876
        %1878 = vmatprep.mubr.bf16.mxu0 0
        %1879 = vmatmul.mubr.bf16.gmra.mrb[0].mxu0 %v1778
        %v1880 = vpop.f32.mrb[0].mxu0
        %v1881 = vadd.f32 %v1593, %v1880
        %v1882 = vpop.f32.mrb[0].mxu0
        %v1883 = vadd.f32 %v1593, %v1882
        %v1884 = vpop.f32.mrb[0].mxu0
        %v1885 = vadd.f32 %v1598, %v1884
        %v1886 = vpop.f32.mrb[0].mxu0
        %v1887 = vadd.f32 %v1598, %v1886
        %1888 = vmatprep.mubr.bf16.mxu0 0
        %1889 = vmatmul.mubr.bf16.gmra.mrb[0].mxu0 %v1779
        %v1890 = vpop.f32.mrb[0].mxu0
        %v1891 = vadd.f32 %v1603, %v1890
        %v1892 = vpop.f32.mrb[0].mxu0
        %v1893 = vadd.f32 %v1603, %v1892
        %v1894 = vpop.f32.mrb[0].mxu0
        %v1895 = vadd.f32 %v1608, %v1894
        %v1896 = vpop.f32.mrb[0].mxu0
        %v1897 = vadd.f32 %v1608, %v1896
        %1898 = vmatprep.mubr.bf16.mxu0 0
        %1899 = vmatmul.mubr.bf16.gmra.mrb[0].mxu0 %v1780
        %v1900 = vpop.f32.mrb[0].mxu0
        %v1901 = vadd.f32 %v1613, %v1900
        %v1902 = vpop.f32.mrb[0].mxu0
        %v1903 = vadd.f32 %v1613, %v1902
        %v1904 = vpop.f32.mrb[0].mxu0
        %v1905 = vadd.f32 %v1618, %v1904
        %v1906 = vpop.f32.mrb[0].mxu0
        %v1907 = vadd.f32 %v1618, %v1906
        %1908 = vmatprep.mubr.bf16.mxu0 0
        %1909 = vmatmul.mubr.bf16.gmra.mrb[0].mxu0 %v1781
        %v1910 = vpop.f32.mrb[0].mxu0
        %v1911 = vadd.f32 %v1623, %v1910
        %v1912 = vpop.f32.mrb[0].mxu0
        %v1913 = vadd.f32 %v1623, %v1912
        %v1914 = vpop.f32.mrb[0].mxu0
        %v1915 = vadd.f32 %v1628, %v1914
        %v1916 = vpop.f32.mrb[0].mxu0
        %v1917 = vadd.f32 %v1628, %v1916
        %1918 = vmatprep.mubr.bf16.mxu0 0
        %1919 = vmatmul.mubr.bf16.gmra.mrb[0].mxu0 %v1782
        %v1920 = vpop.f32.mrb[0].mxu0
        %v1921 = vadd.f32 %v1633, %v1920
        %v1922 = vpop.f32.mrb[0].mxu0
        %v1923 = vadd.f32 %v1633, %v1922
        %v1924 = vpop.f32.mrb[0].mxu0
        %v1925 = vadd.f32 %v1638, %v1924
        %v1926 = vpop.f32.mrb[0].mxu0
        %v1927 = vadd.f32 %v1638, %v1926
        %1928 = vmatprep.mubr.bf16.mxu0 0
        %1929 = vmatmul.mubr.bf16.gmra.mrb[0].mxu0 %v1783
        %v1930 = vpop.f32.mrb[0].mxu0
        %v1931 = vadd.f32 %v1643, %v1930
        %v1932 = vpop.f32.mrb[0].mxu0
        %v1933 = vadd.f32 %v1643, %v1932
        %v1934 = vpop.f32.mrb[0].mxu0
        %v1935 = vadd.f32 %v1648, %v1934
        %v1936 = vpop.f32.mrb[0].mxu0
        %v1937 = vadd.f32 %v1648, %v1936
        %1938 = vmatprep.mubr.bf16.mxu0 0
        %1939 = vmatmul.mubr.bf16.gmra.mrb[0].mxu0 %v1784
        %v1940 = vpop.f32.mrb[0].mxu0
        %v1941 = vadd.f32 %v1653, %v1940
        %v1942 = vpop.f32.mrb[0].mxu0
        %v1943 = vadd.f32 %v1653, %v1942
        %v1944 = vpop.f32.mrb[0].mxu0
        %v1945 = vadd.f32 %v1658, %v1944
        %v1946 = vpop.f32.mrb[0].mxu0
        %v1947 = vadd.f32 %v1658, %v1946
        %1948 = vmatprep.mubr.bf16.mxu0 0
        %1949 = vmatmul.mubr.bf16.gmra.mrb[0].mxu0 %v1785
        %v1950 = vpop.f32.mrb[0].mxu0
        %v1951 = vadd.f32 %v1663, %v1950
        %v1952 = vpop.f32.mrb[0].mxu0
        %v1953 = vadd.f32 %v1663, %v1952
        %v1954 = vpop.f32.mrb[0].mxu0
        %v1955 = vadd.f32 %v1668, %v1954
        %v1956 = vpop.f32.mrb[0].mxu0
        %v1957 = vadd.f32 %v1668, %v1956
        %1958 = vmatprep.mubr.bf16.mxu0 0
        %1959 = vmatmul.mubr.bf16.gmra.mrb[0].mxu0 %v1786
        %v1960 = vpop.f32.mrb[0].mxu0
        %v1961 = vadd.f32 %v1673, %v1960
        %v1962 = vpop.f32.mrb[0].mxu0
        %v1963 = vadd.f32 %v1673, %v1962
        %v1964 = vpop.f32.mrb[0].mxu0
        %v1965 = vadd.f32 %v1678, %v1964
        %v1966 = vpop.f32.mrb[0].mxu0
        %v1967 = vadd.f32 %v1678, %v1966
        %1968 = vmatprep.mubr.bf16.mxu0 0
        %1969 = vmatmul.mubr.bf16.gmra.mrb[0].mxu0 %v1787
        %v1970 = vpop.f32.mrb[0].mxu0
        %v1971 = vadd.f32 %v1683, %v1970
        %v1972 = vpop.f32.mrb[0].mxu0
        %v1973 = vadd.f32 %v1683, %v1972
        %v1974 = vpop.f32.mrb[0].mxu0
        %v1975 = vadd.f32 %v1688, %v1974
        %v1976 = vpop.f32.mrb[0].mxu0
        %v1977 = vadd.f32 %v1688, %v1976
        %1978 = vmatprep.mubr.bf16.mxu0 0
        %1979 = vmatmul.mubr.bf16.gmra.mrb[0].mxu0 %v1788
        %v1980 = vpop.f32.mrb[0].mxu0
        %v1981 = vadd.f32 %v1693, %v1980
        %v1982 = vpop.f32.mrb[0].mxu0
        %v1983 = vadd.f32 %v1693, %v1982
        %v1984 = vpop.f32.mrb[0].mxu0
        %v1985 = vadd.f32 %v1698, %v1984
        %v1986 = vpop.f32.mrb[0].mxu0
        %v1987 = vadd.f32 %v1698, %v1986
        %1988 = vmatprep.mubr.bf16.mxu0 0
        %1989 = vmatmul.mubr.bf16.gmra.mrb[0].mxu0 %v1789
        %v1990 = vpop.f32.mrb[0].mxu0
        %v1991 = vadd.f32 %v1703, %v1990
        %v1992 = vpop.f32.mrb[0].mxu0
        %v1993 = vadd.f32 %v1703, %v1992
        %v1994 = vpop.f32.mrb[0].mxu0
        %v1995 = vadd.f32 %v1708, %v1994
        %v1996 = vpop.f32.mrb[0].mxu0
        %v1997 = vadd.f32 %v1708, %v1996
        %1998 = vdwg.mxu0
        %1999 = vmatprep.subr.bf16.mxu0 %v1489
        %2000 = vmatpush1.bf16.msra.mxu0 %v1488
        %2001 = vmatprep.subr.bf16.mxu0 %v1493
        %2002 = vmatpush1.bf16.msra.mxu0 %v1492
        %2003 = vmatprep.subr.bf16.mxu0 %v1497
        %2004 = vmatpush1.bf16.msra.mxu0 %v1496
        %2005 = vmatprep.subr.bf16.mxu0 %v1501
        %2006 = vmatpush1.bf16.msra.mxu0 %v1500
        %2007 = vmatprep.subr.bf16.mxu0 %v1505
        %2008 = vmatpush1.bf16.msra.mxu0 %v1504
        %2009 = vmatprep.subr.bf16.mxu0 %v1509
        %2010 = vmatpush1.bf16.msra.mxu0 %v1508
        %2011 = vmatprep.subr.bf16.mxu0 %v1513
        %2012 = vmatpush1.bf16.msra.mxu0 %v1512
        %2013 = vmatprep.subr.bf16.mxu0 %v1517
        %2014 = vmatpush1.bf16.msra.mxu0 %v1516
        %2015 = vmatprep.subr.bf16.mxu0 0
        %2016 = vmatpush1.bf16.msra.mxu0 0
        %2017 = vmatprep.subr.bf16.mxu0 0
        %2018 = vmatpush1.bf16.msra.mxu0 0
        %2019 = vmatprep.subr.bf16.mxu0 0
        %2020 = vmatpush1.bf16.msra.mxu0 0
        %2021 = vmatprep.subr.bf16.mxu0 0
        %2022 = vmatpush1.bf16.msra.mxu0 0
        %2023 = vmatprep.subr.bf16.mxu0 0
        %2024 = vmatpush1.bf16.msra.mxu0 0
        %2025 = vmatprep.subr.bf16.mxu0 0
        %2026 = vmatpush1.bf16.msra.mxu0 0
        %2027 = vmatprep.subr.bf16.mxu0 0
        %2028 = vmatpush1.bf16.msra.mxu0 0
        %2029 = vmatprep.subr.bf16.mxu0 0
        %2030 = vmatpush1.bf16.msra.mxu0 0
        %2031 = vmatprep.mubr.bf16.mxu0 0
        %2032 = vmatmul.mubr.bf16.gmra.mrb[0].mxu0 %v1774
        %v2033 = vpop.f32.mrb[0].mxu0
        %v2034 = vadd.f32 %v1553, %v2033
        %v2035 = vpop.f32.mrb[0].mxu0
        %v2036 = vadd.f32 %v1553, %v2035
        %v2037 = vpop.f32.mrb[0].mxu0
        %v2038 = vadd.f32 %v1558, %v2037
        %v2039 = vpop.f32.mrb[0].mxu0
        %v2040 = vadd.f32 %v1558, %v2039
        %2041 = vmatprep.mubr.bf16.mxu0 0
        %2042 = vmatmul.mubr.bf16.gmra.mrb[0].mxu0 %v1775
        %v2043 = vpop.f32.mrb[0].mxu0
        %v2044 = vadd.f32 %v1563, %v2043
        %v2045 = vpop.f32.mrb[0].mxu0
        %v2046 = vadd.f32 %v1563, %v2045
        %v2047 = vpop.f32.mrb[0].mxu0
        %v2048 = vadd.f32 %v1568, %v2047
        %v2049 = vpop.f32.mrb[0].mxu0
        %v2050 = vadd.f32 %v1568, %v2049
        %2051 = vmatprep.mubr.bf16.mxu0 0
        %2052 = vmatmul.mubr.bf16.gmra.mrb[0].mxu0 %v1776
        %v2053 = vpop.f32.mrb[0].mxu0
        %v2054 = vadd.f32 %v1573, %v2053
        %v2055 = vpop.f32.mrb[0].mxu0
        %v2056 = vadd.f32 %v1573, %v2055
        %v2057 = vpop.f32.mrb[0].mxu0
        %v2058 = vadd.f32 %v1578, %v2057
        %v2059 = vpop.f32.mrb[0].mxu0
        %v2060 = vadd.f32 %v1578, %v2059
        %2061 = vmatprep.mubr.bf16.mxu0 0
        %2062 = vmatmul.mubr.bf16.gmra.mrb[0].mxu0 %v1777
        %v2063 = vpop.f32.mrb[0].mxu0
        %v2064 = vadd.f32 %v1583, %v2063
        %v2065 = vpop.f32.mrb[0].mxu0
        %v2066 = vadd.f32 %v1583, %v2065
        %v2067 = vpop.f32.mrb[0].mxu0
        %v2068 = vadd.f32 %v1588, %v2067
        %v2069 = vpop.f32.mrb[0].mxu0
        %v2070 = vadd.f32 %v1588, %v2069
        %2071 = vmatprep.mubr.bf16.mxu0 0
        %2072 = vmatmul.mubr.bf16.gmra.mrb[0].mxu0 %v1778
        %v2073 = vpop.f32.mrb[0].mxu0
        %v2074 = vadd.f32 %v1593, %v2073
        %v2075 = vpop.f32.mrb[0].mxu0
        %v2076 = vadd.f32 %v1593, %v2075
        %v2077 = vpop.f32.mrb[0].mxu0
        %v2078 = vadd.f32 %v1598, %v2077
        %v2079 = vpop.f32.mrb[0].mxu0
        %v2080 = vadd.f32 %v1598, %v2079
        %2081 = vmatprep.mubr.bf16.mxu0 0
        %2082 = vmatmul.mubr.bf16.gmra.mrb[0].mxu0 %v1779
        %v2083 = vpop.f32.mrb[0].mxu0
        %v2084 = vadd.f32 %v1603, %v2083
        %v2085 = vpop.f32.mrb[0].mxu0
        %v2086 = vadd.f32 %v1603, %v2085
        %v2087 = vpop.f32.mrb[0].mxu0
        %v2088 = vadd.f32 %v1608, %v2087
        %v2089 = vpop.f32.mrb[0].mxu0
        %v2090 = vadd.f32 %v1608, %v2089
        %2091 = vmatprep.mubr.bf16.mxu0 0
        %2092 = vmatmul.mubr.bf16.gmra.mrb[0].mxu0 %v1780
        %v2093 = vpop.f32.mrb[0].mxu0
        %v2094 = vadd.f32 %v1613, %v2093
        %v2095 = vpop.f32.mrb[0].mxu0
        %v2096 = vadd.f32 %v1613, %v2095
        %v2097 = vpop.f32.mrb[0].mxu0
        %v2098 = vadd.f32 %v1618, %v2097
        %v2099 = vpop.f32.mrb[0].mxu0
        %v2100 = vadd.f32 %v1618, %v2099
        %2101 = vmatprep.mubr.bf16.mxu0 0
        %2102 = vmatmul.mubr.bf16.gmra.mrb[0].mxu0 %v1781
        %v2103 = vpop.f32.mrb[0].mxu0
        %v2104 = vadd.f32 %v1623, %v2103
        %v2105 = vpop.f32.mrb[0].mxu0
        %v2106 = vadd.f32 %v1623, %v2105
        %v2107 = vpop.f32.mrb[0].mxu0
        %v2108 = vadd.f32 %v1628, %v2107
        %v2109 = vpop.f32.mrb[0].mxu0
        %v2110 = vadd.f32 %v1628, %v2109
        %2111 = vmatprep.mubr.bf16.mxu0 0
        %2112 = vmatmul.mubr.bf16.gmra.mrb[0].mxu0 %v1782
        %v2113 = vpop.f32.mrb[0].mxu0
        %v2114 = vadd.f32 %v1633, %v2113
        %v2115 = vpop.f32.mrb[0].mxu0
        %v2116 = vadd.f32 %v1633, %v2115
        %v2117 = vpop.f32.mrb[0].mxu0
        %v2118 = vadd.f32 %v1638, %v2117
        %v2119 = vpop.f32.mrb[0].mxu0
        %v2120 = vadd.f32 %v1638, %v2119
        %2121 = vmatprep.mubr.bf16.mxu0 0
        %2122 = vmatmul.mubr.bf16.gmra.mrb[0].mxu0 %v1783
        %v2123 = vpop.f32.mrb[0].mxu0
        %v2124 = vadd.f32 %v1643, %v2123
        %v2125 = vpop.f32.mrb[0].mxu0
        %v2126 = vadd.f32 %v1643, %v2125
        %v2127 = vpop.f32.mrb[0].mxu0
        %v2128 = vadd.f32 %v1648, %v2127
        %v2129 = vpop.f32.mrb[0].mxu0
        %v2130 = vadd.f32 %v1648, %v2129
        %2131 = vmatprep.mubr.bf16.mxu0 0
        %2132 = vmatmul.mubr.bf16.gmra.mrb[0].mxu0 %v1784
        %v2133 = vpop.f32.mrb[0].mxu0
        %v2134 = vadd.f32 %v1653, %v2133
        %v2135 = vpop.f32.mrb[0].mxu0
        %v2136 = vadd.f32 %v1653, %v2135
        %v2137 = vpop.f32.mrb[0].mxu0
        %v2138 = vadd.f32 %v1658, %v2137
        %v2139 = vpop.f32.mrb[0].mxu0
        %v2140 = vadd.f32 %v1658, %v2139
        %2141 = vmatprep.mubr.bf16.mxu0 0
        %2142 = vmatmul.mubr.bf16.gmra.mrb[0].mxu0 %v1785
        %v2143 = vpop.f32.mrb[0].mxu0
        %v2144 = vadd.f32 %v1663, %v2143
        %v2145 = vpop.f32.mrb[0].mxu0
        %v2146 = vadd.f32 %v1663, %v2145
        %v2147 = vpop.f32.mrb[0].mxu0
        %v2148 = vadd.f32 %v1668, %v2147
        %v2149 = vpop.f32.mrb[0].mxu0
        %v2150 = vadd.f32 %v1668, %v2149
        %2151 = vmatprep.mubr.bf16.mxu0 0
        %2152 = vmatmul.mubr.bf16.gmra.mrb[0].mxu0 %v1786
        %v2153 = vpop.f32.mrb[0].mxu0
        %v2154 = vadd.f32 %v1673, %v2153
        %v2155 = vpop.f32.mrb[0].mxu0
        %v2156 = vadd.f32 %v1673, %v2155
        %v2157 = vpop.f32.mrb[0].mxu0
        %v2158 = vadd.f32 %v1678, %v2157
        %v2159 = vpop.f32.mrb[0].mxu0
        %v2160 = vadd.f32 %v1678, %v2159
        %2161 = vmatprep.mubr.bf16.mxu0 0
        %2162 = vmatmul.mubr.bf16.gmra.mrb[0].mxu0 %v1787
        %v2163 = vpop.f32.mrb[0].mxu0
        %v2164 = vadd.f32 %v1683, %v2163
        %v2165 = vpop.f32.mrb[0].mxu0
        %v2166 = vadd.f32 %v1683, %v2165
        %v2167 = vpop.f32.mrb[0].mxu0
        %v2168 = vadd.f32 %v1688, %v2167
        %v2169 = vpop.f32.mrb[0].mxu0
        %v2170 = vadd.f32 %v1688, %v2169
        %2171 = vmatprep.mubr.bf16.mxu0 0
        %2172 = vmatmul.mubr.bf16.gmra.mrb[0].mxu0 %v1788
        %v2173 = vpop.f32.mrb[0].mxu0
        %v2174 = vadd.f32 %v1693, %v2173
        %v2175 = vpop.f32.mrb[0].mxu0
        %v2176 = vadd.f32 %v1693, %v2175
        %v2177 = vpop.f32.mrb[0].mxu0
        %v2178 = vadd.f32 %v1698, %v2177
        %v2179 = vpop.f32.mrb[0].mxu0
        %v2180 = vadd.f32 %v1698, %v2179
        %2181 = vmatprep.mubr.bf16.mxu0 0
        %2182 = vmatmul.mubr.bf16.gmra.mrb[0].mxu0 %v1789
        %v2183 = vpop.f32.mrb[0].mxu0
        %v2184 = vadd.f32 %v1703, %v2183
        %v2185 = vpop.f32.mrb[0].mxu0
        %v2186 = vadd.f32 %v1703, %v2185
        %v2187 = vpop.f32.mrb[0].mxu0
        %v2188 = vadd.f32 %v1708, %v2187
        %v2189 = vpop.f32.mrb[0].mxu0
        %v2190 = vadd.f32 %v1708, %v2189
        %2191 = vdwg.mxu0
        %v2192 = vmax.f32 %v1841, 0.0
        %v2193 = vmax.f32 %v1843, 0.0
        %v2194 = vmax.f32 %v2034, 0.0
        %v2195 = vmax.f32 %v2036, 0.0
        %v2196 = vmax.f32 %v1845, 0.0
        %v2197 = vmax.f32 %v1847, 0.0
        %v2198 = vmax.f32 %v2038, 0.0
        %v2199 = vmax.f32 %v2040, 0.0
        %v2200 = vmax.f32 %v1851, 0.0
        %v2201 = vmax.f32 %v1853, 0.0
        %v2202 = vmax.f32 %v2044, 0.0
        %v2203 = vmax.f32 %v2046, 0.0
        %v2204 = vmax.f32 %v1855, 0.0
        %v2205 = vmax.f32 %v1857, 0.0
        %v2206 = vmax.f32 %v2048, 0.0
        %v2207 = vmax.f32 %v2050, 0.0
        %v2208 = vmax.f32 %v1861, 0.0
        %v2209 = vmax.f32 %v1863, 0.0
        %v2210 = vmax.f32 %v2054, 0.0
        %v2211 = vmax.f32 %v2056, 0.0
        %v2212 = vmax.f32 %v1865, 0.0
        %v2213 = vmax.f32 %v1867, 0.0
        %v2214 = vmax.f32 %v2058, 0.0
        %v2215 = vmax.f32 %v2060, 0.0
        %v2216 = vmax.f32 %v1871, 0.0
        %v2217 = vmax.f32 %v1873, 0.0
        %v2218 = vmax.f32 %v2064, 0.0
        %v2219 = vmax.f32 %v2066, 0.0
        %v2220 = vmax.f32 %v1875, 0.0
        %v2221 = vmax.f32 %v1877, 0.0
        %v2222 = vmax.f32 %v2068, 0.0
        %v2223 = vmax.f32 %v2070, 0.0
        %v2224 = vmax.f32 %v1881, 0.0
        %v2225 = vmax.f32 %v1883, 0.0
        %v2226 = vmax.f32 %v2074, 0.0
        %v2227 = vmax.f32 %v2076, 0.0
        %v2228 = vmax.f32 %v1885, 0.0
        %v2229 = vmax.f32 %v1887, 0.0
        %v2230 = vmax.f32 %v2078, 0.0
        %v2231 = vmax.f32 %v2080, 0.0
        %v2232 = vmax.f32 %v1891, 0.0
        %v2233 = vmax.f32 %v1893, 0.0
        %v2234 = vmax.f32 %v2084, 0.0
        %v2235 = vmax.f32 %v2086, 0.0
        %v2236 = vmax.f32 %v1895, 0.0
        %v2237 = vmax.f32 %v1897, 0.0
        %v2238 = vmax.f32 %v2088, 0.0
        %v2239 = vmax.f32 %v2090, 0.0
        %v2240 = vmax.f32 %v1901, 0.0
        %v2241 = vmax.f32 %v1903, 0.0
        %v2242 = vmax.f32 %v2094, 0.0
        %v2243 = vmax.f32 %v2096, 0.0
        %v2244 = vmax.f32 %v1905, 0.0
        %v2245 = vmax.f32 %v1907, 0.0
        %v2246 = vmax.f32 %v2098, 0.0
        %v2247 = vmax.f32 %v2100, 0.0
        %v2248 = vmax.f32 %v1911, 0.0
        %v2249 = vmax.f32 %v1913, 0.0
        %v2250 = vmax.f32 %v2104, 0.0
        %v2251 = vmax.f32 %v2106, 0.0
        %v2252 = vmax.f32 %v1915, 0.0
        %v2253 = vmax.f32 %v1917, 0.0
        %v2254 = vmax.f32 %v2108, 0.0
        %v2255 = vmax.f32 %v2110, 0.0
        %v2256 = vmax.f32 %v1921, 0.0
        %v2257 = vmax.f32 %v1923, 0.0
        %v2258 = vmax.f32 %v2114, 0.0
        %v2259 = vmax.f32 %v2116, 0.0
        %v2260 = vmax.f32 %v1925, 0.0
        %v2261 = vmax.f32 %v1927, 0.0
        %v2262 = vmax.f32 %v2118, 0.0
        %v2263 = vmax.f32 %v2120, 0.0
        %v2264 = vmax.f32 %v1931, 0.0
        %v2265 = vmax.f32 %v1933, 0.0
        %v2266 = vmax.f32 %v2124, 0.0
        %v2267 = vmax.f32 %v2126, 0.0
        %v2268 = vmax.f32 %v1935, 0.0
        %v2269 = vmax.f32 %v1937, 0.0
        %v2270 = vmax.f32 %v2128, 0.0
        %v2271 = vmax.f32 %v2130, 0.0
        %v2272 = vmax.f32 %v1941, 0.0
        %v2273 = vmax.f32 %v1943, 0.0
        %v2274 = vmax.f32 %v2134, 0.0
        %v2275 = vmax.f32 %v2136, 0.0
        %v2276 = vmax.f32 %v1945, 0.0
        %v2277 = vmax.f32 %v1947, 0.0
        %v2278 = vmax.f32 %v2138, 0.0
        %v2279 = vmax.f32 %v2140, 0.0
        %v2280 = vmax.f32 %v1951, 0.0
        %v2281 = vmax.f32 %v1953, 0.0
        %v2282 = vmax.f32 %v2144, 0.0
        %v2283 = vmax.f32 %v2146, 0.0
        %v2284 = vmax.f32 %v1955, 0.0
        %v2285 = vmax.f32 %v1957, 0.0
        %v2286 = vmax.f32 %v2148, 0.0
        %v2287 = vmax.f32 %v2150, 0.0
        %v2288 = vmax.f32 %v1961, 0.0
        %v2289 = vmax.f32 %v1963, 0.0
        %v2290 = vmax.f32 %v2154, 0.0
        %v2291 = vmax.f32 %v2156, 0.0
        %v2292 = vmax.f32 %v1965, 0.0
        %v2293 = vmax.f32 %v1967, 0.0
        %v2294 = vmax.f32 %v2158, 0.0
        %v2295 = vmax.f32 %v2160, 0.0
        %v2296 = vmax.f32 %v1971, 0.0
        %v2297 = vmax.f32 %v1973, 0.0
        %v2298 = vmax.f32 %v2164, 0.0
        %v2299 = vmax.f32 %v2166, 0.0
        %v2300 = vmax.f32 %v1975, 0.0
        %v2301 = vmax.f32 %v1977, 0.0
        %v2302 = vmax.f32 %v2168, 0.0
        %v2303 = vmax.f32 %v2170, 0.0
        %v2304 = vmax.f32 %v1981, 0.0
        %v2305 = vmax.f32 %v1983, 0.0
        %v2306 = vmax.f32 %v2174, 0.0
        %v2307 = vmax.f32 %v2176, 0.0
        %v2308 = vmax.f32 %v1985, 0.0
        %v2309 = vmax.f32 %v1987, 0.0
        %v2310 = vmax.f32 %v2178, 0.0
        %v2311 = vmax.f32 %v2180, 0.0
        %v2312 = vmax.f32 %v1991, 0.0
        %v2313 = vmax.f32 %v1993, 0.0
        %v2314 = vmax.f32 %v2184, 0.0
        %v2315 = vmax.f32 %v2186, 0.0
        %v2316 = vmax.f32 %v1995, 0.0
        %v2317 = vmax.f32 %v1997, 0.0
        %v2318 = vmax.f32 %v2188, 0.0
        %v2319 = vmax.f32 %v2190, 0.0
        %v2320 = vld [vmem:[%s7] sm:$0xff]
        %v2321 = vld [vmem:[%s7 + $0x8] sm:$0xff]
        %v2322 = vld [vmem:[%s7 + $0x10] sm:$0xff]
        %v2323 = vld [vmem:[%s7 + $0x18] sm:$0xff]
        %v2324 = vld [vmem:[%s7 + $0x20] sm:$0xff]
        %v2325 = vld [vmem:[%s7 + $0x28] sm:$0xff]
        %v2326 = vld [vmem:[%s7 + $0x30] sm:$0xff]
        %v2327 = vld [vmem:[%s7 + $0x38] sm:$0xff]
        %v2328 = vld [vmem:[%s7 + $0x40] sm:$0xff]
        %v2329 = vld [vmem:[%s7 + $0x48] sm:$0xff]
        %v2330 = vld [vmem:[%s7 + $0x50] sm:$0xff]
        %v2331 = vld [vmem:[%s7 + $0x58] sm:$0xff]
        %v2332 = vld [vmem:[%s7 + $0x60] sm:$0xff]
        %v2333 = vld [vmem:[%s7 + $0x68] sm:$0xff]
        %v2334 = vld [vmem:[%s7 + $0x70] sm:$0xff]
        %v2335 = vld [vmem:[%s7 + $0x78] sm:$0xff]
        %v2336 = vld [vmem:[%s7 + $0x80] sm:$0xff]
        %v2337 = vld [vmem:[%s7 + $0x88] sm:$0xff]
        %v2338 = vld [vmem:[%s7 + $0x90] sm:$0xff]
        %v2339 = vld [vmem:[%s7 + $0x98] sm:$0xff]
        %v2340 = vld [vmem:[%s7 + $0xa0] sm:$0xff]
        %v2341 = vld [vmem:[%s7 + $0xa8] sm:$0xff]
        %v2342 = vld [vmem:[%s7 + $0xb0] sm:$0xff]
        %v2343 = vld [vmem:[%s7 + $0xb8] sm:$0xff]
        %v2344 = vld [vmem:[%s7 + $0xc0] sm:$0xff]
        %v2345 = vld [vmem:[%s7 + $0xc8] sm:$0xff]
        %v2346 = vld [vmem:[%s7 + $0xd0] sm:$0xff]
        %v2347 = vld [vmem:[%s7 + $0xd8] sm:$0xff]
        %v2348 = vld [vmem:[%s7 + $0xe0] sm:$0xff]
        %v2349 = vld [vmem:[%s7 + $0xe8] sm:$0xff]
        %v2350 = vld [vmem:[%s7 + $0xf0] sm:$0xff]
        %v2351 = vld [vmem:[%s7 + $0xf8] sm:$0xff]
        %v2352 = vld [vmem:[%s7 + $0x100] sm:$0xff]
        %v2353 = vld [vmem:[%s7 + $0x108] sm:$0xff]
        %v2354 = vld [vmem:[%s7 + $0x110] sm:$0xff]
        %v2355 = vld [vmem:[%s7 + $0x118] sm:$0xff]
        %v2356 = vld [vmem:[%s7 + $0x120] sm:$0xff]
        %v2357 = vld [vmem:[%s7 + $0x128] sm:$0xff]
        %v2358 = vld [vmem:[%s7 + $0x130] sm:$0xff]
        %v2359 = vld [vmem:[%s7 + $0x138] sm:$0xff]
        %v2360 = vld [vmem:[%s7 + $0x140] sm:$0xff]
        %v2361 = vld [vmem:[%s7 + $0x148] sm:$0xff]
        %v2362 = vld [vmem:[%s7 + $0x150] sm:$0xff]
        %v2363 = vld [vmem:[%s7 + $0x158] sm:$0xff]
        %v2364 = vld [vmem:[%s7 + $0x160] sm:$0xff]
        %v2365 = vld [vmem:[%s7 + $0x168] sm:$0xff]
        %v2366 = vld [vmem:[%s7 + $0x170] sm:$0xff]
        %v2367 = vld [vmem:[%s7 + $0x178] sm:$0xff]
        %v2368 = vld [vmem:[%s7 + $0x180] sm:$0xff]
        %v2369 = vld [vmem:[%s7 + $0x188] sm:$0xff]
        %v2370 = vld [vmem:[%s7 + $0x190] sm:$0xff]
        %v2371 = vld [vmem:[%s7 + $0x198] sm:$0xff]
        %v2372 = vld [vmem:[%s7 + $0x1a0] sm:$0xff]
        %v2373 = vld [vmem:[%s7 + $0x1a8] sm:$0xff]
        %v2374 = vld [vmem:[%s7 + $0x1b0] sm:$0xff]
        %v2375 = vld [vmem:[%s7 + $0x1b8] sm:$0xff]
        %v2376 = vld [vmem:[%s7 + $0x1c0] sm:$0xff]
        %v2377 = vld [vmem:[%s7 + $0x1c8] sm:$0xff]
        %v2378 = vld [vmem:[%s7 + $0x1d0] sm:$0xff]
        %v2379 = vld [vmem:[%s7 + $0x1d8] sm:$0xff]
        %v2380 = vld [vmem:[%s7 + $0x1e0] sm:$0xff]
        %v2381 = vld [vmem:[%s7 + $0x1e8] sm:$0xff]
        %v2382 = vld [vmem:[%s7 + $0x1f0] sm:$0xff]
        %v2383 = vld [vmem:[%s7 + $0x1f8] sm:$0xff]
        %v2384 = vpack.c.bf16 %v2196, %v2192
        %v2385 = vpack.c.bf16 %v2197, %v2193
        %v2386 = vpack.c.bf16 %v2198, %v2194
        %v2387 = vpack.c.bf16 %v2199, %v2195
        %v2388 = vpack.c.bf16 %v2204, %v2200
        %v2389 = vpack.c.bf16 %v2205, %v2201
        %v2390 = vpack.c.bf16 %v2206, %v2202
        %v2391 = vpack.c.bf16 %v2207, %v2203
        %v2392 = vpack.c.bf16 %v2212, %v2208
        %v2393 = vpack.c.bf16 %v2213, %v2209
        %v2394 = vpack.c.bf16 %v2214, %v2210
        %v2395 = vpack.c.bf16 %v2215, %v2211
        %v2396 = vpack.c.bf16 %v2220, %v2216
        %v2397 = vpack.c.bf16 %v2221, %v2217
        %v2398 = vpack.c.bf16 %v2222, %v2218
        %v2399 = vpack.c.bf16 %v2223, %v2219
        %v2400 = vpack.c.bf16 %v2228, %v2224
        %v2401 = vpack.c.bf16 %v2229, %v2225
        %v2402 = vpack.c.bf16 %v2230, %v2226
        %v2403 = vpack.c.bf16 %v2231, %v2227
        %v2404 = vpack.c.bf16 %v2236, %v2232
        %v2405 = vpack.c.bf16 %v2237, %v2233
        %v2406 = vpack.c.bf16 %v2238, %v2234
        %v2407 = vpack.c.bf16 %v2239, %v2235
        %v2408 = vpack.c.bf16 %v2244, %v2240
        %v2409 = vpack.c.bf16 %v2245, %v2241
        %v2410 = vpack.c.bf16 %v2246, %v2242
        %v2411 = vpack.c.bf16 %v2247, %v2243
        %v2412 = vpack.c.bf16 %v2252, %v2248
        %v2413 = vpack.c.bf16 %v2253, %v2249
        %v2414 = vpack.c.bf16 %v2254, %v2250
        %v2415 = vpack.c.bf16 %v2255, %v2251
        %v2416 = vpack.c.bf16 %v2260, %v2256
        %v2417 = vpack.c.bf16 %v2261, %v2257
        %v2418 = vpack.c.bf16 %v2262, %v2258
        %v2419 = vpack.c.bf16 %v2263, %v2259
        %v2420 = vpack.c.bf16 %v2268, %v2264
        %v2421 = vpack.c.bf16 %v2269, %v2265
        %v2422 = vpack.c.bf16 %v2270, %v2266
        %v2423 = vpack.c.bf16 %v2271, %v2267
        %v2424 = vpack.c.bf16 %v2276, %v2272
        %v2425 = vpack.c.bf16 %v2277, %v2273
        %v2426 = vpack.c.bf16 %v2278, %v2274
        %v2427 = vpack.c.bf16 %v2279, %v2275
        %v2428 = vpack.c.bf16 %v2284, %v2280
        %v2429 = vpack.c.bf16 %v2285, %v2281
        %v2430 = vpack.c.bf16 %v2286, %v2282
        %v2431 = vpack.c.bf16 %v2287, %v2283
        %v2432 = vpack.c.bf16 %v2292, %v2288
        %v2433 = vpack.c.bf16 %v2293, %v2289
        %v2434 = vpack.c.bf16 %v2294, %v2290
        %v2435 = vpack.c.bf16 %v2295, %v2291
        %v2436 = vpack.c.bf16 %v2300, %v2296
        %v2437 = vpack.c.bf16 %v2301, %v2297
        %v2438 = vpack.c.bf16 %v2302, %v2298
        %v2439 = vpack.c.bf16 %v2303, %v2299
        %v2440 = vpack.c.bf16 %v2308, %v2304
        %v2441 = vpack.c.bf16 %v2309, %v2305
        %v2442 = vpack.c.bf16 %v2310, %v2306
        %v2443 = vpack.c.bf16 %v2311, %v2307
        %v2444 = vpack.c.bf16 %v2316, %v2312
        %v2445 = vpack.c.bf16 %v2317, %v2313
        %v2446 = vpack.c.bf16 %v2318, %v2314
        %v2447 = vpack.c.bf16 %v2319, %v2315
        %v2448 = vld [vmem:[#allocation12] sm:$0xff]
        %v2449 = vld [vmem:[#allocation12 + $0x8] sm:$0xff]
        %v2450 = vld [vmem:[#allocation12 + $0x10] sm:$0xff]
        %v2451 = vld [vmem:[#allocation12 + $0x18] sm:$0xff]
        %v2452 = vld [vmem:[#allocation12 + $0x20] sm:$0xff]
        %v2453 = vld [vmem:[#allocation12 + $0x28] sm:$0xff]
        %v2454 = vld [vmem:[#allocation12 + $0x30] sm:$0xff]
        %v2455 = vld [vmem:[#allocation12 + $0x38] sm:$0xff]
        %v2456 = vld [vmem:[#allocation12 + $0x40] sm:$0xff]
        %v2457 = vld [vmem:[#allocation12 + $0x48] sm:$0xff]
        %v2458 = vld [vmem:[#allocation12 + $0x50] sm:$0xff]
        %v2459 = vld [vmem:[#allocation12 + $0x58] sm:$0xff]
        %v2460 = vld [vmem:[#allocation12 + $0x60] sm:$0xff]
        %v2461 = vld [vmem:[#allocation12 + $0x68] sm:$0xff]
        %v2462 = vld [vmem:[#allocation12 + $0x70] sm:$0xff]
        %v2463 = vld [vmem:[#allocation12 + $0x78] sm:$0xff]
        %v2464 = vld [vmem:[#allocation12 + $0x80] sm:$0xff]
        %v2465 = vld [vmem:[#allocation12 + $0x88] sm:$0xff]
        %v2466 = vld [vmem:[#allocation12 + $0x90] sm:$0xff]
        %v2467 = vld [vmem:[#allocation12 + $0x98] sm:$0xff]
        %v2468 = vld [vmem:[#allocation12 + $0xa0] sm:$0xff]
        %v2469 = vld [vmem:[#allocation12 + $0xa8] sm:$0xff]
        %v2470 = vld [vmem:[#allocation12 + $0xb0] sm:$0xff]
        %v2471 = vld [vmem:[#allocation12 + $0xb8] sm:$0xff]
        %v2472 = vld [vmem:[#allocation12 + $0xc0] sm:$0xff]
        %v2473 = vld [vmem:[#allocation12 + $0xc8] sm:$0xff]
        %v2474 = vld [vmem:[#allocation12 + $0xd0] sm:$0xff]
        %v2475 = vld [vmem:[#allocation12 + $0xd8] sm:$0xff]
        %v2476 = vld [vmem:[#allocation12 + $0xe0] sm:$0xff]
        %v2477 = vld [vmem:[#allocation12 + $0xe8] sm:$0xff]
        %v2478 = vld [vmem:[#allocation12 + $0xf0] sm:$0xff]
        %v2479 = vld [vmem:[#allocation12 + $0xf8] sm:$0xff]
        %v2480 = vld [vmem:[#allocation12 + $0x100] sm:$0xff]
        %v2481 = vld [vmem:[#allocation12 + $0x108] sm:$0xff]
        %v2482 = vld [vmem:[#allocation12 + $0x110] sm:$0xff]
        %v2483 = vld [vmem:[#allocation12 + $0x118] sm:$0xff]
        %v2484 = vld [vmem:[#allocation12 + $0x120] sm:$0xff]
        %v2485 = vld [vmem:[#allocation12 + $0x128] sm:$0xff]
        %v2486 = vld [vmem:[#allocation12 + $0x130] sm:$0xff]
        %v2487 = vld [vmem:[#allocation12 + $0x138] sm:$0xff]
        %v2488 = vld [vmem:[#allocation12 + $0x140] sm:$0xff]
        %v2489 = vld [vmem:[#allocation12 + $0x148] sm:$0xff]
        %v2490 = vld [vmem:[#allocation12 + $0x150] sm:$0xff]
        %v2491 = vld [vmem:[#allocation12 + $0x158] sm:$0xff]
        %v2492 = vld [vmem:[#allocation12 + $0x160] sm:$0xff]
        %v2493 = vld [vmem:[#allocation12 + $0x168] sm:$0xff]
        %v2494 = vld [vmem:[#allocation12 + $0x170] sm:$0xff]
        %v2495 = vld [vmem:[#allocation12 + $0x178] sm:$0xff]
        %v2496 = vld [vmem:[#allocation12 + $0x180] sm:$0xff]
        %v2497 = vld [vmem:[#allocation12 + $0x188] sm:$0xff]
        %v2498 = vld [vmem:[#allocation12 + $0x190] sm:$0xff]
        %v2499 = vld [vmem:[#allocation12 + $0x198] sm:$0xff]
        %v2500 = vld [vmem:[#allocation12 + $0x1a0] sm:$0xff]
        %v2501 = vld [vmem:[#allocation12 + $0x1a8] sm:$0xff]
        %v2502 = vld [vmem:[#allocation12 + $0x1b0] sm:$0xff]
        %v2503 = vld [vmem:[#allocation12 + $0x1b8] sm:$0xff]
        %v2504 = vld [vmem:[#allocation12 + $0x1c0] sm:$0xff]
        %v2505 = vld [vmem:[#allocation12 + $0x1c8] sm:$0xff]
        %v2506 = vld [vmem:[#allocation12 + $0x1d0] sm:$0xff]
        %v2507 = vld [vmem:[#allocation12 + $0x1d8] sm:$0xff]
        %v2508 = vld [vmem:[#allocation12 + $0x1e0] sm:$0xff]
        %v2509 = vld [vmem:[#allocation12 + $0x1e8] sm:$0xff]
        %v2510 = vld [vmem:[#allocation12 + $0x1f0] sm:$0xff]
        %v2511 = vld [vmem:[#allocation12 + $0x1f8] sm:$0xff]
        %2513 = vset.pattern.permute.xlu0 0
        %2514 = vperm.xlu0 %2513, %v2448
        %v2515 = vpop.permute.xlu0 %2514
        %2518 = vset.pattern.permute.xlu0 0
        %2519 = vperm.xlu0 %2518, %v2449
        %v2520 = vpop.permute.xlu0 %2519
        %2523 = vset.pattern.permute.xlu0 0
        %2524 = vperm.xlu0 %2523, %v2450
        %v2525 = vpop.permute.xlu0 %2524
        %2528 = vset.pattern.permute.xlu0 0
        %2529 = vperm.xlu0 %2528, %v2451
        %v2530 = vpop.permute.xlu0 %2529
        %2533 = vset.pattern.permute.xlu0 0
        %2534 = vperm.xlu0 %2533, %v2452
        %v2535 = vpop.permute.xlu0 %2534
        %2538 = vset.pattern.permute.xlu0 0
        %2539 = vperm.xlu0 %2538, %v2453
        %v2540 = vpop.permute.xlu0 %2539
        %2543 = vset.pattern.permute.xlu0 0
        %2544 = vperm.xlu0 %2543, %v2454
        %v2545 = vpop.permute.xlu0 %2544
        %2548 = vset.pattern.permute.xlu0 0
        %2549 = vperm.xlu0 %2548, %v2455
        %v2550 = vpop.permute.xlu0 %2549
        %2553 = vset.pattern.permute.xlu0 0
        %2554 = vperm.xlu0 %2553, %v2456
        %v2555 = vpop.permute.xlu0 %2554
        %2558 = vset.pattern.permute.xlu0 0
        %2559 = vperm.xlu0 %2558, %v2457
        %v2560 = vpop.permute.xlu0 %2559
        %2563 = vset.pattern.permute.xlu0 0
        %2564 = vperm.xlu0 %2563, %v2458
        %v2565 = vpop.permute.xlu0 %2564
        %2568 = vset.pattern.permute.xlu0 0
        %2569 = vperm.xlu0 %2568, %v2459
        %v2570 = vpop.permute.xlu0 %2569
        %2573 = vset.pattern.permute.xlu0 0
        %2574 = vperm.xlu0 %2573, %v2460
        %v2575 = vpop.permute.xlu0 %2574
        %2578 = vset.pattern.permute.xlu0 0
        %2579 = vperm.xlu0 %2578, %v2461
        %v2580 = vpop.permute.xlu0 %2579
        %2583 = vset.pattern.permute.xlu0 0
        %2584 = vperm.xlu0 %2583, %v2462
        %v2585 = vpop.permute.xlu0 %2584
        %2588 = vset.pattern.permute.xlu0 0
        %2589 = vperm.xlu0 %2588, %v2463
        %v2590 = vpop.permute.xlu0 %2589
        %2593 = vset.pattern.permute.xlu0 0
        %2594 = vperm.xlu0 %2593, %v2464
        %v2595 = vpop.permute.xlu0 %2594
        %2598 = vset.pattern.permute.xlu0 0
        %2599 = vperm.xlu0 %2598, %v2465
        %v2600 = vpop.permute.xlu0 %2599
        %2603 = vset.pattern.permute.xlu0 0
        %2604 = vperm.xlu0 %2603, %v2466
        %v2605 = vpop.permute.xlu0 %2604
        %2608 = vset.pattern.permute.xlu0 0
        %2609 = vperm.xlu0 %2608, %v2467
        %v2610 = vpop.permute.xlu0 %2609
        %2613 = vset.pattern.permute.xlu0 0
        %2614 = vperm.xlu0 %2613, %v2468
        %v2615 = vpop.permute.xlu0 %2614
        %2618 = vset.pattern.permute.xlu0 0
        %2619 = vperm.xlu0 %2618, %v2469
        %v2620 = vpop.permute.xlu0 %2619
        %2623 = vset.pattern.permute.xlu0 0
        %2624 = vperm.xlu0 %2623, %v2470
        %v2625 = vpop.permute.xlu0 %2624
        %2628 = vset.pattern.permute.xlu0 0
        %2629 = vperm.xlu0 %2628, %v2471
        %v2630 = vpop.permute.xlu0 %2629
        %2633 = vset.pattern.permute.xlu0 0
        %2634 = vperm.xlu0 %2633, %v2472
        %v2635 = vpop.permute.xlu0 %2634
        %2638 = vset.pattern.permute.xlu0 0
        %2639 = vperm.xlu0 %2638, %v2473
        %v2640 = vpop.permute.xlu0 %2639
        %2643 = vset.pattern.permute.xlu0 0
        %2644 = vperm.xlu0 %2643, %v2474
        %v2645 = vpop.permute.xlu0 %2644
        %2648 = vset.pattern.permute.xlu0 0
        %2649 = vperm.xlu0 %2648, %v2475
        %v2650 = vpop.permute.xlu0 %2649
        %2653 = vset.pattern.permute.xlu0 0
        %2654 = vperm.xlu0 %2653, %v2476
        %v2655 = vpop.permute.xlu0 %2654
        %2658 = vset.pattern.permute.xlu0 0
        %2659 = vperm.xlu0 %2658, %v2477
        %v2660 = vpop.permute.xlu0 %2659
        %2663 = vset.pattern.permute.xlu0 0
        %2664 = vperm.xlu0 %2663, %v2478
        %v2665 = vpop.permute.xlu0 %2664
        %2668 = vset.pattern.permute.xlu0 0
        %2669 = vperm.xlu0 %2668, %v2479
        %v2670 = vpop.permute.xlu0 %2669
        %2673 = vset.pattern.permute.xlu0 0
        %2674 = vperm.xlu0 %2673, %v2480
        %v2675 = vpop.permute.xlu0 %2674
        %2678 = vset.pattern.permute.xlu0 0
        %2679 = vperm.xlu0 %2678, %v2481
        %v2680 = vpop.permute.xlu0 %2679
        %2683 = vset.pattern.permute.xlu0 0
        %2684 = vperm.xlu0 %2683, %v2482
        %v2685 = vpop.permute.xlu0 %2684
        %2688 = vset.pattern.permute.xlu0 0
        %2689 = vperm.xlu0 %2688, %v2483
        %v2690 = vpop.permute.xlu0 %2689
        %2693 = vset.pattern.permute.xlu0 0
        %2694 = vperm.xlu0 %2693, %v2484
        %v2695 = vpop.permute.xlu0 %2694
        %2698 = vset.pattern.permute.xlu0 0
        %2699 = vperm.xlu0 %2698, %v2485
        %v2700 = vpop.permute.xlu0 %2699
        %2703 = vset.pattern.permute.xlu0 0
        %2704 = vperm.xlu0 %2703, %v2486
        %v2705 = vpop.permute.xlu0 %2704
        %2708 = vset.pattern.permute.xlu0 0
        %2709 = vperm.xlu0 %2708, %v2487
        %v2710 = vpop.permute.xlu0 %2709
        %2713 = vset.pattern.permute.xlu0 0
        %2714 = vperm.xlu0 %2713, %v2488
        %v2715 = vpop.permute.xlu0 %2714
        %2718 = vset.pattern.permute.xlu0 0
        %2719 = vperm.xlu0 %2718, %v2489
        %v2720 = vpop.permute.xlu0 %2719
        %2723 = vset.pattern.permute.xlu0 0
        %2724 = vperm.xlu0 %2723, %v2490
        %v2725 = vpop.permute.xlu0 %2724
        %2728 = vset.pattern.permute.xlu0 0
        %2729 = vperm.xlu0 %2728, %v2491
        %v2730 = vpop.permute.xlu0 %2729
        %2733 = vset.pattern.permute.xlu0 0
        %2734 = vperm.xlu0 %2733, %v2492
        %v2735 = vpop.permute.xlu0 %2734
        %2738 = vset.pattern.permute.xlu0 0
        %2739 = vperm.xlu0 %2738, %v2493
        %v2740 = vpop.permute.xlu0 %2739
        %2743 = vset.pattern.permute.xlu0 0
        %2744 = vperm.xlu0 %2743, %v2494
        %v2745 = vpop.permute.xlu0 %2744
        %2748 = vset.pattern.permute.xlu0 0
        %2749 = vperm.xlu0 %2748, %v2495
        %v2750 = vpop.permute.xlu0 %2749
        %2753 = vset.pattern.permute.xlu0 0
        %2754 = vperm.xlu0 %2753, %v2496
        %v2755 = vpop.permute.xlu0 %2754
        %2758 = vset.pattern.permute.xlu0 0
        %2759 = vperm.xlu0 %2758, %v2497
        %v2760 = vpop.permute.xlu0 %2759
        %2763 = vset.pattern.permute.xlu0 0
        %2764 = vperm.xlu0 %2763, %v2498
        %v2765 = vpop.permute.xlu0 %2764
        %2768 = vset.pattern.permute.xlu0 0
        %2769 = vperm.xlu0 %2768, %v2499
        %v2770 = vpop.permute.xlu0 %2769
        %2773 = vset.pattern.permute.xlu0 0
        %2774 = vperm.xlu0 %2773, %v2500
        %v2775 = vpop.permute.xlu0 %2774
        %2778 = vset.pattern.permute.xlu0 0
        %2779 = vperm.xlu0 %2778, %v2501
        %v2780 = vpop.permute.xlu0 %2779
        %2783 = vset.pattern.permute.xlu0 0
        %2784 = vperm.xlu0 %2783, %v2502
        %v2785 = vpop.permute.xlu0 %2784
        %2788 = vset.pattern.permute.xlu0 0
        %2789 = vperm.xlu0 %2788, %v2503
        %v2790 = vpop.permute.xlu0 %2789
        %2793 = vset.pattern.permute.xlu0 0
        %2794 = vperm.xlu0 %2793, %v2504
        %v2795 = vpop.permute.xlu0 %2794
        %2798 = vset.pattern.permute.xlu0 0
        %2799 = vperm.xlu0 %2798, %v2505
        %v2800 = vpop.permute.xlu0 %2799
        %2803 = vset.pattern.permute.xlu0 0
        %2804 = vperm.xlu0 %2803, %v2506
        %v2805 = vpop.permute.xlu0 %2804
        %2808 = vset.pattern.permute.xlu0 0
        %2809 = vperm.xlu0 %2808, %v2507
        %v2810 = vpop.permute.xlu0 %2809
        %2813 = vset.pattern.permute.xlu0 0
        %2814 = vperm.xlu0 %2813, %v2508
        %v2815 = vpop.permute.xlu0 %2814
        %2818 = vset.pattern.permute.xlu0 0
        %2819 = vperm.xlu0 %2818, %v2509
        %v2820 = vpop.permute.xlu0 %2819
        %2823 = vset.pattern.permute.xlu0 0
        %2824 = vperm.xlu0 %2823, %v2510
        %v2825 = vpop.permute.xlu0 %2824
        %2828 = vset.pattern.permute.xlu0 0
        %2829 = vperm.xlu0 %2828, %v2511
        %v2830 = vpop.permute.xlu0 %2829
        %v2896 = vunpack.c.l.b16 %v2320
        %v2897 = vunpack.c.h.b16 %v2320
        %v2898 = vunpack.c.l.b16 %v2321
        %v2899 = vunpack.c.h.b16 %v2321
        %v2900 = vunpack.c.l.b16 %v2322
        %v2901 = vunpack.c.h.b16 %v2322
        %v2902 = vunpack.c.l.b16 %v2323
        %v2903 = vunpack.c.h.b16 %v2323
        %v2904 = vunpack.c.l.b16 %v2324
        %v2905 = vunpack.c.h.b16 %v2324
        %v2906 = vunpack.c.l.b16 %v2325
        %v2907 = vunpack.c.h.b16 %v2325
        %v2908 = vunpack.c.l.b16 %v2326
        %v2909 = vunpack.c.h.b16 %v2326
        %v2910 = vunpack.c.l.b16 %v2327
        %v2911 = vunpack.c.h.b16 %v2327
        %v2912 = vunpack.c.l.b16 %v2328
        %v2913 = vunpack.c.h.b16 %v2328
        %v2914 = vunpack.c.l.b16 %v2329
        %v2915 = vunpack.c.h.b16 %v2329
        %v2916 = vunpack.c.l.b16 %v2330
        %v2917 = vunpack.c.h.b16 %v2330
        %v2918 = vunpack.c.l.b16 %v2331
        %v2919 = vunpack.c.h.b16 %v2331
        %v2920 = vunpack.c.l.b16 %v2332
        %v2921 = vunpack.c.h.b16 %v2332
        %v2922 = vunpack.c.l.b16 %v2333
        %v2923 = vunpack.c.h.b16 %v2333
        %v2924 = vunpack.c.l.b16 %v2334
        %v2925 = vunpack.c.h.b16 %v2334
        %v2926 = vunpack.c.l.b16 %v2335
        %v2927 = vunpack.c.h.b16 %v2335
        %v2928 = vunpack.c.l.b16 %v2336
        %v2929 = vunpack.c.h.b16 %v2336
        %v2930 = vunpack.c.l.b16 %v2337
        %v2931 = vunpack.c.h.b16 %v2337
        %v2932 = vunpack.c.l.b16 %v2338
        %v2933 = vunpack.c.h.b16 %v2338
        %v2934 = vunpack.c.l.b16 %v2339
        %v2935 = vunpack.c.h.b16 %v2339
        %v2936 = vunpack.c.l.b16 %v2340
        %v2937 = vunpack.c.h.b16 %v2340
        %v2938 = vunpack.c.l.b16 %v2341
        %v2939 = vunpack.c.h.b16 %v2341
        %v2940 = vunpack.c.l.b16 %v2342
        %v2941 = vunpack.c.h.b16 %v2342
        %v2942 = vunpack.c.l.b16 %v2343
        %v2943 = vunpack.c.h.b16 %v2343
        %v2944 = vunpack.c.l.b16 %v2344
        %v2945 = vunpack.c.h.b16 %v2344
        %v2946 = vunpack.c.l.b16 %v2345
        %v2947 = vunpack.c.h.b16 %v2345
        %v2948 = vunpack.c.l.b16 %v2346
        %v2949 = vunpack.c.h.b16 %v2346
        %v2950 = vunpack.c.l.b16 %v2347
        %v2951 = vunpack.c.h.b16 %v2347
        %v2952 = vunpack.c.l.b16 %v2348
        %v2953 = vunpack.c.h.b16 %v2348
        %v2954 = vunpack.c.l.b16 %v2349
        %v2955 = vunpack.c.h.b16 %v2349
        %v2956 = vunpack.c.l.b16 %v2350
        %v2957 = vunpack.c.h.b16 %v2350
        %v2958 = vunpack.c.l.b16 %v2351
        %v2959 = vunpack.c.h.b16 %v2351
        %v2960 = vunpack.c.l.b16 %v2352
        %v2961 = vunpack.c.h.b16 %v2352
        %v2962 = vunpack.c.l.b16 %v2353
        %v2963 = vunpack.c.h.b16 %v2353
        %v2964 = vunpack.c.l.b16 %v2354
        %v2965 = vunpack.c.h.b16 %v2354
        %v2966 = vunpack.c.l.b16 %v2355
        %v2967 = vunpack.c.h.b16 %v2355
        %v2968 = vunpack.c.l.b16 %v2356
        %v2969 = vunpack.c.h.b16 %v2356
        %v2970 = vunpack.c.l.b16 %v2357
        %v2971 = vunpack.c.h.b16 %v2357
        %v2972 = vunpack.c.l.b16 %v2358
        %v2973 = vunpack.c.h.b16 %v2358
        %v2974 = vunpack.c.l.b16 %v2359
        %v2975 = vunpack.c.h.b16 %v2359
        %v2976 = vunpack.c.l.b16 %v2360
        %v2977 = vunpack.c.h.b16 %v2360
        %v2978 = vunpack.c.l.b16 %v2361
        %v2979 = vunpack.c.h.b16 %v2361
        %v2980 = vunpack.c.l.b16 %v2362
        %v2981 = vunpack.c.h.b16 %v2362
        %v2982 = vunpack.c.l.b16 %v2363
        %v2983 = vunpack.c.h.b16 %v2363
        %v2984 = vunpack.c.l.b16 %v2364
        %v2985 = vunpack.c.h.b16 %v2364
        %v2986 = vunpack.c.l.b16 %v2365
        %v2987 = vunpack.c.h.b16 %v2365
        %v2988 = vunpack.c.l.b16 %v2366
        %v2989 = vunpack.c.h.b16 %v2366
        %v2990 = vunpack.c.l.b16 %v2367
        %v2991 = vunpack.c.h.b16 %v2367
        %v2992 = vunpack.c.l.b16 %v2368
        %v2993 = vunpack.c.h.b16 %v2368
        %v2994 = vunpack.c.l.b16 %v2369
        %v2995 = vunpack.c.h.b16 %v2369
        %v2996 = vunpack.c.l.b16 %v2370
        %v2997 = vunpack.c.h.b16 %v2370
        %v2998 = vunpack.c.l.b16 %v2371
        %v2999 = vunpack.c.h.b16 %v2371
        %v3000 = vunpack.c.l.b16 %v2372
        %v3001 = vunpack.c.h.b16 %v2372
        %v3002 = vunpack.c.l.b16 %v2373
        %v3003 = vunpack.c.h.b16 %v2373
        %v3004 = vunpack.c.l.b16 %v2374
        %v3005 = vunpack.c.h.b16 %v2374
        %v3006 = vunpack.c.l.b16 %v2375
        %v3007 = vunpack.c.h.b16 %v2375
        %v3008 = vunpack.c.l.b16 %v2376
        %v3009 = vunpack.c.h.b16 %v2376
        %v3010 = vunpack.c.l.b16 %v2377
        %v3011 = vunpack.c.h.b16 %v2377
        %v3012 = vunpack.c.l.b16 %v2378
        %v3013 = vunpack.c.h.b16 %v2378
        %v3014 = vunpack.c.l.b16 %v2379
        %v3015 = vunpack.c.h.b16 %v2379
        %v3016 = vunpack.c.l.b16 %v2380
        %v3017 = vunpack.c.h.b16 %v2380
        %v3018 = vunpack.c.l.b16 %v2381
        %v3019 = vunpack.c.h.b16 %v2381
        %v3020 = vunpack.c.l.b16 %v2382
        %v3021 = vunpack.c.h.b16 %v2382
        %v3022 = vunpack.c.l.b16 %v2383
        %v3023 = vunpack.c.h.b16 %v2383
        %v3024 = vpack.c.b16 %v2898, %v2896
        %v3025 = vpack.c.b16 %v2899, %v2897
        %v3026 = vpack.c.b16 %v2902, %v2900
        %v3027 = vpack.c.b16 %v2903, %v2901
        %v3028 = vpack.c.b16 %v2906, %v2904
        %v3029 = vpack.c.b16 %v2907, %v2905
        %v3030 = vpack.c.b16 %v2910, %v2908
        %v3031 = vpack.c.b16 %v2911, %v2909
        %v3032 = vpack.c.b16 %v2914, %v2912
        %v3033 = vpack.c.b16 %v2915, %v2913
        %v3034 = vpack.c.b16 %v2918, %v2916
        %v3035 = vpack.c.b16 %v2919, %v2917
        %v3036 = vpack.c.b16 %v2922, %v2920
        %v3037 = vpack.c.b16 %v2923, %v2921
        %v3038 = vpack.c.b16 %v2926, %v2924
        %v3039 = vpack.c.b16 %v2927, %v2925
        %v3040 = vpack.c.b16 %v2930, %v2928
        %v3041 = vpack.c.b16 %v2931, %v2929
        %v3042 = vpack.c.b16 %v2934, %v2932
        %v3043 = vpack.c.b16 %v2935, %v2933
        %v3044 = vpack.c.b16 %v2938, %v2936
        %v3045 = vpack.c.b16 %v2939, %v2937
        %v3046 = vpack.c.b16 %v2942, %v2940
        %v3047 = vpack.c.b16 %v2943, %v2941
        %v3048 = vpack.c.b16 %v2946, %v2944
        %v3049 = vpack.c.b16 %v2947, %v2945
        %v3050 = vpack.c.b16 %v2950, %v2948
        %v3051 = vpack.c.b16 %v2951, %v2949
        %v3052 = vpack.c.b16 %v2954, %v2952
        %v3053 = vpack.c.b16 %v2955, %v2953
        %v3054 = vpack.c.b16 %v2958, %v2956
        %v3055 = vpack.c.b16 %v2959, %v2957
        %v3056 = vpack.c.b16 %v2962, %v2960
        %v3057 = vpack.c.b16 %v2963, %v2961
        %v3058 = vpack.c.b16 %v2966, %v2964
        %v3059 = vpack.c.b16 %v2967, %v2965
        %v3060 = vpack.c.b16 %v2970, %v2968
        %v3061 = vpack.c.b16 %v2971, %v2969
        %v3062 = vpack.c.b16 %v2974, %v2972
        %v3063 = vpack.c.b16 %v2975, %v2973
        %v3064 = vpack.c.b16 %v2978, %v2976
        %v3065 = vpack.c.b16 %v2979, %v2977
        %v3066 = vpack.c.b16 %v2982, %v2980
        %v3067 = vpack.c.b16 %v2983, %v2981
        %v3068 = vpack.c.b16 %v2986, %v2984
        %v3069 = vpack.c.b16 %v2987, %v2985
        %v3070 = vpack.c.b16 %v2990, %v2988
        %v3071 = vpack.c.b16 %v2991, %v2989
        %v3072 = vpack.c.b16 %v2994, %v2992
        %v3073 = vpack.c.b16 %v2995, %v2993
        %v3074 = vpack.c.b16 %v2998, %v2996
        %v3075 = vpack.c.b16 %v2999, %v2997
        %v3076 = vpack.c.b16 %v3002, %v3000
        %v3077 = vpack.c.b16 %v3003, %v3001
        %v3078 = vpack.c.b16 %v3006, %v3004
        %v3079 = vpack.c.b16 %v3007, %v3005
        %v3080 = vpack.c.b16 %v3010, %v3008
        %v3081 = vpack.c.b16 %v3011, %v3009
        %v3082 = vpack.c.b16 %v3014, %v3012
        %v3083 = vpack.c.b16 %v3015, %v3013
        %v3084 = vpack.c.b16 %v3018, %v3016
        %v3085 = vpack.c.b16 %v3019, %v3017
        %v3086 = vpack.c.b16 %v3022, %v3020
        %v3087 = vpack.c.b16 %v3023, %v3021
        %3152 = vmatprep.subr.bf16.mxu0 %v2385
        %3153 = vmatpush1.bf16.msra.mxu0 %v2384
        %3154 = vmatprep.subr.bf16.mxu0 %v2389
        %3155 = vmatpush1.bf16.msra.mxu0 %v2388
        %3156 = vmatprep.subr.bf16.mxu0 %v2393
        %3157 = vmatpush1.bf16.msra.mxu0 %v2392
        %3158 = vmatprep.subr.bf16.mxu0 %v2397
        %3159 = vmatpush1.bf16.msra.mxu0 %v2396
        %3160 = vmatprep.subr.bf16.mxu0 %v2401
        %3161 = vmatpush1.bf16.msra.mxu0 %v2400
        %3162 = vmatprep.subr.bf16.mxu0 %v2405
        %3163 = vmatpush1.bf16.msra.mxu0 %v2404
        %3164 = vmatprep.subr.bf16.mxu0 %v2409
        %3165 = vmatpush1.bf16.msra.mxu0 %v2408
        %3166 = vmatprep.subr.bf16.mxu0 %v2413
        %3167 = vmatpush1.bf16.msra.mxu0 %v2412
        %3168 = vmatprep.subr.bf16.mxu0 %v2417
        %3169 = vmatpush1.bf16.msra.mxu0 %v2416
        %3170 = vmatprep.subr.bf16.mxu0 %v2421
        %3171 = vmatpush1.bf16.msra.mxu0 %v2420
        %3172 = vmatprep.subr.bf16.mxu0 %v2425
        %3173 = vmatpush1.bf16.msra.mxu0 %v2424
        %3174 = vmatprep.subr.bf16.mxu0 %v2429
        %3175 = vmatpush1.bf16.msra.mxu0 %v2428
        %3176 = vmatprep.subr.bf16.mxu0 %v2433
        %3177 = vmatpush1.bf16.msra.mxu0 %v2432
        %3178 = vmatprep.subr.bf16.mxu0 %v2437
        %3179 = vmatpush1.bf16.msra.mxu0 %v2436
        %3180 = vmatprep.subr.bf16.mxu0 %v2441
        %3181 = vmatpush1.bf16.msra.mxu0 %v2440
        %3182 = vmatprep.subr.bf16.mxu0 %v2445
        %3183 = vmatpush1.bf16.msra.mxu0 %v2444
        %3184 = vmatprep.mubr.bf16.mxu0 %v3025
        %3185 = vmatmul.mubr.bf16.gmra.mrb[0].mxu0 %v3024
        %v3186 = vpop.f32.mrb[0].mxu0
        %v3187 = vadd.f32 %v2515, %v3186
        %v3188 = vpop.f32.mrb[0].mxu0
        %v3189 = vadd.f32 %v2515, %v3188
        %v3190 = vpop.f32.mrb[0].mxu0
        %v3191 = vadd.f32 %v2520, %v3190
        %v3192 = vpop.f32.mrb[0].mxu0
        %v3193 = vadd.f32 %v2520, %v3192
        %3194 = vmatprep.mubr.bf16.mxu0 %v3027
        %3195 = vmatmul.mubr.bf16.gmra.mrb[0].mxu0 %v3026
        %v3196 = vpop.f32.mrb[0].mxu0
        %v3197 = vadd.f32 %v2525, %v3196
        %v3198 = vpop.f32.mrb[0].mxu0
        %v3199 = vadd.f32 %v2525, %v3198
        %v3200 = vpop.f32.mrb[0].mxu0
        %v3201 = vadd.f32 %v2530, %v3200
        %v3202 = vpop.f32.mrb[0].mxu0
        %v3203 = vadd.f32 %v2530, %v3202
        %3204 = vmatprep.mubr.bf16.mxu0 %v3029
        %3205 = vmatmul.mubr.bf16.gmra.mrb[0].mxu0 %v3028
        %v3206 = vpop.f32.mrb[0].mxu0
        %v3207 = vadd.f32 %v2535, %v3206
        %v3208 = vpop.f32.mrb[0].mxu0
        %v3209 = vadd.f32 %v2535, %v3208
        %v3210 = vpop.f32.mrb[0].mxu0
        %v3211 = vadd.f32 %v2540, %v3210
        %v3212 = vpop.f32.mrb[0].mxu0
        %v3213 = vadd.f32 %v2540, %v3212
        %3214 = vmatprep.mubr.bf16.mxu0 %v3031
        %3215 = vmatmul.mubr.bf16.gmra.mrb[0].mxu0 %v3030
        %v3216 = vpop.f32.mrb[0].mxu0
        %v3217 = vadd.f32 %v2545, %v3216
        %v3218 = vpop.f32.mrb[0].mxu0
        %v3219 = vadd.f32 %v2545, %v3218
        %v3220 = vpop.f32.mrb[0].mxu0
        %v3221 = vadd.f32 %v2550, %v3220
        %v3222 = vpop.f32.mrb[0].mxu0
        %v3223 = vadd.f32 %v2550, %v3222
        %3224 = vmatprep.mubr.bf16.mxu0 %v3033
        %3225 = vmatmul.mubr.bf16.gmra.mrb[0].mxu0 %v3032
        %v3226 = vpop.f32.mrb[0].mxu0
        %v3227 = vadd.f32 %v2555, %v3226
        %v3228 = vpop.f32.mrb[0].mxu0
        %v3229 = vadd.f32 %v2555, %v3228
        %v3230 = vpop.f32.mrb[0].mxu0
        %v3231 = vadd.f32 %v2560, %v3230
        %v3232 = vpop.f32.mrb[0].mxu0
        %v3233 = vadd.f32 %v2560, %v3232
        %3234 = vmatprep.mubr.bf16.mxu0 %v3035
        %3235 = vmatmul.mubr.bf16.gmra.mrb[0].mxu0 %v3034
        %v3236 = vpop.f32.mrb[0].mxu0
        %v3237 = vadd.f32 %v2565, %v3236
        %v3238 = vpop.f32.mrb[0].mxu0
        %v3239 = vadd.f32 %v2565, %v3238
        %v3240 = vpop.f32.mrb[0].mxu0
        %v3241 = vadd.f32 %v2570, %v3240
        %v3242 = vpop.f32.mrb[0].mxu0
        %v3243 = vadd.f32 %v2570, %v3242
        %3244 = vmatprep.mubr.bf16.mxu0 %v3037
        %3245 = vmatmul.mubr.bf16.gmra.mrb[0].mxu0 %v3036
        %v3246 = vpop.f32.mrb[0].mxu0
        %v3247 = vadd.f32 %v2575, %v3246
        %v3248 = vpop.f32.mrb[0].mxu0
        %v3249 = vadd.f32 %v2575, %v3248
        %v3250 = vpop.f32.mrb[0].mxu0
        %v3251 = vadd.f32 %v2580, %v3250
        %v3252 = vpop.f32.mrb[0].mxu0
        %v3253 = vadd.f32 %v2580, %v3252
        %3254 = vmatprep.mubr.bf16.mxu0 %v3039
        %3255 = vmatmul.mubr.bf16.gmra.mrb[0].mxu0 %v3038
        %v3256 = vpop.f32.mrb[0].mxu0
        %v3257 = vadd.f32 %v2585, %v3256
        %v3258 = vpop.f32.mrb[0].mxu0
        %v3259 = vadd.f32 %v2585, %v3258
        %v3260 = vpop.f32.mrb[0].mxu0
        %v3261 = vadd.f32 %v2590, %v3260
        %v3262 = vpop.f32.mrb[0].mxu0
        %v3263 = vadd.f32 %v2590, %v3262
        %3264 = vmatprep.mubr.bf16.mxu0 %v3041
        %3265 = vmatmul.mubr.bf16.gmra.mrb[0].mxu0 %v3040
        %v3266 = vpop.f32.mrb[0].mxu0
        %v3267 = vadd.f32 %v2595, %v3266
        %v3268 = vpop.f32.mrb[0].mxu0
        %v3269 = vadd.f32 %v2595, %v3268
        %v3270 = vpop.f32.mrb[0].mxu0
        %v3271 = vadd.f32 %v2600, %v3270
        %v3272 = vpop.f32.mrb[0].mxu0
        %v3273 = vadd.f32 %v2600, %v3272
        %3274 = vmatprep.mubr.bf16.mxu0 %v3043
        %3275 = vmatmul.mubr.bf16.gmra.mrb[0].mxu0 %v3042
        %v3276 = vpop.f32.mrb[0].mxu0
        %v3277 = vadd.f32 %v2605, %v3276
        %v3278 = vpop.f32.mrb[0].mxu0
        %v3279 = vadd.f32 %v2605, %v3278
        %v3280 = vpop.f32.mrb[0].mxu0
        %v3281 = vadd.f32 %v2610, %v3280
        %v3282 = vpop.f32.mrb[0].mxu0
        %v3283 = vadd.f32 %v2610, %v3282
        %3284 = vmatprep.mubr.bf16.mxu0 %v3045
        %3285 = vmatmul.mubr.bf16.gmra.mrb[0].mxu0 %v3044
        %v3286 = vpop.f32.mrb[0].mxu0
        %v3287 = vadd.f32 %v2615, %v3286
        %v3288 = vpop.f32.mrb[0].mxu0
        %v3289 = vadd.f32 %v2615, %v3288
        %v3290 = vpop.f32.mrb[0].mxu0
        %v3291 = vadd.f32 %v2620, %v3290
        %v3292 = vpop.f32.mrb[0].mxu0
        %v3293 = vadd.f32 %v2620, %v3292
        %3294 = vmatprep.mubr.bf16.mxu0 %v3047
        %3295 = vmatmul.mubr.bf16.gmra.mrb[0].mxu0 %v3046
        %v3296 = vpop.f32.mrb[0].mxu0
        %v3297 = vadd.f32 %v2625, %v3296
        %v3298 = vpop.f32.mrb[0].mxu0
        %v3299 = vadd.f32 %v2625, %v3298
        %v3300 = vpop.f32.mrb[0].mxu0
        %v3301 = vadd.f32 %v2630, %v3300
        %v3302 = vpop.f32.mrb[0].mxu0
        %v3303 = vadd.f32 %v2630, %v3302
        %3304 = vmatprep.mubr.bf16.mxu0 %v3049
        %3305 = vmatmul.mubr.bf16.gmra.mrb[0].mxu0 %v3048
        %v3306 = vpop.f32.mrb[0].mxu0
        %v3307 = vadd.f32 %v2635, %v3306
        %v3308 = vpop.f32.mrb[0].mxu0
        %v3309 = vadd.f32 %v2635, %v3308
        %v3310 = vpop.f32.mrb[0].mxu0
        %v3311 = vadd.f32 %v2640, %v3310
        %v3312 = vpop.f32.mrb[0].mxu0
        %v3313 = vadd.f32 %v2640, %v3312
        %3314 = vmatprep.mubr.bf16.mxu0 %v3051
        %3315 = vmatmul.mubr.bf16.gmra.mrb[0].mxu0 %v3050
        %v3316 = vpop.f32.mrb[0].mxu0
        %v3317 = vadd.f32 %v2645, %v3316
        %v3318 = vpop.f32.mrb[0].mxu0
        %v3319 = vadd.f32 %v2645, %v3318
        %v3320 = vpop.f32.mrb[0].mxu0
        %v3321 = vadd.f32 %v2650, %v3320
        %v3322 = vpop.f32.mrb[0].mxu0
        %v3323 = vadd.f32 %v2650, %v3322
        %3324 = vmatprep.mubr.bf16.mxu0 %v3053
        %3325 = vmatmul.mubr.bf16.gmra.mrb[0].mxu0 %v3052
        %v3326 = vpop.f32.mrb[0].mxu0
        %v3327 = vadd.f32 %v2655, %v3326
        %v3328 = vpop.f32.mrb[0].mxu0
        %v3329 = vadd.f32 %v2655, %v3328
        %v3330 = vpop.f32.mrb[0].mxu0
        %v3331 = vadd.f32 %v2660, %v3330
        %v3332 = vpop.f32.mrb[0].mxu0
        %v3333 = vadd.f32 %v2660, %v3332
        %3334 = vmatprep.mubr.bf16.mxu0 %v3055
        %3335 = vmatmul.mubr.bf16.gmra.mrb[0].mxu0 %v3054
        %v3336 = vpop.f32.mrb[0].mxu0
        %v3337 = vadd.f32 %v2665, %v3336
        %v3338 = vpop.f32.mrb[0].mxu0
        %v3339 = vadd.f32 %v2665, %v3338
        %v3340 = vpop.f32.mrb[0].mxu0
        %v3341 = vadd.f32 %v2670, %v3340
        %v3342 = vpop.f32.mrb[0].mxu0
        %v3343 = vadd.f32 %v2670, %v3342
        %3344 = vmatprep.mubr.bf16.mxu0 %v3057
        %3345 = vmatmul.mubr.bf16.gmra.mrb[0].mxu0 %v3056
        %v3346 = vpop.f32.mrb[0].mxu0
        %v3347 = vadd.f32 %v2675, %v3346
        %v3348 = vpop.f32.mrb[0].mxu0
        %v3349 = vadd.f32 %v2675, %v3348
        %v3350 = vpop.f32.mrb[0].mxu0
        %v3351 = vadd.f32 %v2680, %v3350
        %v3352 = vpop.f32.mrb[0].mxu0
        %v3353 = vadd.f32 %v2680, %v3352
        %3354 = vmatprep.mubr.bf16.mxu0 %v3059
        %3355 = vmatmul.mubr.bf16.gmra.mrb[0].mxu0 %v3058
        %v3356 = vpop.f32.mrb[0].mxu0
        %v3357 = vadd.f32 %v2685, %v3356
        %v3358 = vpop.f32.mrb[0].mxu0
        %v3359 = vadd.f32 %v2685, %v3358
        %v3360 = vpop.f32.mrb[0].mxu0
        %v3361 = vadd.f32 %v2690, %v3360
        %v3362 = vpop.f32.mrb[0].mxu0
        %v3363 = vadd.f32 %v2690, %v3362
        %3364 = vmatprep.mubr.bf16.mxu0 %v3061
        %3365 = vmatmul.mubr.bf16.gmra.mrb[0].mxu0 %v3060
        %v3366 = vpop.f32.mrb[0].mxu0
        %v3367 = vadd.f32 %v2695, %v3366
        %v3368 = vpop.f32.mrb[0].mxu0
        %v3369 = vadd.f32 %v2695, %v3368
        %v3370 = vpop.f32.mrb[0].mxu0
        %v3371 = vadd.f32 %v2700, %v3370
        %v3372 = vpop.f32.mrb[0].mxu0
        %v3373 = vadd.f32 %v2700, %v3372
        %3374 = vmatprep.mubr.bf16.mxu0 %v3063
        %3375 = vmatmul.mubr.bf16.gmra.mrb[0].mxu0 %v3062
        %v3376 = vpop.f32.mrb[0].mxu0
        %v3377 = vadd.f32 %v2705, %v3376
        %v3378 = vpop.f32.mrb[0].mxu0
        %v3379 = vadd.f32 %v2705, %v3378
        %v3380 = vpop.f32.mrb[0].mxu0
        %v3381 = vadd.f32 %v2710, %v3380
        %v3382 = vpop.f32.mrb[0].mxu0
        %v3383 = vadd.f32 %v2710, %v3382
        %3384 = vmatprep.mubr.bf16.mxu0 %v3065
        %3385 = vmatmul.mubr.bf16.gmra.mrb[0].mxu0 %v3064
        %v3386 = vpop.f32.mrb[0].mxu0
        %v3387 = vadd.f32 %v2715, %v3386
        %v3388 = vpop.f32.mrb[0].mxu0
        %v3389 = vadd.f32 %v2715, %v3388
        %v3390 = vpop.f32.mrb[0].mxu0
        %v3391 = vadd.f32 %v2720, %v3390
        %v3392 = vpop.f32.mrb[0].mxu0
        %v3393 = vadd.f32 %v2720, %v3392
        %3394 = vmatprep.mubr.bf16.mxu0 %v3067
        %3395 = vmatmul.mubr.bf16.gmra.mrb[0].mxu0 %v3066
        %v3396 = vpop.f32.mrb[0].mxu0
        %v3397 = vadd.f32 %v2725, %v3396
        %v3398 = vpop.f32.mrb[0].mxu0
        %v3399 = vadd.f32 %v2725, %v3398
        %v3400 = vpop.f32.mrb[0].mxu0
        %v3401 = vadd.f32 %v2730, %v3400
        %v3402 = vpop.f32.mrb[0].mxu0
        %v3403 = vadd.f32 %v2730, %v3402
        %3404 = vmatprep.mubr.bf16.mxu0 %v3069
        %3405 = vmatmul.mubr.bf16.gmra.mrb[0].mxu0 %v3068
        %v3406 = vpop.f32.mrb[0].mxu0
        %v3407 = vadd.f32 %v2735, %v3406
        %v3408 = vpop.f32.mrb[0].mxu0
        %v3409 = vadd.f32 %v2735, %v3408
        %v3410 = vpop.f32.mrb[0].mxu0
        %v3411 = vadd.f32 %v2740, %v3410
        %v3412 = vpop.f32.mrb[0].mxu0
        %v3413 = vadd.f32 %v2740, %v3412
        %3414 = vmatprep.mubr.bf16.mxu0 %v3071
        %3415 = vmatmul.mubr.bf16.gmra.mrb[0].mxu0 %v3070
        %v3416 = vpop.f32.mrb[0].mxu0
        %v3417 = vadd.f32 %v2745, %v3416
        %v3418 = vpop.f32.mrb[0].mxu0
        %v3419 = vadd.f32 %v2745, %v3418
        %v3420 = vpop.f32.mrb[0].mxu0
        %v3421 = vadd.f32 %v2750, %v3420
        %v3422 = vpop.f32.mrb[0].mxu0
        %v3423 = vadd.f32 %v2750, %v3422
        %3424 = vmatprep.mubr.bf16.mxu0 %v3073
        %3425 = vmatmul.mubr.bf16.gmra.mrb[0].mxu0 %v3072
        %v3426 = vpop.f32.mrb[0].mxu0
        %v3427 = vadd.f32 %v2755, %v3426
        %v3428 = vpop.f32.mrb[0].mxu0
        %v3429 = vadd.f32 %v2755, %v3428
        %v3430 = vpop.f32.mrb[0].mxu0
        %v3431 = vadd.f32 %v2760, %v3430
        %v3432 = vpop.f32.mrb[0].mxu0
        %v3433 = vadd.f32 %v2760, %v3432
        %3434 = vmatprep.mubr.bf16.mxu0 %v3075
        %3435 = vmatmul.mubr.bf16.gmra.mrb[0].mxu0 %v3074
        %v3436 = vpop.f32.mrb[0].mxu0
        %v3437 = vadd.f32 %v2765, %v3436
        %v3438 = vpop.f32.mrb[0].mxu0
        %v3439 = vadd.f32 %v2765, %v3438
        %v3440 = vpop.f32.mrb[0].mxu0
        %v3441 = vadd.f32 %v2770, %v3440
        %v3442 = vpop.f32.mrb[0].mxu0
        %v3443 = vadd.f32 %v2770, %v3442
        %3444 = vmatprep.mubr.bf16.mxu0 %v3077
        %3445 = vmatmul.mubr.bf16.gmra.mrb[0].mxu0 %v3076
        %v3446 = vpop.f32.mrb[0].mxu0
        %v3447 = vadd.f32 %v2775, %v3446
        %v3448 = vpop.f32.mrb[0].mxu0
        %v3449 = vadd.f32 %v2775, %v3448
        %v3450 = vpop.f32.mrb[0].mxu0
        %v3451 = vadd.f32 %v2780, %v3450
        %v3452 = vpop.f32.mrb[0].mxu0
        %v3453 = vadd.f32 %v2780, %v3452
        %3454 = vmatprep.mubr.bf16.mxu0 %v3079
        %3455 = vmatmul.mubr.bf16.gmra.mrb[0].mxu0 %v3078
        %v3456 = vpop.f32.mrb[0].mxu0
        %v3457 = vadd.f32 %v2785, %v3456
        %v3458 = vpop.f32.mrb[0].mxu0
        %v3459 = vadd.f32 %v2785, %v3458
        %v3460 = vpop.f32.mrb[0].mxu0
        %v3461 = vadd.f32 %v2790, %v3460
        %v3462 = vpop.f32.mrb[0].mxu0
        %v3463 = vadd.f32 %v2790, %v3462
        %3464 = vmatprep.mubr.bf16.mxu0 %v3081
        %3465 = vmatmul.mubr.bf16.gmra.mrb[0].mxu0 %v3080
        %v3466 = vpop.f32.mrb[0].mxu0
        %v3467 = vadd.f32 %v2795, %v3466
        %v3468 = vpop.f32.mrb[0].mxu0
        %v3469 = vadd.f32 %v2795, %v3468
        %v3470 = vpop.f32.mrb[0].mxu0
        %v3471 = vadd.f32 %v2800, %v3470
        %v3472 = vpop.f32.mrb[0].mxu0
        %v3473 = vadd.f32 %v2800, %v3472
        %3474 = vmatprep.mubr.bf16.mxu0 %v3083
        %3475 = vmatmul.mubr.bf16.gmra.mrb[0].mxu0 %v3082
        %v3476 = vpop.f32.mrb[0].mxu0
        %v3477 = vadd.f32 %v2805, %v3476
        %v3478 = vpop.f32.mrb[0].mxu0
        %v3479 = vadd.f32 %v2805, %v3478
        %v3480 = vpop.f32.mrb[0].mxu0
        %v3481 = vadd.f32 %v2810, %v3480
        %v3482 = vpop.f32.mrb[0].mxu0
        %v3483 = vadd.f32 %v2810, %v3482
        %3484 = vmatprep.mubr.bf16.mxu0 %v3085
        %3485 = vmatmul.mubr.bf16.gmra.mrb[0].mxu0 %v3084
        %v3486 = vpop.f32.mrb[0].mxu0
        %v3487 = vadd.f32 %v2815, %v3486
        %v3488 = vpop.f32.mrb[0].mxu0
        %v3489 = vadd.f32 %v2815, %v3488
        %v3490 = vpop.f32.mrb[0].mxu0
        %v3491 = vadd.f32 %v2820, %v3490
        %v3492 = vpop.f32.mrb[0].mxu0
        %v3493 = vadd.f32 %v2820, %v3492
        %3494 = vmatprep.mubr.bf16.mxu0 %v3087
        %3495 = vmatmul.mubr.bf16.gmra.mrb[0].mxu0 %v3086
        %v3496 = vpop.f32.mrb[0].mxu0
        %v3497 = vadd.f32 %v2825, %v3496
        %v3498 = vpop.f32.mrb[0].mxu0
        %v3499 = vadd.f32 %v2825, %v3498
        %v3500 = vpop.f32.mrb[0].mxu0
        %v3501 = vadd.f32 %v2830, %v3500
        %v3502 = vpop.f32.mrb[0].mxu0
        %v3503 = vadd.f32 %v2830, %v3502
        %3504 = vdwg.mxu0
        %3505 = vmatprep.subr.bf16.mxu0 %v2387
        %3506 = vmatpush1.bf16.msra.mxu0 %v2386
        %3507 = vmatprep.subr.bf16.mxu0 %v2391
        %3508 = vmatpush1.bf16.msra.mxu0 %v2390
        %3509 = vmatprep.subr.bf16.mxu0 %v2395
        %3510 = vmatpush1.bf16.msra.mxu0 %v2394
        %3511 = vmatprep.subr.bf16.mxu0 %v2399
        %3512 = vmatpush1.bf16.msra.mxu0 %v2398
        %3513 = vmatprep.subr.bf16.mxu0 %v2403
        %3514 = vmatpush1.bf16.msra.mxu0 %v2402
        %3515 = vmatprep.subr.bf16.mxu0 %v2407
        %3516 = vmatpush1.bf16.msra.mxu0 %v2406
        %3517 = vmatprep.subr.bf16.mxu0 %v2411
        %3518 = vmatpush1.bf16.msra.mxu0 %v2410
        %3519 = vmatprep.subr.bf16.mxu0 %v2415
        %3520 = vmatpush1.bf16.msra.mxu0 %v2414
        %3521 = vmatprep.subr.bf16.mxu0 %v2419
        %3522 = vmatpush1.bf16.msra.mxu0 %v2418
        %3523 = vmatprep.subr.bf16.mxu0 %v2423
        %3524 = vmatpush1.bf16.msra.mxu0 %v2422
        %3525 = vmatprep.subr.bf16.mxu0 %v2427
        %3526 = vmatpush1.bf16.msra.mxu0 %v2426
        %3527 = vmatprep.subr.bf16.mxu0 %v2431
        %3528 = vmatpush1.bf16.msra.mxu0 %v2430
        %3529 = vmatprep.subr.bf16.mxu0 %v2435
        %3530 = vmatpush1.bf16.msra.mxu0 %v2434
        %3531 = vmatprep.subr.bf16.mxu0 %v2439
        %3532 = vmatpush1.bf16.msra.mxu0 %v2438
        %3533 = vmatprep.subr.bf16.mxu0 %v2443
        %3534 = vmatpush1.bf16.msra.mxu0 %v2442
        %3535 = vmatprep.subr.bf16.mxu0 %v2447
        %3536 = vmatpush1.bf16.msra.mxu0 %v2446
        %3537 = vmatprep.mubr.bf16.mxu0 %v3025
        %3538 = vmatmul.mubr.bf16.gmra.mrb[0].mxu0 %v3024
        %v3539 = vpop.f32.mrb[0].mxu0
        %v3540 = vadd.f32 %v2515, %v3539
        %v3541 = vpop.f32.mrb[0].mxu0
        %v3542 = vadd.f32 %v2515, %v3541
        %v3543 = vpop.f32.mrb[0].mxu0
        %v3544 = vadd.f32 %v2520, %v3543
        %v3545 = vpop.f32.mrb[0].mxu0
        %v3546 = vadd.f32 %v2520, %v3545
        %3547 = vmatprep.mubr.bf16.mxu0 %v3027
        %3548 = vmatmul.mubr.bf16.gmra.mrb[0].mxu0 %v3026
        %v3549 = vpop.f32.mrb[0].mxu0
        %v3550 = vadd.f32 %v2525, %v3549
        %v3551 = vpop.f32.mrb[0].mxu0
        %v3552 = vadd.f32 %v2525, %v3551
        %v3553 = vpop.f32.mrb[0].mxu0
        %v3554 = vadd.f32 %v2530, %v3553
        %v3555 = vpop.f32.mrb[0].mxu0
        %v3556 = vadd.f32 %v2530, %v3555
        %3557 = vmatprep.mubr.bf16.mxu0 %v3029
        %3558 = vmatmul.mubr.bf16.gmra.mrb[0].mxu0 %v3028
        %v3559 = vpop.f32.mrb[0].mxu0
        %v3560 = vadd.f32 %v2535, %v3559
        %v3561 = vpop.f32.mrb[0].mxu0
        %v3562 = vadd.f32 %v2535, %v3561
        %v3563 = vpop.f32.mrb[0].mxu0
        %v3564 = vadd.f32 %v2540, %v3563
        %v3565 = vpop.f32.mrb[0].mxu0
        %v3566 = vadd.f32 %v2540, %v3565
        %3567 = vmatprep.mubr.bf16.mxu0 %v3031
        %3568 = vmatmul.mubr.bf16.gmra.mrb[0].mxu0 %v3030
        %v3569 = vpop.f32.mrb[0].mxu0
        %v3570 = vadd.f32 %v2545, %v3569
        %v3571 = vpop.f32.mrb[0].mxu0
        %v3572 = vadd.f32 %v2545, %v3571
        %v3573 = vpop.f32.mrb[0].mxu0
        %v3574 = vadd.f32 %v2550, %v3573
        %v3575 = vpop.f32.mrb[0].mxu0
        %v3576 = vadd.f32 %v2550, %v3575
        %3577 = vmatprep.mubr.bf16.mxu0 %v3033
        %3578 = vmatmul.mubr.bf16.gmra.mrb[0].mxu0 %v3032
        %v3579 = vpop.f32.mrb[0].mxu0
        %v3580 = vadd.f32 %v2555, %v3579
        %v3581 = vpop.f32.mrb[0].mxu0
        %v3582 = vadd.f32 %v2555, %v3581
        %v3583 = vpop.f32.mrb[0].mxu0
        %v3584 = vadd.f32 %v2560, %v3583
        %v3585 = vpop.f32.mrb[0].mxu0
        %v3586 = vadd.f32 %v2560, %v3585
        %3587 = vmatprep.mubr.bf16.mxu0 %v3035
        %3588 = vmatmul.mubr.bf16.gmra.mrb[0].mxu0 %v3034
        %v3589 = vpop.f32.mrb[0].mxu0
        %v3590 = vadd.f32 %v2565, %v3589
        %v3591 = vpop.f32.mrb[0].mxu0
        %v3592 = vadd.f32 %v2565, %v3591
        %v3593 = vpop.f32.mrb[0].mxu0
        %v3594 = vadd.f32 %v2570, %v3593
        %v3595 = vpop.f32.mrb[0].mxu0
        %v3596 = vadd.f32 %v2570, %v3595
        %3597 = vmatprep.mubr.bf16.mxu0 %v3037
        %3598 = vmatmul.mubr.bf16.gmra.mrb[0].mxu0 %v3036
        %v3599 = vpop.f32.mrb[0].mxu0
        %v3600 = vadd.f32 %v2575, %v3599
        %v3601 = vpop.f32.mrb[0].mxu0
        %v3602 = vadd.f32 %v2575, %v3601
        %v3603 = vpop.f32.mrb[0].mxu0
        %v3604 = vadd.f32 %v2580, %v3603
        %v3605 = vpop.f32.mrb[0].mxu0
        %v3606 = vadd.f32 %v2580, %v3605
        %3607 = vmatprep.mubr.bf16.mxu0 %v3039
        %3608 = vmatmul.mubr.bf16.gmra.mrb[0].mxu0 %v3038
        %v3609 = vpop.f32.mrb[0].mxu0
        %v3610 = vadd.f32 %v2585, %v3609
        %v3611 = vpop.f32.mrb[0].mxu0
        %v3612 = vadd.f32 %v2585, %v3611
        %v3613 = vpop.f32.mrb[0].mxu0
        %v3614 = vadd.f32 %v2590, %v3613
        %v3615 = vpop.f32.mrb[0].mxu0
        %v3616 = vadd.f32 %v2590, %v3615
        %3617 = vmatprep.mubr.bf16.mxu0 %v3041
        %3618 = vmatmul.mubr.bf16.gmra.mrb[0].mxu0 %v3040
        %v3619 = vpop.f32.mrb[0].mxu0
        %v3620 = vadd.f32 %v2595, %v3619
        %v3621 = vpop.f32.mrb[0].mxu0
        %v3622 = vadd.f32 %v2595, %v3621
        %v3623 = vpop.f32.mrb[0].mxu0
        %v3624 = vadd.f32 %v2600, %v3623
        %v3625 = vpop.f32.mrb[0].mxu0
        %v3626 = vadd.f32 %v2600, %v3625
        %3627 = vmatprep.mubr.bf16.mxu0 %v3043
        %3628 = vmatmul.mubr.bf16.gmra.mrb[0].mxu0 %v3042
        %v3629 = vpop.f32.mrb[0].mxu0
        %v3630 = vadd.f32 %v2605, %v3629
        %v3631 = vpop.f32.mrb[0].mxu0
        %v3632 = vadd.f32 %v2605, %v3631
        %v3633 = vpop.f32.mrb[0].mxu0
        %v3634 = vadd.f32 %v2610, %v3633
        %v3635 = vpop.f32.mrb[0].mxu0
        %v3636 = vadd.f32 %v2610, %v3635
        %3637 = vmatprep.mubr.bf16.mxu0 %v3045
        %3638 = vmatmul.mubr.bf16.gmra.mrb[0].mxu0 %v3044
        %v3639 = vpop.f32.mrb[0].mxu0
        %v3640 = vadd.f32 %v2615, %v3639
        %v3641 = vpop.f32.mrb[0].mxu0
        %v3642 = vadd.f32 %v2615, %v3641
        %v3643 = vpop.f32.mrb[0].mxu0
        %v3644 = vadd.f32 %v2620, %v3643
        %v3645 = vpop.f32.mrb[0].mxu0
        %v3646 = vadd.f32 %v2620, %v3645
        %3647 = vmatprep.mubr.bf16.mxu0 %v3047
        %3648 = vmatmul.mubr.bf16.gmra.mrb[0].mxu0 %v3046
        %v3649 = vpop.f32.mrb[0].mxu0
        %v3650 = vadd.f32 %v2625, %v3649
        %v3651 = vpop.f32.mrb[0].mxu0
        %v3652 = vadd.f32 %v2625, %v3651
        %v3653 = vpop.f32.mrb[0].mxu0
        %v3654 = vadd.f32 %v2630, %v3653
        %v3655 = vpop.f32.mrb[0].mxu0
        %v3656 = vadd.f32 %v2630, %v3655
        %3657 = vmatprep.mubr.bf16.mxu0 %v3049
        %3658 = vmatmul.mubr.bf16.gmra.mrb[0].mxu0 %v3048
        %v3659 = vpop.f32.mrb[0].mxu0
        %v3660 = vadd.f32 %v2635, %v3659
        %v3661 = vpop.f32.mrb[0].mxu0
        %v3662 = vadd.f32 %v2635, %v3661
        %v3663 = vpop.f32.mrb[0].mxu0
        %v3664 = vadd.f32 %v2640, %v3663
        %v3665 = vpop.f32.mrb[0].mxu0
        %v3666 = vadd.f32 %v2640, %v3665
        %3667 = vmatprep.mubr.bf16.mxu0 %v3051
        %3668 = vmatmul.mubr.bf16.gmra.mrb[0].mxu0 %v3050
        %v3669 = vpop.f32.mrb[0].mxu0
        %v3670 = vadd.f32 %v2645, %v3669
        %v3671 = vpop.f32.mrb[0].mxu0
        %v3672 = vadd.f32 %v2645, %v3671
        %v3673 = vpop.f32.mrb[0].mxu0
        %v3674 = vadd.f32 %v2650, %v3673
        %v3675 = vpop.f32.mrb[0].mxu0
        %v3676 = vadd.f32 %v2650, %v3675
        %3677 = vmatprep.mubr.bf16.mxu0 %v3053
        %3678 = vmatmul.mubr.bf16.gmra.mrb[0].mxu0 %v3052
        %v3679 = vpop.f32.mrb[0].mxu0
        %v3680 = vadd.f32 %v2655, %v3679
        %v3681 = vpop.f32.mrb[0].mxu0
        %v3682 = vadd.f32 %v2655, %v3681
        %v3683 = vpop.f32.mrb[0].mxu0
        %v3684 = vadd.f32 %v2660, %v3683
        %v3685 = vpop.f32.mrb[0].mxu0
        %v3686 = vadd.f32 %v2660, %v3685
        %3687 = vmatprep.mubr.bf16.mxu0 %v3055
        %3688 = vmatmul.mubr.bf16.gmra.mrb[0].mxu0 %v3054
        %v3689 = vpop.f32.mrb[0].mxu0
        %v3690 = vadd.f32 %v2665, %v3689
        %v3691 = vpop.f32.mrb[0].mxu0
        %v3692 = vadd.f32 %v2665, %v3691
        %v3693 = vpop.f32.mrb[0].mxu0
        %v3694 = vadd.f32 %v2670, %v3693
        %v3695 = vpop.f32.mrb[0].mxu0
        %v3696 = vadd.f32 %v2670, %v3695
        %3697 = vmatprep.mubr.bf16.mxu0 %v3057
        %3698 = vmatmul.mubr.bf16.gmra.mrb[0].mxu0 %v3056
        %v3699 = vpop.f32.mrb[0].mxu0
        %v3700 = vadd.f32 %v2675, %v3699
        %v3701 = vpop.f32.mrb[0].mxu0
        %v3702 = vadd.f32 %v2675, %v3701
        %v3703 = vpop.f32.mrb[0].mxu0
        %v3704 = vadd.f32 %v2680, %v3703
        %v3705 = vpop.f32.mrb[0].mxu0
        %v3706 = vadd.f32 %v2680, %v3705
        %3707 = vmatprep.mubr.bf16.mxu0 %v3059
        %3708 = vmatmul.mubr.bf16.gmra.mrb[0].mxu0 %v3058
        %v3709 = vpop.f32.mrb[0].mxu0
        %v3710 = vadd.f32 %v2685, %v3709
        %v3711 = vpop.f32.mrb[0].mxu0
        %v3712 = vadd.f32 %v2685, %v3711
        %v3713 = vpop.f32.mrb[0].mxu0
        %v3714 = vadd.f32 %v2690, %v3713
        %v3715 = vpop.f32.mrb[0].mxu0
        %v3716 = vadd.f32 %v2690, %v3715
        %3717 = vmatprep.mubr.bf16.mxu0 %v3061
        %3718 = vmatmul.mubr.bf16.gmra.mrb[0].mxu0 %v3060
        %v3719 = vpop.f32.mrb[0].mxu0
        %v3720 = vadd.f32 %v2695, %v3719
        %v3721 = vpop.f32.mrb[0].mxu0
        %v3722 = vadd.f32 %v2695, %v3721
        %v3723 = vpop.f32.mrb[0].mxu0
        %v3724 = vadd.f32 %v2700, %v3723
        %v3725 = vpop.f32.mrb[0].mxu0
        %v3726 = vadd.f32 %v2700, %v3725
        %3727 = vmatprep.mubr.bf16.mxu0 %v3063
        %3728 = vmatmul.mubr.bf16.gmra.mrb[0].mxu0 %v3062
        %v3729 = vpop.f32.mrb[0].mxu0
        %v3730 = vadd.f32 %v2705, %v3729
        %v3731 = vpop.f32.mrb[0].mxu0
        %v3732 = vadd.f32 %v2705, %v3731
        %v3733 = vpop.f32.mrb[0].mxu0
        %v3734 = vadd.f32 %v2710, %v3733
        %v3735 = vpop.f32.mrb[0].mxu0
        %v3736 = vadd.f32 %v2710, %v3735
        %3737 = vmatprep.mubr.bf16.mxu0 %v3065
        %3738 = vmatmul.mubr.bf16.gmra.mrb[0].mxu0 %v3064
        %v3739 = vpop.f32.mrb[0].mxu0
        %v3740 = vadd.f32 %v2715, %v3739
        %v3741 = vpop.f32.mrb[0].mxu0
        %v3742 = vadd.f32 %v2715, %v3741
        %v3743 = vpop.f32.mrb[0].mxu0
        %v3744 = vadd.f32 %v2720, %v3743
        %v3745 = vpop.f32.mrb[0].mxu0
        %v3746 = vadd.f32 %v2720, %v3745
        %3747 = vmatprep.mubr.bf16.mxu0 %v3067
        %3748 = vmatmul.mubr.bf16.gmra.mrb[0].mxu0 %v3066
        %v3749 = vpop.f32.mrb[0].mxu0
        %v3750 = vadd.f32 %v2725, %v3749
        %v3751 = vpop.f32.mrb[0].mxu0
        %v3752 = vadd.f32 %v2725, %v3751
        %v3753 = vpop.f32.mrb[0].mxu0
        %v3754 = vadd.f32 %v2730, %v3753
        %v3755 = vpop.f32.mrb[0].mxu0
        %v3756 = vadd.f32 %v2730, %v3755
        %3757 = vmatprep.mubr.bf16.mxu0 %v3069
        %3758 = vmatmul.mubr.bf16.gmra.mrb[0].mxu0 %v3068
        %v3759 = vpop.f32.mrb[0].mxu0
        %v3760 = vadd.f32 %v2735, %v3759
        %v3761 = vpop.f32.mrb[0].mxu0
        %v3762 = vadd.f32 %v2735, %v3761
        %v3763 = vpop.f32.mrb[0].mxu0
        %v3764 = vadd.f32 %v2740, %v3763
        %v3765 = vpop.f32.mrb[0].mxu0
        %v3766 = vadd.f32 %v2740, %v3765
        %3767 = vmatprep.mubr.bf16.mxu0 %v3071
        %3768 = vmatmul.mubr.bf16.gmra.mrb[0].mxu0 %v3070
        %v3769 = vpop.f32.mrb[0].mxu0
        %v3770 = vadd.f32 %v2745, %v3769
        %v3771 = vpop.f32.mrb[0].mxu0
        %v3772 = vadd.f32 %v2745, %v3771
        %v3773 = vpop.f32.mrb[0].mxu0
        %v3774 = vadd.f32 %v2750, %v3773
        %v3775 = vpop.f32.mrb[0].mxu0
        %v3776 = vadd.f32 %v2750, %v3775
        %3777 = vmatprep.mubr.bf16.mxu0 %v3073
        %3778 = vmatmul.mubr.bf16.gmra.mrb[0].mxu0 %v3072
        %v3779 = vpop.f32.mrb[0].mxu0
        %v3780 = vadd.f32 %v2755, %v3779
        %v3781 = vpop.f32.mrb[0].mxu0
        %v3782 = vadd.f32 %v2755, %v3781
        %v3783 = vpop.f32.mrb[0].mxu0
        %v3784 = vadd.f32 %v2760, %v3783
        %v3785 = vpop.f32.mrb[0].mxu0
        %v3786 = vadd.f32 %v2760, %v3785
        %3787 = vmatprep.mubr.bf16.mxu0 %v3075
        %3788 = vmatmul.mubr.bf16.gmra.mrb[0].mxu0 %v3074
        %v3789 = vpop.f32.mrb[0].mxu0
        %v3790 = vadd.f32 %v2765, %v3789
        %v3791 = vpop.f32.mrb[0].mxu0
        %v3792 = vadd.f32 %v2765, %v3791
        %v3793 = vpop.f32.mrb[0].mxu0
        %v3794 = vadd.f32 %v2770, %v3793
        %v3795 = vpop.f32.mrb[0].mxu0
        %v3796 = vadd.f32 %v2770, %v3795
        %3797 = vmatprep.mubr.bf16.mxu0 %v3077
        %3798 = vmatmul.mubr.bf16.gmra.mrb[0].mxu0 %v3076
        %v3799 = vpop.f32.mrb[0].mxu0
        %v3800 = vadd.f32 %v2775, %v3799
        %v3801 = vpop.f32.mrb[0].mxu0
        %v3802 = vadd.f32 %v2775, %v3801
        %v3803 = vpop.f32.mrb[0].mxu0
        %v3804 = vadd.f32 %v2780, %v3803
        %v3805 = vpop.f32.mrb[0].mxu0
        %v3806 = vadd.f32 %v2780, %v3805
        %3807 = vmatprep.mubr.bf16.mxu0 %v3079
        %3808 = vmatmul.mubr.bf16.gmra.mrb[0].mxu0 %v3078
        %v3809 = vpop.f32.mrb[0].mxu0
        %v3810 = vadd.f32 %v2785, %v3809
        %v3811 = vpop.f32.mrb[0].mxu0
        %v3812 = vadd.f32 %v2785, %v3811
        %v3813 = vpop.f32.mrb[0].mxu0
        %v3814 = vadd.f32 %v2790, %v3813
        %v3815 = vpop.f32.mrb[0].mxu0
        %v3816 = vadd.f32 %v2790, %v3815
        %3817 = vmatprep.mubr.bf16.mxu0 %v3081
        %3818 = vmatmul.mubr.bf16.gmra.mrb[0].mxu0 %v3080
        %v3819 = vpop.f32.mrb[0].mxu0
        %v3820 = vadd.f32 %v2795, %v3819
        %v3821 = vpop.f32.mrb[0].mxu0
        %v3822 = vadd.f32 %v2795, %v3821
        %v3823 = vpop.f32.mrb[0].mxu0
        %v3824 = vadd.f32 %v2800, %v3823
        %v3825 = vpop.f32.mrb[0].mxu0
        %v3826 = vadd.f32 %v2800, %v3825
        %3827 = vmatprep.mubr.bf16.mxu0 %v3083
        %3828 = vmatmul.mubr.bf16.gmra.mrb[0].mxu0 %v3082
        %v3829 = vpop.f32.mrb[0].mxu0
        %v3830 = vadd.f32 %v2805, %v3829
        %v3831 = vpop.f32.mrb[0].mxu0
        %v3832 = vadd.f32 %v2805, %v3831
        %v3833 = vpop.f32.mrb[0].mxu0
        %v3834 = vadd.f32 %v2810, %v3833
        %v3835 = vpop.f32.mrb[0].mxu0
        %v3836 = vadd.f32 %v2810, %v3835
        %3837 = vmatprep.mubr.bf16.mxu0 %v3085
        %3838 = vmatmul.mubr.bf16.gmra.mrb[0].mxu0 %v3084
        %v3839 = vpop.f32.mrb[0].mxu0
        %v3840 = vadd.f32 %v2815, %v3839
        %v3841 = vpop.f32.mrb[0].mxu0
        %v3842 = vadd.f32 %v2815, %v3841
        %v3843 = vpop.f32.mrb[0].mxu0
        %v3844 = vadd.f32 %v2820, %v3843
        %v3845 = vpop.f32.mrb[0].mxu0
        %v3846 = vadd.f32 %v2820, %v3845
        %3847 = vmatprep.mubr.bf16.mxu0 %v3087
        %3848 = vmatmul.mubr.bf16.gmra.mrb[0].mxu0 %v3086
        %v3849 = vpop.f32.mrb[0].mxu0
        %v3850 = vadd.f32 %v2825, %v3849
        %v3851 = vpop.f32.mrb[0].mxu0
        %v3852 = vadd.f32 %v2825, %v3851
        %v3853 = vpop.f32.mrb[0].mxu0
        %v3854 = vadd.f32 %v2830, %v3853
        %v3855 = vpop.f32.mrb[0].mxu0
        %v3856 = vadd.f32 %v2830, %v3855
        %3857 = vdwg.mxu0
        %v3858 = vmax.f32 %v3187, 0.0
        %v3859 = vmax.f32 %v3189, 0.0
        %v3860 = vmax.f32 %v3540, 0.0
        %v3861 = vmax.f32 %v3542, 0.0
        %v3862 = vmax.f32 %v3191, 0.0
        %v3863 = vmax.f32 %v3193, 0.0
        %v3864 = vmax.f32 %v3544, 0.0
        %v3865 = vmax.f32 %v3546, 0.0
        %v3866 = vmax.f32 %v3197, 0.0
        %v3867 = vmax.f32 %v3199, 0.0
        %v3868 = vmax.f32 %v3550, 0.0
        %v3869 = vmax.f32 %v3552, 0.0
        %v3870 = vmax.f32 %v3201, 0.0
        %v3871 = vmax.f32 %v3203, 0.0
        %v3872 = vmax.f32 %v3554, 0.0
        %v3873 = vmax.f32 %v3556, 0.0
        %v3874 = vmax.f32 %v3207, 0.0
        %v3875 = vmax.f32 %v3209, 0.0
        %v3876 = vmax.f32 %v3560, 0.0
        %v3877 = vmax.f32 %v3562, 0.0
        %v3878 = vmax.f32 %v3211, 0.0
        %v3879 = vmax.f32 %v3213, 0.0
        %v3880 = vmax.f32 %v3564, 0.0
        %v3881 = vmax.f32 %v3566, 0.0
        %v3882 = vmax.f32 %v3217, 0.0
        %v3883 = vmax.f32 %v3219, 0.0
        %v3884 = vmax.f32 %v3570, 0.0
        %v3885 = vmax.f32 %v3572, 0.0
        %v3886 = vmax.f32 %v3221, 0.0
        %v3887 = vmax.f32 %v3223, 0.0
        %v3888 = vmax.f32 %v3574, 0.0
        %v3889 = vmax.f32 %v3576, 0.0
        %v3890 = vmax.f32 %v3227, 0.0
        %v3891 = vmax.f32 %v3229, 0.0
        %v3892 = vmax.f32 %v3580, 0.0
        %v3893 = vmax.f32 %v3582, 0.0
        %v3894 = vmax.f32 %v3231, 0.0
        %v3895 = vmax.f32 %v3233, 0.0
        %v3896 = vmax.f32 %v3584, 0.0
        %v3897 = vmax.f32 %v3586, 0.0
        %v3898 = vmax.f32 %v3237, 0.0
        %v3899 = vmax.f32 %v3239, 0.0
        %v3900 = vmax.f32 %v3590, 0.0
        %v3901 = vmax.f32 %v3592, 0.0
        %v3902 = vmax.f32 %v3241, 0.0
        %v3903 = vmax.f32 %v3243, 0.0
        %v3904 = vmax.f32 %v3594, 0.0
        %v3905 = vmax.f32 %v3596, 0.0
        %v3906 = vmax.f32 %v3247, 0.0
        %v3907 = vmax.f32 %v3249, 0.0
        %v3908 = vmax.f32 %v3600, 0.0
        %v3909 = vmax.f32 %v3602, 0.0
        %v3910 = vmax.f32 %v3251, 0.0
        %v3911 = vmax.f32 %v3253, 0.0
        %v3912 = vmax.f32 %v3604, 0.0
        %v3913 = vmax.f32 %v3606, 0.0
        %v3914 = vmax.f32 %v3257, 0.0
        %v3915 = vmax.f32 %v3259, 0.0
        %v3916 = vmax.f32 %v3610, 0.0
        %v3917 = vmax.f32 %v3612, 0.0
        %v3918 = vmax.f32 %v3261, 0.0
        %v3919 = vmax.f32 %v3263, 0.0
        %v3920 = vmax.f32 %v3614, 0.0
        %v3921 = vmax.f32 %v3616, 0.0
        %v3922 = vmax.f32 %v3267, 0.0
        %v3923 = vmax.f32 %v3269, 0.0
        %v3924 = vmax.f32 %v3620, 0.0
        %v3925 = vmax.f32 %v3622, 0.0
        %v3926 = vmax.f32 %v3271, 0.0
        %v3927 = vmax.f32 %v3273, 0.0
        %v3928 = vmax.f32 %v3624, 0.0
        %v3929 = vmax.f32 %v3626, 0.0
        %v3930 = vmax.f32 %v3277, 0.0
        %v3931 = vmax.f32 %v3279, 0.0
        %v3932 = vmax.f32 %v3630, 0.0
        %v3933 = vmax.f32 %v3632, 0.0
        %v3934 = vmax.f32 %v3281, 0.0
        %v3935 = vmax.f32 %v3283, 0.0
        %v3936 = vmax.f32 %v3634, 0.0
        %v3937 = vmax.f32 %v3636, 0.0
        %v3938 = vmax.f32 %v3287, 0.0
        %v3939 = vmax.f32 %v3289, 0.0
        %v3940 = vmax.f32 %v3640, 0.0
        %v3941 = vmax.f32 %v3642, 0.0
        %v3942 = vmax.f32 %v3291, 0.0
        %v3943 = vmax.f32 %v3293, 0.0
        %v3944 = vmax.f32 %v3644, 0.0
        %v3945 = vmax.f32 %v3646, 0.0
        %v3946 = vmax.f32 %v3297, 0.0
        %v3947 = vmax.f32 %v3299, 0.0
        %v3948 = vmax.f32 %v3650, 0.0
        %v3949 = vmax.f32 %v3652, 0.0
        %v3950 = vmax.f32 %v3301, 0.0
        %v3951 = vmax.f32 %v3303, 0.0
        %v3952 = vmax.f32 %v3654, 0.0
        %v3953 = vmax.f32 %v3656, 0.0
        %v3954 = vmax.f32 %v3307, 0.0
        %v3955 = vmax.f32 %v3309, 0.0
        %v3956 = vmax.f32 %v3660, 0.0
        %v3957 = vmax.f32 %v3662, 0.0
        %v3958 = vmax.f32 %v3311, 0.0
        %v3959 = vmax.f32 %v3313, 0.0
        %v3960 = vmax.f32 %v3664, 0.0
        %v3961 = vmax.f32 %v3666, 0.0
        %v3962 = vmax.f32 %v3317, 0.0
        %v3963 = vmax.f32 %v3319, 0.0
        %v3964 = vmax.f32 %v3670, 0.0
        %v3965 = vmax.f32 %v3672, 0.0
        %v3966 = vmax.f32 %v3321, 0.0
        %v3967 = vmax.f32 %v3323, 0.0
        %v3968 = vmax.f32 %v3674, 0.0
        %v3969 = vmax.f32 %v3676, 0.0
        %v3970 = vmax.f32 %v3327, 0.0
        %v3971 = vmax.f32 %v3329, 0.0
        %v3972 = vmax.f32 %v3680, 0.0
        %v3973 = vmax.f32 %v3682, 0.0
        %v3974 = vmax.f32 %v3331, 0.0
        %v3975 = vmax.f32 %v3333, 0.0
        %v3976 = vmax.f32 %v3684, 0.0
        %v3977 = vmax.f32 %v3686, 0.0
        %v3978 = vmax.f32 %v3337, 0.0
        %v3979 = vmax.f32 %v3339, 0.0
        %v3980 = vmax.f32 %v3690, 0.0
        %v3981 = vmax.f32 %v3692, 0.0
        %v3982 = vmax.f32 %v3341, 0.0
        %v3983 = vmax.f32 %v3343, 0.0
        %v3984 = vmax.f32 %v3694, 0.0
        %v3985 = vmax.f32 %v3696, 0.0
        %v3986 = vmax.f32 %v3347, 0.0
        %v3987 = vmax.f32 %v3349, 0.0
        %v3988 = vmax.f32 %v3700, 0.0
        %v3989 = vmax.f32 %v3702, 0.0
        %v3990 = vmax.f32 %v3351, 0.0
        %v3991 = vmax.f32 %v3353, 0.0
        %v3992 = vmax.f32 %v3704, 0.0
        %v3993 = vmax.f32 %v3706, 0.0
        %v3994 = vmax.f32 %v3357, 0.0
        %v3995 = vmax.f32 %v3359, 0.0
        %v3996 = vmax.f32 %v3710, 0.0
        %v3997 = vmax.f32 %v3712, 0.0
        %v3998 = vmax.f32 %v3361, 0.0
        %v3999 = vmax.f32 %v3363, 0.0
        %v4000 = vmax.f32 %v3714, 0.0
        %v4001 = vmax.f32 %v3716, 0.0
        %v4002 = vmax.f32 %v3367, 0.0
        %v4003 = vmax.f32 %v3369, 0.0
        %v4004 = vmax.f32 %v3720, 0.0
        %v4005 = vmax.f32 %v3722, 0.0
        %v4006 = vmax.f32 %v3371, 0.0
        %v4007 = vmax.f32 %v3373, 0.0
        %v4008 = vmax.f32 %v3724, 0.0
        %v4009 = vmax.f32 %v3726, 0.0
        %v4010 = vmax.f32 %v3377, 0.0
        %v4011 = vmax.f32 %v3379, 0.0
        %v4012 = vmax.f32 %v3730, 0.0
        %v4013 = vmax.f32 %v3732, 0.0
        %v4014 = vmax.f32 %v3381, 0.0
        %v4015 = vmax.f32 %v3383, 0.0
        %v4016 = vmax.f32 %v3734, 0.0
        %v4017 = vmax.f32 %v3736, 0.0
        %v4018 = vmax.f32 %v3387, 0.0
        %v4019 = vmax.f32 %v3389, 0.0
        %v4020 = vmax.f32 %v3740, 0.0
        %v4021 = vmax.f32 %v3742, 0.0
        %v4022 = vmax.f32 %v3391, 0.0
        %v4023 = vmax.f32 %v3393, 0.0
        %v4024 = vmax.f32 %v3744, 0.0
        %v4025 = vmax.f32 %v3746, 0.0
        %v4026 = vmax.f32 %v3397, 0.0
        %v4027 = vmax.f32 %v3399, 0.0
        %v4028 = vmax.f32 %v3750, 0.0
        %v4029 = vmax.f32 %v3752, 0.0
        %v4030 = vmax.f32 %v3401, 0.0
        %v4031 = vmax.f32 %v3403, 0.0
        %v4032 = vmax.f32 %v3754, 0.0
        %v4033 = vmax.f32 %v3756, 0.0
        %v4034 = vmax.f32 %v3407, 0.0
        %v4035 = vmax.f32 %v3409, 0.0
        %v4036 = vmax.f32 %v3760, 0.0
        %v4037 = vmax.f32 %v3762, 0.0
        %v4038 = vmax.f32 %v3411, 0.0
        %v4039 = vmax.f32 %v3413, 0.0
        %v4040 = vmax.f32 %v3764, 0.0
        %v4041 = vmax.f32 %v3766, 0.0
        %v4042 = vmax.f32 %v3417, 0.0
        %v4043 = vmax.f32 %v3419, 0.0
        %v4044 = vmax.f32 %v3770, 0.0
        %v4045 = vmax.f32 %v3772, 0.0
        %v4046 = vmax.f32 %v3421, 0.0
        %v4047 = vmax.f32 %v3423, 0.0
        %v4048 = vmax.f32 %v3774, 0.0
        %v4049 = vmax.f32 %v3776, 0.0
        %v4050 = vmax.f32 %v3427, 0.0
        %v4051 = vmax.f32 %v3429, 0.0
        %v4052 = vmax.f32 %v3780, 0.0
        %v4053 = vmax.f32 %v3782, 0.0
        %v4054 = vmax.f32 %v3431, 0.0
        %v4055 = vmax.f32 %v3433, 0.0
        %v4056 = vmax.f32 %v3784, 0.0
        %v4057 = vmax.f32 %v3786, 0.0
        %v4058 = vmax.f32 %v3437, 0.0
        %v4059 = vmax.f32 %v3439, 0.0
        %v4060 = vmax.f32 %v3790, 0.0
        %v4061 = vmax.f32 %v3792, 0.0
        %v4062 = vmax.f32 %v3441, 0.0
        %v4063 = vmax.f32 %v3443, 0.0
        %v4064 = vmax.f32 %v3794, 0.0
        %v4065 = vmax.f32 %v3796, 0.0
        %v4066 = vmax.f32 %v3447, 0.0
        %v4067 = vmax.f32 %v3449, 0.0
        %v4068 = vmax.f32 %v3800, 0.0
        %v4069 = vmax.f32 %v3802, 0.0
        %v4070 = vmax.f32 %v3451, 0.0
        %v4071 = vmax.f32 %v3453, 0.0
        %v4072 = vmax.f32 %v3804, 0.0
        %v4073 = vmax.f32 %v3806, 0.0
        %v4074 = vmax.f32 %v3457, 0.0
        %v4075 = vmax.f32 %v3459, 0.0
        %v4076 = vmax.f32 %v3810, 0.0
        %v4077 = vmax.f32 %v3812, 0.0
        %v4078 = vmax.f32 %v3461, 0.0
        %v4079 = vmax.f32 %v3463, 0.0
        %v4080 = vmax.f32 %v3814, 0.0
        %v4081 = vmax.f32 %v3816, 0.0
        %v4082 = vmax.f32 %v3467, 0.0
        %v4083 = vmax.f32 %v3469, 0.0
        %v4084 = vmax.f32 %v3820, 0.0
        %v4085 = vmax.f32 %v3822, 0.0
        %v4086 = vmax.f32 %v3471, 0.0
        %v4087 = vmax.f32 %v3473, 0.0
        %v4088 = vmax.f32 %v3824, 0.0
        %v4089 = vmax.f32 %v3826, 0.0
        %v4090 = vmax.f32 %v3477, 0.0
        %v4091 = vmax.f32 %v3479, 0.0
        %v4092 = vmax.f32 %v3830, 0.0
        %v4093 = vmax.f32 %v3832, 0.0
        %v4094 = vmax.f32 %v3481, 0.0
        %v4095 = vmax.f32 %v3483, 0.0
        %v4096 = vmax.f32 %v3834, 0.0
        %v4097 = vmax.f32 %v3836, 0.0
        %v4098 = vmax.f32 %v3487, 0.0
        %v4099 = vmax.f32 %v3489, 0.0
        %v4100 = vmax.f32 %v3840, 0.0
        %v4101 = vmax.f32 %v3842, 0.0
        %v4102 = vmax.f32 %v3491, 0.0
        %v4103 = vmax.f32 %v3493, 0.0
        %v4104 = vmax.f32 %v3844, 0.0
        %v4105 = vmax.f32 %v3846, 0.0
        %v4106 = vmax.f32 %v3497, 0.0
        %v4107 = vmax.f32 %v3499, 0.0
        %v4108 = vmax.f32 %v3850, 0.0
        %v4109 = vmax.f32 %v3852, 0.0
        %v4110 = vmax.f32 %v3501, 0.0
        %v4111 = vmax.f32 %v3503, 0.0
        %v4112 = vmax.f32 %v3854, 0.0
        %v4113 = vmax.f32 %v3856, 0.0
        %4114 = vst [vmem:[%s472] sm:$0xff] %v3858
        %4115 = vst [vmem:[%s472 + $0x8] sm:$0xff] %v3859
        %4116 = vst [vmem:[%s472 + $0x10] sm:$0xff] %v3860
        %4117 = vst [vmem:[%s472 + $0x18] sm:$0xff] %v3861
        %4118 = vst [vmem:[%s472 + $0x20] sm:$0xff] %v3862
        %4119 = vst [vmem:[%s472 + $0x28] sm:$0xff] %v3863
        %4120 = vst [vmem:[%s472 + $0x30] sm:$0xff] %v3864
        %4121 = vst [vmem:[%s472 + $0x38] sm:$0xff] %v3865
        %4122 = vst [vmem:[%s472 + $0x40] sm:$0xff] %v3866
        %4123 = vst [vmem:[%s472 + $0x48] sm:$0xff] %v3867
        %4124 = vst [vmem:[%s472 + $0x50] sm:$0xff] %v3868
        %4125 = vst [vmem:[%s472 + $0x58] sm:$0xff] %v3869
        %4126 = vst [vmem:[%s472 + $0x60] sm:$0xff] %v3870
        %4127 = vst [vmem:[%s472 + $0x68] sm:$0xff] %v3871
        %4128 = vst [vmem:[%s472 + $0x70] sm:$0xff] %v3872
        %4129 = vst [vmem:[%s472 + $0x78] sm:$0xff] %v3873
        %4130 = vst [vmem:[%s472 + $0x80] sm:$0xff] %v3874
        %4131 = vst [vmem:[%s472 + $0x88] sm:$0xff] %v3875
        %4132 = vst [vmem:[%s472 + $0x90] sm:$0xff] %v3876
        %4133 = vst [vmem:[%s472 + $0x98] sm:$0xff] %v3877
        %4134 = vst [vmem:[%s472 + $0xa0] sm:$0xff] %v3878
        %4135 = vst [vmem:[%s472 + $0xa8] sm:$0xff] %v3879
        %4136 = vst [vmem:[%s472 + $0xb0] sm:$0xff] %v3880
        %4137 = vst [vmem:[%s472 + $0xb8] sm:$0xff] %v3881
        %4138 = vst [vmem:[%s472 + $0xc0] sm:$0xff] %v3882
        %4139 = vst [vmem:[%s472 + $0xc8] sm:$0xff] %v3883
        %4140 = vst [vmem:[%s472 + $0xd0] sm:$0xff] %v3884
        %4141 = vst [vmem:[%s472 + $0xd8] sm:$0xff] %v3885
        %4142 = vst [vmem:[%s472 + $0xe0] sm:$0xff] %v3886
        %4143 = vst [vmem:[%s472 + $0xe8] sm:$0xff] %v3887
        %4144 = vst [vmem:[%s472 + $0xf0] sm:$0xff] %v3888
        %4145 = vst [vmem:[%s472 + $0xf8] sm:$0xff] %v3889
        %4146 = vst [vmem:[%s472 + $0x100] sm:$0xff] %v3890
        %4147 = vst [vmem:[%s472 + $0x108] sm:$0xff] %v3891
        %4148 = vst [vmem:[%s472 + $0x110] sm:$0xff] %v3892
        %4149 = vst [vmem:[%s472 + $0x118] sm:$0xff] %v3893
        %4150 = vst [vmem:[%s472 + $0x120] sm:$0xff] %v3894
        %4151 = vst [vmem:[%s472 + $0x128] sm:$0xff] %v3895
        %4152 = vst [vmem:[%s472 + $0x130] sm:$0xff] %v3896
        %4153 = vst [vmem:[%s472 + $0x138] sm:$0xff] %v3897
        %4154 = vst [vmem:[%s472 + $0x140] sm:$0xff] %v3898
        %4155 = vst [vmem:[%s472 + $0x148] sm:$0xff] %v3899
        %4156 = vst [vmem:[%s472 + $0x150] sm:$0xff] %v3900
        %4157 = vst [vmem:[%s472 + $0x158] sm:$0xff] %v3901
        %4158 = vst [vmem:[%s472 + $0x160] sm:$0xff] %v3902
        %4159 = vst [vmem:[%s472 + $0x168] sm:$0xff] %v3903
        %4160 = vst [vmem:[%s472 + $0x170] sm:$0xff] %v3904
        %4161 = vst [vmem:[%s472 + $0x178] sm:$0xff] %v3905
        %4162 = vst [vmem:[%s472 + $0x180] sm:$0xff] %v3906
        %4163 = vst [vmem:[%s472 + $0x188] sm:$0xff] %v3907
        %4164 = vst [vmem:[%s472 + $0x190] sm:$0xff] %v3908
        %4165 = vst [vmem:[%s472 + $0x198] sm:$0xff] %v3909
        %4166 = vst [vmem:[%s472 + $0x1a0] sm:$0xff] %v3910
        %4167 = vst [vmem:[%s472 + $0x1a8] sm:$0xff] %v3911
        %4168 = vst [vmem:[%s472 + $0x1b0] sm:$0xff] %v3912
        %4169 = vst [vmem:[%s472 + $0x1b8] sm:$0xff] %v3913
        %4170 = vst [vmem:[%s472 + $0x1c0] sm:$0xff] %v3914
        %4171 = vst [vmem:[%s472 + $0x1c8] sm:$0xff] %v3915
        %4172 = vst [vmem:[%s472 + $0x1d0] sm:$0xff] %v3916
        %4173 = vst [vmem:[%s472 + $0x1d8] sm:$0xff] %v3917
        %4174 = vst [vmem:[%s472 + $0x1e0] sm:$0xff] %v3918
        %4175 = vst [vmem:[%s472 + $0x1e8] sm:$0xff] %v3919
        %4176 = vst [vmem:[%s472 + $0x1f0] sm:$0xff] %v3920
        %4177 = vst [vmem:[%s472 + $0x1f8] sm:$0xff] %v3921
        %4178 = vst [vmem:[%s472 + $0x200] sm:$0xff] %v3922
        %4179 = vst [vmem:[%s472 + $0x208] sm:$0xff] %v3923
        %4180 = vst [vmem:[%s472 + $0x210] sm:$0xff] %v3924
        %4181 = vst [vmem:[%s472 + $0x218] sm:$0xff] %v3925
        %4182 = vst [vmem:[%s472 + $0x220] sm:$0xff] %v3926
        %4183 = vst [vmem:[%s472 + $0x228] sm:$0xff] %v3927
        %4184 = vst [vmem:[%s472 + $0x230] sm:$0xff] %v3928
        %4185 = vst [vmem:[%s472 + $0x238] sm:$0xff] %v3929
        %4186 = vst [vmem:[%s472 + $0x240] sm:$0xff] %v3930
        %4187 = vst [vmem:[%s472 + $0x248] sm:$0xff] %v3931
        %4188 = vst [vmem:[%s472 + $0x250] sm:$0xff] %v3932
        %4189 = vst [vmem:[%s472 + $0x258] sm:$0xff] %v3933
        %4190 = vst [vmem:[%s472 + $0x260] sm:$0xff] %v3934
        %4191 = vst [vmem:[%s472 + $0x268] sm:$0xff] %v3935
        %4192 = vst [vmem:[%s472 + $0x270] sm:$0xff] %v3936
        %4193 = vst [vmem:[%s472 + $0x278] sm:$0xff] %v3937
        %4194 = vst [vmem:[%s472 + $0x280] sm:$0xff] %v3938
        %4195 = vst [vmem:[%s472 + $0x288] sm:$0xff] %v3939
        %4196 = vst [vmem:[%s472 + $0x290] sm:$0xff] %v3940
        %4197 = vst [vmem:[%s472 + $0x298] sm:$0xff] %v3941
        %4198 = vst [vmem:[%s472 + $0x2a0] sm:$0xff] %v3942
        %4199 = vst [vmem:[%s472 + $0x2a8] sm:$0xff] %v3943
        %4200 = vst [vmem:[%s472 + $0x2b0] sm:$0xff] %v3944
        %4201 = vst [vmem:[%s472 + $0x2b8] sm:$0xff] %v3945
        %4202 = vst [vmem:[%s472 + $0x2c0] sm:$0xff] %v3946
        %4203 = vst [vmem:[%s472 + $0x2c8] sm:$0xff] %v3947
        %4204 = vst [vmem:[%s472 + $0x2d0] sm:$0xff] %v3948
        %4205 = vst [vmem:[%s472 + $0x2d8] sm:$0xff] %v3949
        %4206 = vst [vmem:[%s472 + $0x2e0] sm:$0xff] %v3950
        %4207 = vst [vmem:[%s472 + $0x2e8] sm:$0xff] %v3951
        %4208 = vst [vmem:[%s472 + $0x2f0] sm:$0xff] %v3952
        %4209 = vst [vmem:[%s472 + $0x2f8] sm:$0xff] %v3953
        %4210 = vst [vmem:[%s472 + $0x300] sm:$0xff] %v3954
        %4211 = vst [vmem:[%s472 + $0x308] sm:$0xff] %v3955
        %4212 = vst [vmem:[%s472 + $0x310] sm:$0xff] %v3956
        %4213 = vst [vmem:[%s472 + $0x318] sm:$0xff] %v3957
        %4214 = vst [vmem:[%s472 + $0x320] sm:$0xff] %v3958
        %4215 = vst [vmem:[%s472 + $0x328] sm:$0xff] %v3959
        %4216 = vst [vmem:[%s472 + $0x330] sm:$0xff] %v3960
        %4217 = vst [vmem:[%s472 + $0x338] sm:$0xff] %v3961
        %4218 = vst [vmem:[%s472 + $0x340] sm:$0xff] %v3962
        %4219 = vst [vmem:[%s472 + $0x348] sm:$0xff] %v3963
        %4220 = vst [vmem:[%s472 + $0x350] sm:$0xff] %v3964
        %4221 = vst [vmem:[%s472 + $0x358] sm:$0xff] %v3965
        %4222 = vst [vmem:[%s472 + $0x360] sm:$0xff] %v3966
        %4223 = vst [vmem:[%s472 + $0x368] sm:$0xff] %v3967
        %4224 = vst [vmem:[%s472 + $0x370] sm:$0xff] %v3968
        %4225 = vst [vmem:[%s472 + $0x378] sm:$0xff] %v3969
        %4226 = vst [vmem:[%s472 + $0x380] sm:$0xff] %v3970
        %4227 = vst [vmem:[%s472 + $0x388] sm:$0xff] %v3971
        %4228 = vst [vmem:[%s472 + $0x390] sm:$0xff] %v3972
        %4229 = vst [vmem:[%s472 + $0x398] sm:$0xff] %v3973
        %4230 = vst [vmem:[%s472 + $0x3a0] sm:$0xff] %v3974
        %4231 = vst [vmem:[%s472 + $0x3a8] sm:$0xff] %v3975
        %4232 = vst [vmem:[%s472 + $0x3b0] sm:$0xff] %v3976
        %4233 = vst [vmem:[%s472 + $0x3b8] sm:$0xff] %v3977
        %4234 = vst [vmem:[%s472 + $0x3c0] sm:$0xff] %v3978
        %4235 = vst [vmem:[%s472 + $0x3c8] sm:$0xff] %v3979
        %4236 = vst [vmem:[%s472 + $0x3d0] sm:$0xff] %v3980
        %4237 = vst [vmem:[%s472 + $0x3d8] sm:$0xff] %v3981
        %4238 = vst [vmem:[%s472 + $0x3e0] sm:$0xff] %v3982
        %4239 = vst [vmem:[%s472 + $0x3e8] sm:$0xff] %v3983
        %4240 = vst [vmem:[%s472 + $0x3f0] sm:$0xff] %v3984
        %4241 = vst [vmem:[%s472 + $0x3f8] sm:$0xff] %v3985
        %4242 = vst [vmem:[%s472 + $0x400] sm:$0xff] %v3986
        %4243 = vst [vmem:[%s472 + $0x408] sm:$0xff] %v3987
        %4244 = vst [vmem:[%s472 + $0x410] sm:$0xff] %v3988
        %4245 = vst [vmem:[%s472 + $0x418] sm:$0xff] %v3989
        %4246 = vst [vmem:[%s472 + $0x420] sm:$0xff] %v3990
        %4247 = vst [vmem:[%s472 + $0x428] sm:$0xff] %v3991
        %4248 = vst [vmem:[%s472 + $0x430] sm:$0xff] %v3992
        %4249 = vst [vmem:[%s472 + $0x438] sm:$0xff] %v3993
        %4250 = vst [vmem:[%s472 + $0x440] sm:$0xff] %v3994
        %4251 = vst [vmem:[%s472 + $0x448] sm:$0xff] %v3995
        %4252 = vst [vmem:[%s472 + $0x450] sm:$0xff] %v3996
        %4253 = vst [vmem:[%s472 + $0x458] sm:$0xff] %v3997
        %4254 = vst [vmem:[%s472 + $0x460] sm:$0xff] %v3998
        %4255 = vst [vmem:[%s472 + $0x468] sm:$0xff] %v3999
        %4256 = vst [vmem:[%s472 + $0x470] sm:$0xff] %v4000
        %4257 = vst [vmem:[%s472 + $0x478] sm:$0xff] %v4001
        %4258 = vst [vmem:[%s472 + $0x480] sm:$0xff] %v4002
        %4259 = vst [vmem:[%s472 + $0x488] sm:$0xff] %v4003
        %4260 = vst [vmem:[%s472 + $0x490] sm:$0xff] %v4004
        %4261 = vst [vmem:[%s472 + $0x498] sm:$0xff] %v4005
        %4262 = vst [vmem:[%s472 + $0x4a0] sm:$0xff] %v4006
        %4263 = vst [vmem:[%s472 + $0x4a8] sm:$0xff] %v4007
        %4264 = vst [vmem:[%s472 + $0x4b0] sm:$0xff] %v4008
        %4265 = vst [vmem:[%s472 + $0x4b8] sm:$0xff] %v4009
        %4266 = vst [vmem:[%s472 + $0x4c0] sm:$0xff] %v4010
        %4267 = vst [vmem:[%s472 + $0x4c8] sm:$0xff] %v4011
        %4268 = vst [vmem:[%s472 + $0x4d0] sm:$0xff] %v4012
        %4269 = vst [vmem:[%s472 + $0x4d8] sm:$0xff] %v4013
        %4270 = vst [vmem:[%s472 + $0x4e0] sm:$0xff] %v4014
        %4271 = vst [vmem:[%s472 + $0x4e8] sm:$0xff] %v4015
        %4272 = vst [vmem:[%s472 + $0x4f0] sm:$0xff] %v4016
        %4273 = vst [vmem:[%s472 + $0x4f8] sm:$0xff] %v4017
        %4274 = vst [vmem:[%s472 + $0x500] sm:$0xff] %v4018
        %4275 = vst [vmem:[%s472 + $0x508] sm:$0xff] %v4019
        %4276 = vst [vmem:[%s472 + $0x510] sm:$0xff] %v4020
        %4277 = vst [vmem:[%s472 + $0x518] sm:$0xff] %v4021
        %4278 = vst [vmem:[%s472 + $0x520] sm:$0xff] %v4022
        %4279 = vst [vmem:[%s472 + $0x528] sm:$0xff] %v4023
        %4280 = vst [vmem:[%s472 + $0x530] sm:$0xff] %v4024
        %4281 = vst [vmem:[%s472 + $0x538] sm:$0xff] %v4025
        %4282 = vst [vmem:[%s472 + $0x540] sm:$0xff] %v4026
        %4283 = vst [vmem:[%s472 + $0x548] sm:$0xff] %v4027
        %4284 = vst [vmem:[%s472 + $0x550] sm:$0xff] %v4028
        %4285 = vst [vmem:[%s472 + $0x558] sm:$0xff] %v4029
        %4286 = vst [vmem:[%s472 + $0x560] sm:$0xff] %v4030
        %4287 = vst [vmem:[%s472 + $0x568] sm:$0xff] %v4031
        %4288 = vst [vmem:[%s472 + $0x570] sm:$0xff] %v4032
        %4289 = vst [vmem:[%s472 + $0x578] sm:$0xff] %v4033
        %4290 = vst [vmem:[%s472 + $0x580] sm:$0xff] %v4034
        %4291 = vst [vmem:[%s472 + $0x588] sm:$0xff] %v4035
        %4292 = vst [vmem:[%s472 + $0x590] sm:$0xff] %v4036
        %4293 = vst [vmem:[%s472 + $0x598] sm:$0xff] %v4037
        %4294 = vst [vmem:[%s472 + $0x5a0] sm:$0xff] %v4038
        %4295 = vst [vmem:[%s472 + $0x5a8] sm:$0xff] %v4039
        %4296 = vst [vmem:[%s472 + $0x5b0] sm:$0xff] %v4040
        %4297 = vst [vmem:[%s472 + $0x5b8] sm:$0xff] %v4041
        %4298 = vst [vmem:[%s472 + $0x5c0] sm:$0xff] %v4042
        %4299 = vst [vmem:[%s472 + $0x5c8] sm:$0xff] %v4043
        %4300 = vst [vmem:[%s472 + $0x5d0] sm:$0xff] %v4044
        %4301 = vst [vmem:[%s472 + $0x5d8] sm:$0xff] %v4045
        %4302 = vst [vmem:[%s472 + $0x5e0] sm:$0xff] %v4046
        %4303 = vst [vmem:[%s472 + $0x5e8] sm:$0xff] %v4047
        %4304 = vst [vmem:[%s472 + $0x5f0] sm:$0xff] %v4048
        %4305 = vst [vmem:[%s472 + $0x5f8] sm:$0xff] %v4049
        %4306 = vst [vmem:[%s472 + $0x600] sm:$0xff] %v4050
        %4307 = vst [vmem:[%s472 + $0x608] sm:$0xff] %v4051
        %4308 = vst [vmem:[%s472 + $0x610] sm:$0xff] %v4052
        %4309 = vst [vmem:[%s472 + $0x618] sm:$0xff] %v4053
        %4310 = vst [vmem:[%s472 + $0x620] sm:$0xff] %v4054
        %4311 = vst [vmem:[%s472 + $0x628] sm:$0xff] %v4055
        %4312 = vst [vmem:[%s472 + $0x630] sm:$0xff] %v4056
        %4313 = vst [vmem:[%s472 + $0x638] sm:$0xff] %v4057
        %4314 = vst [vmem:[%s472 + $0x640] sm:$0xff] %v4058
        %4315 = vst [vmem:[%s472 + $0x648] sm:$0xff] %v4059
        %4316 = vst [vmem:[%s472 + $0x650] sm:$0xff] %v4060
        %4317 = vst [vmem:[%s472 + $0x658] sm:$0xff] %v4061
        %4318 = vst [vmem:[%s472 + $0x660] sm:$0xff] %v4062
        %4319 = vst [vmem:[%s472 + $0x668] sm:$0xff] %v4063
        %4320 = vst [vmem:[%s472 + $0x670] sm:$0xff] %v4064
        %4321 = vst [vmem:[%s472 + $0x678] sm:$0xff] %v4065
        %4322 = vst [vmem:[%s472 + $0x680] sm:$0xff] %v4066
        %4323 = vst [vmem:[%s472 + $0x688] sm:$0xff] %v4067
        %4324 = vst [vmem:[%s472 + $0x690] sm:$0xff] %v4068
        %4325 = vst [vmem:[%s472 + $0x698] sm:$0xff] %v4069
        %4326 = vst [vmem:[%s472 + $0x6a0] sm:$0xff] %v4070
        %4327 = vst [vmem:[%s472 + $0x6a8] sm:$0xff] %v4071
        %4328 = vst [vmem:[%s472 + $0x6b0] sm:$0xff] %v4072
        %4329 = vst [vmem:[%s472 + $0x6b8] sm:$0xff] %v4073
        %4330 = vst [vmem:[%s472 + $0x6c0] sm:$0xff] %v4074
        %4331 = vst [vmem:[%s472 + $0x6c8] sm:$0xff] %v4075
        %4332 = vst [vmem:[%s472 + $0x6d0] sm:$0xff] %v4076
        %4333 = vst [vmem:[%s472 + $0x6d8] sm:$0xff] %v4077
        %4334 = vst [vmem:[%s472 + $0x6e0] sm:$0xff] %v4078
        %4335 = vst [vmem:[%s472 + $0x6e8] sm:$0xff] %v4079
        %4336 = vst [vmem:[%s472 + $0x6f0] sm:$0xff] %v4080
        %4337 = vst [vmem:[%s472 + $0x6f8] sm:$0xff] %v4081
        %4338 = vst [vmem:[%s472 + $0x700] sm:$0xff] %v4082
        %4339 = vst [vmem:[%s472 + $0x708] sm:$0xff] %v4083
        %4340 = vst [vmem:[%s472 + $0x710] sm:$0xff] %v4084
        %4341 = vst [vmem:[%s472 + $0x718] sm:$0xff] %v4085
        %4342 = vst [vmem:[%s472 + $0x720] sm:$0xff] %v4086
        %4343 = vst [vmem:[%s472 + $0x728] sm:$0xff] %v4087
        %4344 = vst [vmem:[%s472 + $0x730] sm:$0xff] %v4088
        %4345 = vst [vmem:[%s472 + $0x738] sm:$0xff] %v4089
        %4346 = vst [vmem:[%s472 + $0x740] sm:$0xff] %v4090
        %4347 = vst [vmem:[%s472 + $0x748] sm:$0xff] %v4091
        %4348 = vst [vmem:[%s472 + $0x750] sm:$0xff] %v4092
        %4349 = vst [vmem:[%s472 + $0x758] sm:$0xff] %v4093
        %4350 = vst [vmem:[%s472 + $0x760] sm:$0xff] %v4094
        %4351 = vst [vmem:[%s472 + $0x768] sm:$0xff] %v4095
        %4352 = vst [vmem:[%s472 + $0x770] sm:$0xff] %v4096
        %4353 = vst [vmem:[%s472 + $0x778] sm:$0xff] %v4097
        %4354 = vst [vmem:[%s472 + $0x780] sm:$0xff] %v4098
        %4355 = vst [vmem:[%s472 + $0x788] sm:$0xff] %v4099
        %4356 = vst [vmem:[%s472 + $0x790] sm:$0xff] %v4100
        %4357 = vst [vmem:[%s472 + $0x798] sm:$0xff] %v4101
        %4358 = vst [vmem:[%s472 + $0x7a0] sm:$0xff] %v4102
        %4359 = vst [vmem:[%s472 + $0x7a8] sm:$0xff] %v4103
        %4360 = vst [vmem:[%s472 + $0x7b0] sm:$0xff] %v4104
        %4361 = vst [vmem:[%s472 + $0x7b8] sm:$0xff] %v4105
        %4362 = vst [vmem:[%s472 + $0x7c0] sm:$0xff] %v4106
        %4363 = vst [vmem:[%s472 + $0x7c8] sm:$0xff] %v4107
        %4364 = vst [vmem:[%s472 + $0x7d0] sm:$0xff] %v4108
        %4365 = vst [vmem:[%s472 + $0x7d8] sm:$0xff] %v4109
        %4366 = vst [vmem:[%s472 + $0x7e0] sm:$0xff] %v4110
        %4367 = vst [vmem:[%s472 + $0x7e8] sm:$0xff] %v4111
        %4368 = vst [vmem:[%s472 + $0x7f0] sm:$0xff] %v4112
        %4369 = vst [vmem:[%s472 + $0x7f8] sm:$0xff] %v4113
        %s4370 = smul.u32 4, %s29
        %p4371 = scmp.lt.s32.totalorder %s28, 1
        %s4372 = scalar_select %p4371, %s28, 1
        %p4373 = scmp.lt.s32.totalorder %s4370, 3
        %s4374 = scalar_select %p4373, %s4370, 3
        %s4375 = smul.addr %s4372, 256
        %s4376 = sadd.s32 %s4374, %s4375
        %s4377 = smul.addr %s4376, 8
        %s4378 = scalar_lea.vmem %s9, %s4377
        // Predicated region
        $region85: #{mspointnet_feat.1} parent=55 // pred_check
          %p4379 = pneg %p252
        $region86: #{mspointnet_feat.1} parent=55 // pred_check_branch
          %4381 = sbr.rel (%p4379) target = $region88
        $region87: #{mspointnet_feat.1} parent=55 // pred_region
          %s4382 = smul.u32 4, %s29
        $region88: #{mspointnet_feat.1} parent=55 // pred_fallthru
          _
      $region56: #{mspointnet_feat.1} parent=5 // pred_fallthru
        _
      %p4383 = scmp.le.s32.totalorder 2, %s19
      // Predicated region
      $region89: #{mspointnet_feat.1} parent=5 // pred_check
        %p4384 = pneg %p4383
      $region90: #{mspointnet_feat.1} parent=5 // pred_check_branch
        %4386 = sbr.rel (%p4384) target = $region92
      $region91: #{mspointnet_feat.1} parent=5 // pred_region
        %s4387 = ssub.s32 %s19, 2
        // Predicated region
        $region93: #{mspointnet_feat.1} parent=91 // pred_check
          %p4388 = pneg %p258
        $region94: #{mspointnet_feat.1} parent=91 // pred_check_branch
          %4390 = sbr.rel (%p4388) target = $region96
        $region95: #{mspointnet_feat.1} parent=91 // pred_region
          %s4391 = smul.u32 4, %s31
          %p4392 = scmp.lt.s32.totalorder %s30, 1
          %s4393 = scalar_select %p4392, %s30, 1
          %p4394 = scmp.lt.s32.totalorder %s4391, 3
          %s4395 = scalar_select %p4394, %s4391, 3
          %s4396 = smul.addr %s4393, 256
          %s4397 = sadd.s32 %s4395, %s4396
          %s4398 = smul.addr %s4397, 8
          %s4399 = scalar_lea.vmem %s9, %s4398
        $region96: #{mspointnet_feat.1} parent=91 // pred_fallthru
          _
      $region92: #{mspointnet_feat.1} parent=5 // pred_fallthru
        _
    $region6: #{mspointnet_feat.1} parent=1 // loop_footer
      %s23 = sadd.s32 1, %s19
    $region7: #{mspointnet_feat.1} parent=1 // loop_footer_branch
      %18 = sbr.rel target = $region3
    $region8: #{mspointnet_feat.1} parent=1 // loop_exit
      _
    %4400 = vsyncpa [#allocation3], 1
    %s4401 = scalar_lea.sflag [#allocation3], 1
    %4402 = vsyncpa %s4401, 1
    %4403 = vsyncpa [#allocation5], 1
    %4404 = vsyncpa [#allocation8], 1
    %4405 = vsyncpa [#allocation11], 1

</llo_original>
